<compile_context>
chip_gen: v6e
topology: v6e:2x2x1
jax: 0.10.0
libtpu: 0.0.40
codegen_flags: <defaults>
</compile_context>

<pallas_src>
import functools

import jax
import jax.numpy as jnp
from jax.experimental import pallas as pl
from jax.experimental.pallas import tpu as pltpu


def attsets_kernel(x_ref,
                   w1x_ref, b1x_ref,
                   w1b_ref, b1b_ref,
                   w1c_ref, b1c_ref,
                   w2h_ref,
                   w3_ref, b3_ref,
                   w4_ref, b4_ref,
                   o_ref):
    x = x_ref[...]                                            # (TN, C)
    Wd = w1b_ref.shape[0]                                     # hidden width W

    # Fused x-consuming matmul: x @ [w1a | w2x] + [b1a | b2]  ->  (TN, W + L)
    xw = (jnp.dot(x, w1x_ref[...], preferred_element_type=jnp.float32)
          + b1x_ref[...])
    h = jnp.maximum(xw[:, :Wd], 0.0)                          # ReLU(Linear 1a)
    zx = xw[:, Wd:]                                           # x @ w2x + b2

    # dense_layer_1 (remaining two Linear + ReLU)
    h = jnp.maximum(jnp.dot(h, w1b_ref[...], preferred_element_type=jnp.float32)
                    + b1b_ref[...], 0.0)
    h = jnp.maximum(jnp.dot(h, w1c_ref[...], preferred_element_type=jnp.float32)
                    + b1c_ref[...], 0.0)                      # (TN, W)

    # dense_layer_2(cat([h, x], -1)) == h @ w2h + x @ w2x + b2, then leaky_relu(0.01)
    z = jnp.dot(h, w2h_ref[...], preferred_element_type=jnp.float32) + zx  # (TN, L)
    z = jnp.where(z > 0, z, 0.01 * z)

    # mask = softmax(dense_layer_3(z), dim=-1); att = z * mask; sum over features.
    # Mask never materialized: s = sum(z*e) / sum(e), reciprocal on the EUP.
    m = jnp.dot(z, w3_ref[...], preferred_element_type=jnp.float32) + b3_ref[...]
    m = m - jnp.max(m, axis=-1, keepdims=True)
    e = jnp.exp(m)
    num = jnp.sum(z * e, axis=-1, keepdims=True)
    den = jnp.sum(e, axis=-1, keepdims=True)
    s = num * pl.reciprocal(den, approx=True)                 # (TN, 1)

    # dense_layer_4: Linear(1 -> L) applied to the per-row scalar
    o_ref[...] = s * w4_ref[...] + b4_ref[...]                # (TN, L)


@functools.partial(jax.jit, static_argnames=("tile_n",))
def attsets_forward(inputs, params, *, tile_n=512):
    (w1a, b1a, w1b, b1b, w1c, b1c, w2h, w2x, b2, w3, b3, w4, b4) = params
    N, C = inputs.shape
    Wd = w1a.shape[1]
    L = w2h.shape[1]

    # Fuse the two matmuls (and their biases) that consume x into one pass.
    w1x = jnp.concatenate([w1a, w2x], axis=1)                 # (C, W + L)
    b1x = jnp.concatenate([b1a, b2], axis=1)                  # (1, W + L)

    # Tile the row axis; pad ragged N up to a multiple of the tile.
    tile_n = max(8, min(tile_n, pl.cdiv(N, 8) * 8))
    n_pad = (-N) % tile_n
    x = jnp.pad(inputs, ((0, n_pad), (0, 0))) if n_pad else inputs
    Np = N + n_pad
    grid = (Np // tile_n,)

    weights = (w1x, b1x, w1b, b1b, w1c, b1c, w2h, w3, b3, w4, b4)

    def resident(a):  # full-array block, same block every step -> stays in VMEM
        return pl.BlockSpec(a.shape, lambda i: (0,) * a.ndim)

    flops = 2 * Np * (C * (Wd + L) + 2 * Wd * Wd + Wd * L + L * L) + 8 * Np * L
    bytes_accessed = 4 * (Np * (C + L) + sum(int(w.size) for w in weights))

    out = pl.pallas_call(
        attsets_kernel,
        out_shape=jax.ShapeDtypeStruct((Np, L), jnp.float32),
        grid=grid,
        in_specs=[pl.BlockSpec((tile_n, C), lambda i: (i, 0))]
                 + [resident(w) for w in weights],
        out_specs=pl.BlockSpec((tile_n, L), lambda i: (i, 0)),
        compiler_params=pltpu.CompilerParams(
            dimension_semantics=("parallel",),          # megacore on v7x
            vmem_limit_bytes=32 * 1024 * 1024),
        cost_estimate=pl.CostEstimate(
            flops=flops, transcendentals=Np * L, bytes_accessed=bytes_accessed),
    )(x, *weights)
    return out[:N] if n_pad else out


def attsets_reference(inputs, params):
    (w1a, b1a, w1b, b1b, w1c, b1c, w2h, w2x, b2, w3, b3, w4, b4) = params
    h = jnp.maximum(inputs @ w1a + b1a, 0.0)
    h = jnp.maximum(h @ w1b + b1b, 0.0)
    h = jnp.maximum(h @ w1c + b1c, 0.0)
    z = h @ w2h + inputs @ w2x + b2
    z = jnp.where(z > 0, z, 0.01 * z)
    m = z @ w3 + b3
    mask = jax.nn.softmax(m, axis=1)
    s = jnp.sum(z * mask, axis=1, keepdims=True)
    return s * w4 + b4


def make_params(key, input_ch, W, L):
    ks = jax.random.split(key, 13)
    f32 = jnp.float32

    def w(k, shape):
        return (0.1 * jax.random.normal(k, shape)).astype(f32)

    w1a = w(ks[0], (input_ch, W)); b1a = w(ks[1], (1, W))
    w1b = w(ks[2], (W, W));        b1b = w(ks[3], (1, W))
    w1c = w(ks[4], (W, W));        b1c = w(ks[5], (1, W))
    # dense_layer_2 weight split: first W rows act on h, last input_ch on inputs
    w2h = w(ks[6], (W, L))
    w2x = w(ks[7], (input_ch, L))
    b2 = w(ks[8], (1, L))
    w3 = w(ks[9], (L, L));         b3 = w(ks[10], (1, L))
    w4 = w(ks[11], (1, L));        b4 = w(ks[12], (1, L))
    return (w1a, b1a, w1b, b1b, w1c, b1c, w2h, w2x, b2, w3, b3, w4, b4)


if __name__ == "__main__":
    # Small but hardware-friendly version of the module's defaults
    # (W=256, input_ch=3, attention_output_length=512): keep W and L multiples
    # of 128 so the fused-matmul split and output stores are lane-dense;
    # N intentionally not tile-aligned to exercise the padding path.
    N = 1000
    input_ch = 3
    W = 128
    L = 128          # attention_output_length

    key = jax.random.PRNGKey(0)
    k_x, k_p = jax.random.split(key)
    inputs = jax.random.normal(k_x, (N, input_ch), dtype=jnp.float32)
    params = make_params(k_p, input_ch, W, L)

    out = attsets_forward(inputs, params, tile_n=512)
    out = jax.block_until_ready(out)

    ref = attsets_reference(inputs, params)
    assert out.shape == (N, L)
    # Tolerance loosened slightly vs the pure-f32 version because the softmax
    # denominator uses the approximate EUP reciprocal.
    assert jnp.allclose(out, ref, atol=5e-3, rtol=5e-3), "mismatch vs JAX reference"

    print("KERNEL_OK")
</pallas_src>

<mosaic_0001>
module attributes {stable_mosaic.version = 11 : i64} {
  func.func @attsets_kernel(%arg0: i32, %arg1: memref<512x3xf32, #tpu.memory_space<vmem>>, %arg2: memref<3x256xf32, #tpu.memory_space<vmem>>, %arg3: memref<1x256xf32, #tpu.memory_space<vmem>>, %arg4: memref<128x128xf32, #tpu.memory_space<vmem>>, %arg5: memref<1x128xf32, #tpu.memory_space<vmem>>, %arg6: memref<128x128xf32, #tpu.memory_space<vmem>>, %arg7: memref<1x128xf32, #tpu.memory_space<vmem>>, %arg8: memref<128x128xf32, #tpu.memory_space<vmem>>, %arg9: memref<128x128xf32, #tpu.memory_space<vmem>>, %arg10: memref<1x128xf32, #tpu.memory_space<vmem>>, %arg11: memref<1x128xf32, #tpu.memory_space<vmem>>, %arg12: memref<1x128xf32, #tpu.memory_space<vmem>>, %arg13: memref<512x128xf32, #tpu.memory_space<vmem>>) attributes {dimension_semantics = [#tpu.dimension_semantics<parallel>], iteration_bounds = array<i64: 2>, scalar_prefetch = 0 : i64, scratch_operands = 0 : i64, tpu.core_type = #tpu.core_type<tc>, window_params = [{transform_indices = @transform_0, window_bounds = array<i64: 512, 3>}, {pipeline_mode = #tpu.pipeline_mode<synchronous>, transform_indices = @transform_1, window_bounds = array<i64: 3, 256>}, {pipeline_mode = #tpu.pipeline_mode<synchronous>, transform_indices = @transform_2, window_bounds = array<i64: 1, 256>}, {pipeline_mode = #tpu.pipeline_mode<synchronous>, transform_indices = @transform_3, window_bounds = array<i64: 128, 128>}, {pipeline_mode = #tpu.pipeline_mode<synchronous>, transform_indices = @transform_4, window_bounds = array<i64: 1, 128>}, {pipeline_mode = #tpu.pipeline_mode<synchronous>, transform_indices = @transform_5, window_bounds = array<i64: 128, 128>}, {pipeline_mode = #tpu.pipeline_mode<synchronous>, transform_indices = @transform_6, window_bounds = array<i64: 1, 128>}, {pipeline_mode = #tpu.pipeline_mode<synchronous>, transform_indices = @transform_7, window_bounds = array<i64: 128, 128>}, {pipeline_mode = #tpu.pipeline_mode<synchronous>, transform_indices = @transform_8, window_bounds = array<i64: 128, 128>}, {pipeline_mode = #tpu.pipeline_mode<synchronous>, transform_indices = @transform_9, window_bounds = array<i64: 1, 128>}, {pipeline_mode = #tpu.pipeline_mode<synchronous>, transform_indices = @transform_10, window_bounds = array<i64: 1, 128>}, {pipeline_mode = #tpu.pipeline_mode<synchronous>, transform_indices = @transform_11, window_bounds = array<i64: 1, 128>}, {transform_indices = @transform_12, window_bounds = array<i64: 512, 128>}]} {
    %c0 = arith.constant 0 : index
    %c0_0 = arith.constant 0 : index
    %0 = vector.load %arg1[%c0, %c0_0] : memref<512x3xf32, #tpu.memory_space<vmem>>, vector<512x3xf32>
    %c0_1 = arith.constant 0 : index
    %c0_2 = arith.constant 0 : index
    %1 = vector.load %arg2[%c0_1, %c0_2] : memref<3x256xf32, #tpu.memory_space<vmem>>, vector<3x256xf32>
    %cst = arith.constant dense<0.000000e+00> : vector<512x256xf32>
    %2 = tpu.matmul %0, %1, %cst {dimension_numbers = #tpu.dot_dimension_numbers<[1], [0], [0], [1], [0, 0, 1, 1], [], []>} : vector<512x3xf32>, vector<3x256xf32>, vector<512x256xf32> -> vector<512x256xf32>
    %c0_3 = arith.constant 0 : index
    %c0_4 = arith.constant 0 : index
    %3 = vector.load %arg3[%c0_3, %c0_4] : memref<1x256xf32, #tpu.memory_space<vmem>>, vector<1x256xf32>
    %4 = vector.broadcast %3 : vector<1x256xf32> to vector<512x256xf32>
    %5 = arith.addf %2, %4 : vector<512x256xf32>
    %6 = vector.extract_strided_slice %5 {offsets = [0, 0], sizes = [512, 128], strides = [1, 1]} : vector<512x256xf32> to vector<512x128xf32>
    %cst_5 = arith.constant 0.000000e+00 : f32
    %7 = vector.broadcast %cst_5 : f32 to vector<512x128xf32>
    %8 = arith.maximumf %6, %7 : vector<512x128xf32>
    %9 = vector.extract_strided_slice %5 {offsets = [0, 128], sizes = [512, 128], strides = [1, 1]} : vector<512x256xf32> to vector<512x128xf32>
    %c0_6 = arith.constant 0 : index
    %c0_7 = arith.constant 0 : index
    %10 = vector.load %arg4[%c0_6, %c0_7] : memref<128x128xf32, #tpu.memory_space<vmem>>, vector<128x128xf32>
    %cst_8 = arith.constant dense<0.000000e+00> : vector<512x128xf32>
    %11 = tpu.matmul %8, %10, %cst_8 {dimension_numbers = #tpu.dot_dimension_numbers<[1], [0], [0], [1], [0, 0, 1, 1], [], []>} : vector<512x128xf32>, vector<128x128xf32>, vector<512x128xf32> -> vector<512x128xf32>
    %c0_9 = arith.constant 0 : index
    %c0_10 = arith.constant 0 : index
    %12 = vector.load %arg5[%c0_9, %c0_10] : memref<1x128xf32, #tpu.memory_space<vmem>>, vector<1x128xf32>
    %13 = vector.broadcast %12 : vector<1x128xf32> to vector<512x128xf32>
    %14 = arith.addf %11, %13 : vector<512x128xf32>
    %cst_11 = arith.constant 0.000000e+00 : f32
    %15 = vector.broadcast %cst_11 : f32 to vector<512x128xf32>
    %16 = arith.maximumf %14, %15 : vector<512x128xf32>
    %c0_12 = arith.constant 0 : index
    %c0_13 = arith.constant 0 : index
    %17 = vector.load %arg6[%c0_12, %c0_13] : memref<128x128xf32, #tpu.memory_space<vmem>>, vector<128x128xf32>
    %cst_14 = arith.constant dense<0.000000e+00> : vector<512x128xf32>
    %18 = tpu.matmul %16, %17, %cst_14 {dimension_numbers = #tpu.dot_dimension_numbers<[1], [0], [0], [1], [0, 0, 1, 1], [], []>} : vector<512x128xf32>, vector<128x128xf32>, vector<512x128xf32> -> vector<512x128xf32>
    %c0_15 = arith.constant 0 : index
    %c0_16 = arith.constant 0 : index
    %19 = vector.load %arg7[%c0_15, %c0_16] : memref<1x128xf32, #tpu.memory_space<vmem>>, vector<1x128xf32>
    %20 = vector.broadcast %19 : vector<1x128xf32> to vector<512x128xf32>
    %21 = arith.addf %18, %20 : vector<512x128xf32>
    %cst_17 = arith.constant 0.000000e+00 : f32
    %22 = vector.broadcast %cst_17 : f32 to vector<512x128xf32>
    %23 = arith.maximumf %21, %22 : vector<512x128xf32>
    %c0_18 = arith.constant 0 : index
    %c0_19 = arith.constant 0 : index
    %24 = vector.load %arg8[%c0_18, %c0_19] : memref<128x128xf32, #tpu.memory_space<vmem>>, vector<128x128xf32>
    %cst_20 = arith.constant dense<0.000000e+00> : vector<512x128xf32>
    %25 = tpu.matmul %23, %24, %cst_20 {dimension_numbers = #tpu.dot_dimension_numbers<[1], [0], [0], [1], [0, 0, 1, 1], [], []>} : vector<512x128xf32>, vector<128x128xf32>, vector<512x128xf32> -> vector<512x128xf32>
    %26 = arith.addf %25, %9 : vector<512x128xf32>
    %cst_21 = arith.constant 0.000000e+00 : f32
    %27 = vector.broadcast %cst_21 : f32 to vector<512x128xf32>
    %28 = arith.cmpf ogt, %26, %27 : vector<512x128xf32>
    %cst_22 = arith.constant 0.00999999977 : f32
    %29 = vector.broadcast %cst_22 : f32 to vector<512x128xf32>
    %30 = arith.mulf %29, %26 : vector<512x128xf32>
    %31 = arith.select %28, %26, %30 : vector<512x128xi1>, vector<512x128xf32>
    %c0_23 = arith.constant 0 : index
    %c0_24 = arith.constant 0 : index
    %32 = vector.load %arg9[%c0_23, %c0_24] : memref<128x128xf32, #tpu.memory_space<vmem>>, vector<128x128xf32>
    %cst_25 = arith.constant dense<0.000000e+00> : vector<512x128xf32>
    %33 = tpu.matmul %31, %32, %cst_25 {dimension_numbers = #tpu.dot_dimension_numbers<[1], [0], [0], [1], [0, 0, 1, 1], [], []>} : vector<512x128xf32>, vector<128x128xf32>, vector<512x128xf32> -> vector<512x128xf32>
    %c0_26 = arith.constant 0 : index
    %c0_27 = arith.constant 0 : index
    %34 = vector.load %arg10[%c0_26, %c0_27] : memref<1x128xf32, #tpu.memory_space<vmem>>, vector<1x128xf32>
    %35 = vector.broadcast %34 : vector<1x128xf32> to vector<512x128xf32>
    %36 = arith.addf %33, %35 : vector<512x128xf32>
    %cst_28 = arith.constant dense<0xFF800000> : vector<512xf32>
    %37 = vector.multi_reduction <maximumf>, %36, %cst_28 [1] : vector<512x128xf32> to vector<512xf32>
    %38 = vector.shape_cast %37 : vector<512xf32> to vector<512x1xf32>
    %39 = vector.broadcast %38 : vector<512x1xf32> to vector<512x128xf32>
    %40 = arith.subf %36, %39 : vector<512x128xf32>
    %41 = math.exp %40 : vector<512x128xf32>
    %42 = arith.mulf %31, %41 : vector<512x128xf32>
    %cst_29 = arith.constant dense<0.000000e+00> : vector<512xf32>
    %43 = vector.multi_reduction <add>, %42, %cst_29 [1] : vector<512x128xf32> to vector<512xf32>
    %44 = vector.shape_cast %43 : vector<512xf32> to vector<512x1xf32>
    %cst_30 = arith.constant dense<0.000000e+00> : vector<512xf32>
    %45 = vector.multi_reduction <add>, %41, %cst_30 [1] : vector<512x128xf32> to vector<512xf32>
    %46 = vector.shape_cast %45 : vector<512xf32> to vector<512x1xf32>
    %47 = tpu.reciprocal %46 {approx = true} : vector<512x1xf32> -> vector<512x1xf32>
    %48 = arith.mulf %44, %47 : vector<512x1xf32>
    %c0_31 = arith.constant 0 : index
    %c0_32 = arith.constant 0 : index
    %49 = vector.load %arg11[%c0_31, %c0_32] : memref<1x128xf32, #tpu.memory_space<vmem>>, vector<1x128xf32>
    %50 = vector.broadcast %48 : vector<512x1xf32> to vector<512x128xf32>
    %51 = vector.broadcast %49 : vector<1x128xf32> to vector<512x128xf32>
    %52 = arith.mulf %50, %51 : vector<512x128xf32>
    %c0_33 = arith.constant 0 : index
    %c0_34 = arith.constant 0 : index
    %53 = vector.load %arg12[%c0_33, %c0_34] : memref<1x128xf32, #tpu.memory_space<vmem>>, vector<1x128xf32>
    %54 = vector.broadcast %53 : vector<1x128xf32> to vector<512x128xf32>
    %55 = arith.addf %52, %54 : vector<512x128xf32>
    %c0_35 = arith.constant 0 : index
    %c0_36 = arith.constant 0 : index
    %56 = vector.load %arg13[%c0_35, %c0_36] : memref<512x128xf32, #tpu.memory_space<vmem>>, vector<512x128xf32>
    tpu.vector_store %arg13[%c0_35, %c0_36], %55 {strides = array<i32>} : memref<512x128xf32, #tpu.memory_space<vmem>>, vector<512x128xf32>,
    return
  }
  func.func @transform_0(%arg0: i32) -> (i32, i32) {
    %c0_i32 = arith.constant 0 : i32
    %c0_i32_0 = arith.constant 0 : i32
    return %arg0, %c0_i32 : i32, i32
  }
  func.func @transform_1(%arg0: i32) -> (i32, i32) {
    %c0_i32 = arith.constant 0 : i32
    %c0_i32_0 = arith.constant 0 : i32
    %c0_i32_1 = arith.constant 0 : i32
    return %c0_i32, %c0_i32_0 : i32, i32
  }
  func.func @transform_2(%arg0: i32) -> (i32, i32) {
    %c0_i32 = arith.constant 0 : i32
    %c0_i32_0 = arith.constant 0 : i32
    %c0_i32_1 = arith.constant 0 : i32
    return %c0_i32, %c0_i32_0 : i32, i32
  }
  func.func @transform_3(%arg0: i32) -> (i32, i32) {
    %c0_i32 = arith.constant 0 : i32
    %c0_i32_0 = arith.constant 0 : i32
    %c0_i32_1 = arith.constant 0 : i32
    return %c0_i32, %c0_i32_0 : i32, i32
  }
  func.func @transform_4(%arg0: i32) -> (i32, i32) {
    %c0_i32 = arith.constant 0 : i32
    %c0_i32_0 = arith.constant 0 : i32
    %c0_i32_1 = arith.constant 0 : i32
    return %c0_i32, %c0_i32_0 : i32, i32
  }
  func.func @transform_5(%arg0: i32) -> (i32, i32) {
    %c0_i32 = arith.constant 0 : i32
    %c0_i32_0 = arith.constant 0 : i32
    %c0_i32_1 = arith.constant 0 : i32
    return %c0_i32, %c0_i32_0 : i32, i32
  }
  func.func @transform_6(%arg0: i32) -> (i32, i32) {
    %c0_i32 = arith.constant 0 : i32
    %c0_i32_0 = arith.constant 0 : i32
    %c0_i32_1 = arith.constant 0 : i32
    return %c0_i32, %c0_i32_0 : i32, i32
  }
  func.func @transform_7(%arg0: i32) -> (i32, i32) {
    %c0_i32 = arith.constant 0 : i32
    %c0_i32_0 = arith.constant 0 : i32
    %c0_i32_1 = arith.constant 0 : i32
    return %c0_i32, %c0_i32_0 : i32, i32
  }
  func.func @transform_8(%arg0: i32) -> (i32, i32) {
    %c0_i32 = arith.constant 0 : i32
    %c0_i32_0 = arith.constant 0 : i32
    %c0_i32_1 = arith.constant 0 : i32
    return %c0_i32, %c0_i32_0 : i32, i32
  }
  func.func @transform_9(%arg0: i32) -> (i32, i32) {
    %c0_i32 = arith.constant 0 : i32
    %c0_i32_0 = arith.constant 0 : i32
    %c0_i32_1 = arith.constant 0 : i32
    return %c0_i32, %c0_i32_0 : i32, i32
  }
  func.func @transform_10(%arg0: i32) -> (i32, i32) {
    %c0_i32 = arith.constant 0 : i32
    %c0_i32_0 = arith.constant 0 : i32
    %c0_i32_1 = arith.constant 0 : i32
    return %c0_i32, %c0_i32_0 : i32, i32
  }
  func.func @transform_11(%arg0: i32) -> (i32, i32) {
    %c0_i32 = arith.constant 0 : i32
    %c0_i32_0 = arith.constant 0 : i32
    %c0_i32_1 = arith.constant 0 : i32
    return %c0_i32, %c0_i32_0 : i32, i32
  }
  func.func @transform_12(%arg0: i32) -> (i32, i32) {
    %c0_i32 = arith.constant 0 : i32
    %c0_i32_0 = arith.constant 0 : i32
    return %arg0, %c0_i32 : i32, i32
  }
}

</mosaic_0001>

<llo_original>
// kernel: attsets_forward.1
$region0: #{attsets_forward.1}
  #allocation0 [shape = 'u32[]', space=smem, size = 0x4, offset = 0x4, fixed_abs, tag = 'smem constant byte address 0x4 - core index']
  #allocation1 [shape = 'u32[144,128]{1,0:T(1,128)}', space=vmem, size = 0x12000, scoped, tag = 'internal scratch']
  %s0 = inlined_call_operand.vmem [shape: f32[1024,3], index: 0, kind: input, shape index: {}]
  %s1 = inlined_call_operand.vmem [shape: f32[3,256], index: 1, kind: input, shape index: {}]
  %s2 = inlined_call_operand.vmem [shape: f32[1,256], index: 2, kind: input, shape index: {}]
  %s3 = inlined_call_operand.vmem [shape: f32[128,128], index: 3, kind: input, shape index: {}]
  %s4 = inlined_call_operand.vmem [shape: f32[1,128], index: 4, kind: input, shape index: {}]
  %s5 = inlined_call_operand.vmem [shape: f32[128,128], index: 5, kind: input, shape index: {}]
  %s6 = inlined_call_operand.vmem [shape: f32[1,128], index: 6, kind: input, shape index: {}]
  %s7 = inlined_call_operand.vmem [shape: f32[128,128], index: 7, kind: input, shape index: {}]
  %s8 = inlined_call_operand.vmem [shape: f32[128,128], index: 8, kind: input, shape index: {}]
  %s9 = inlined_call_operand.vmem [shape: f32[1,128], index: 9, kind: input, shape index: {}]
  %s10 = inlined_call_operand.vmem [shape: f32[1,128], index: 10, kind: input, shape index: {}]
  %s11 = inlined_call_operand.vmem [shape: f32[1,128], index: 11, kind: input, shape index: {}]
  %s12 = inlined_call_operand.vmem [shape: f32[1024,128], index: 12, kind: output, shape index: {}]
  %s13 = sld [smem:[#allocation0]]
  $region81: #{attsets_forward.1} parent=0
    _
  %s15 = ssub.s32 1, %s13
  %s16 = scalar_select 0, %s15, %s13
  loop: start=0, step=1, limit=4
  $region2: #{attsets_forward.1} parent=0 // loop_pre_header
    _
  $region3: #{attsets_forward.1} parent=0 // loop_header
    %s18 = sphi 0, %s22
    %p19 = scmp.ge.s32.totalorder %s18, 4
    %s28 = sphi 0, %s30
    %s31 = sphi 0, %s28
    %s32 = sphi 0, %s31
    %s48 = sphi 0, %s32
    %s52 = sphi 0, %s52
    %s54 = sphi 0, %s52
    %s55 = sphi 0, %s54
    %s69 = sphi 0, %s55
    %s73 = sphi 0, %s73
    %s75 = sphi 0, %s73
    %s76 = sphi 0, %s75
    %s90 = sphi 0, %s76
    %s94 = sphi 0, %s94
    %s96 = sphi 0, %s94
    %s97 = sphi 0, %s96
    %s111 = sphi 0, %s97
    %s115 = sphi 0, %s115
    %s117 = sphi 0, %s115
    %s118 = sphi 0, %s117
    %s132 = sphi 0, %s118
    %s136 = sphi 0, %s136
    %s138 = sphi 0, %s136
    %s139 = sphi 0, %s138
    %s153 = sphi 0, %s139
    %s157 = sphi 0, %s157
    %s159 = sphi 0, %s157
    %s160 = sphi 0, %s159
    %s174 = sphi 0, %s160
    %s178 = sphi 0, %s178
    %s180 = sphi 0, %s178
    %s181 = sphi 0, %s180
    %s195 = sphi 0, %s181
    %s199 = sphi 0, %s199
    %s201 = sphi 0, %s199
    %s202 = sphi 0, %s201
    %s216 = sphi 0, %s202
    %s220 = sphi 0, %s220
    %s222 = sphi 0, %s220
    %s223 = sphi 0, %s222
    %s237 = sphi 0, %s223
    %s241 = sphi 0, %s241
    %s243 = sphi 0, %s241
    %s244 = sphi 0, %s243
    %s258 = sphi 0, %s244
    %s262 = sphi 0, %s262
    %s264 = sphi 0, %s262
    %s265 = sphi 0, %s264
    %s279 = sphi 0, %s265
    %s285 = sphi 0, %s287
    %s288 = sphi 0, %s285
    %s289 = sphi 0, %s288
    %s305 = sphi 0, %s289
  $region4: #{attsets_forward.1} parent=0 // loop_header_branch
    %21 = sbr.rel (%p19) target = $region8
  $region5: #{attsets_forward.1} parent=0 // loop_body
    %s23 = ssub.s32 %s18, 1
    %s24 = ssub.s32 %s18, 2
    %s25 = sadd.s32 %s18, 1
    %s26 = ssub.s32 %s18, %s25
    %p27 = scmp.eq.s32.totalorder %s26, 0
    %s29 = sadd.s32 %s28, 1
    %s30 = scalar_select %p27, %s28, %s29
    %p33 = pneg %p27
    %p34 = scmp.eq.s32.totalorder %s18, 1
    %p35 = por %p33, %p34
    %p36 = scmp.ne.s32.totalorder %s28, %s31
    %p37 = scmp.eq.s32.totalorder %s18, 0
    %p38 = por %p36, %p37
    %p39 = scmp.ne.s32.totalorder %s28, %s31
    %p40 = scmp.eq.s32.totalorder %s23, 1
    %p41 = por %p39, %p40
    %p42 = scmp.ne.s32.totalorder %s31, %s32
    %p43 = scmp.eq.s32.totalorder %s23, 0
    %p44 = por %p42, %p43
    %p45 = scmp.ne.s32.totalorder %s31, %s32
    %p46 = scmp.eq.s32.totalorder %s24, 1
    %p47 = por %p45, %p46
    %p49 = scmp.ne.s32.totalorder %s32, %s48
    %p50 = scmp.eq.s32.totalorder %s24, 0
    %p51 = por %p49, %p50
    %s53 = sadd.s32 %s52, 1
    %p56 = scmp.eq.s32.totalorder %s18, 1
    %p57 = scmp.ne.s32.totalorder %s52, %s54
    %p58 = scmp.eq.s32.totalorder %s18, 0
    %p59 = por %p57, %p58
    %p60 = scmp.ne.s32.totalorder %s52, %s54
    %p61 = scmp.eq.s32.totalorder %s23, 1
    %p62 = por %p60, %p61
    %p63 = scmp.ne.s32.totalorder %s54, %s55
    %p64 = scmp.eq.s32.totalorder %s23, 0
    %p65 = por %p63, %p64
    %p66 = scmp.ne.s32.totalorder %s54, %s55
    %p67 = scmp.eq.s32.totalorder %s24, 1
    %p68 = por %p66, %p67
    %p70 = scmp.ne.s32.totalorder %s55, %s69
    %p71 = scmp.eq.s32.totalorder %s24, 0
    %p72 = por %p70, %p71
    %s74 = sadd.s32 %s73, 1
    %p77 = scmp.eq.s32.totalorder %s18, 1
    %p78 = scmp.ne.s32.totalorder %s73, %s75
    %p79 = scmp.eq.s32.totalorder %s18, 0
    %p80 = por %p78, %p79
    %p81 = scmp.ne.s32.totalorder %s73, %s75
    %p82 = scmp.eq.s32.totalorder %s23, 1
    %p83 = por %p81, %p82
    %p84 = scmp.ne.s32.totalorder %s75, %s76
    %p85 = scmp.eq.s32.totalorder %s23, 0
    %p86 = por %p84, %p85
    %p87 = scmp.ne.s32.totalorder %s75, %s76
    %p88 = scmp.eq.s32.totalorder %s24, 1
    %p89 = por %p87, %p88
    %p91 = scmp.ne.s32.totalorder %s76, %s90
    %p92 = scmp.eq.s32.totalorder %s24, 0
    %p93 = por %p91, %p92
    %s95 = sadd.s32 %s94, 1
    %p98 = scmp.eq.s32.totalorder %s18, 1
    %p99 = scmp.ne.s32.totalorder %s94, %s96
    %p100 = scmp.eq.s32.totalorder %s18, 0
    %p101 = por %p99, %p100
    %p102 = scmp.ne.s32.totalorder %s94, %s96
    %p103 = scmp.eq.s32.totalorder %s23, 1
    %p104 = por %p102, %p103
    %p105 = scmp.ne.s32.totalorder %s96, %s97
    %p106 = scmp.eq.s32.totalorder %s23, 0
    %p107 = por %p105, %p106
    %p108 = scmp.ne.s32.totalorder %s96, %s97
    %p109 = scmp.eq.s32.totalorder %s24, 1
    %p110 = por %p108, %p109
    %p112 = scmp.ne.s32.totalorder %s97, %s111
    %p113 = scmp.eq.s32.totalorder %s24, 0
    %p114 = por %p112, %p113
    %s116 = sadd.s32 %s115, 1
    %p119 = scmp.eq.s32.totalorder %s18, 1
    %p120 = scmp.ne.s32.totalorder %s115, %s117
    %p121 = scmp.eq.s32.totalorder %s18, 0
    %p122 = por %p120, %p121
    %p123 = scmp.ne.s32.totalorder %s115, %s117
    %p124 = scmp.eq.s32.totalorder %s23, 1
    %p125 = por %p123, %p124
    %p126 = scmp.ne.s32.totalorder %s117, %s118
    %p127 = scmp.eq.s32.totalorder %s23, 0
    %p128 = por %p126, %p127
    %p129 = scmp.ne.s32.totalorder %s117, %s118
    %p130 = scmp.eq.s32.totalorder %s24, 1
    %p131 = por %p129, %p130
    %p133 = scmp.ne.s32.totalorder %s118, %s132
    %p134 = scmp.eq.s32.totalorder %s24, 0
    %p135 = por %p133, %p134
    %s137 = sadd.s32 %s136, 1
    %p140 = scmp.eq.s32.totalorder %s18, 1
    %p141 = scmp.ne.s32.totalorder %s136, %s138
    %p142 = scmp.eq.s32.totalorder %s18, 0
    %p143 = por %p141, %p142
    %p144 = scmp.ne.s32.totalorder %s136, %s138
    %p145 = scmp.eq.s32.totalorder %s23, 1
    %p146 = por %p144, %p145
    %p147 = scmp.ne.s32.totalorder %s138, %s139
    %p148 = scmp.eq.s32.totalorder %s23, 0
    %p149 = por %p147, %p148
    %p150 = scmp.ne.s32.totalorder %s138, %s139
    %p151 = scmp.eq.s32.totalorder %s24, 1
    %p152 = por %p150, %p151
    %p154 = scmp.ne.s32.totalorder %s139, %s153
    %p155 = scmp.eq.s32.totalorder %s24, 0
    %p156 = por %p154, %p155
    %s158 = sadd.s32 %s157, 1
    %p161 = scmp.eq.s32.totalorder %s18, 1
    %p162 = scmp.ne.s32.totalorder %s157, %s159
    %p163 = scmp.eq.s32.totalorder %s18, 0
    %p164 = por %p162, %p163
    %p165 = scmp.ne.s32.totalorder %s157, %s159
    %p166 = scmp.eq.s32.totalorder %s23, 1
    %p167 = por %p165, %p166
    %p168 = scmp.ne.s32.totalorder %s159, %s160
    %p169 = scmp.eq.s32.totalorder %s23, 0
    %p170 = por %p168, %p169
    %p171 = scmp.ne.s32.totalorder %s159, %s160
    %p172 = scmp.eq.s32.totalorder %s24, 1
    %p173 = por %p171, %p172
    %p175 = scmp.ne.s32.totalorder %s160, %s174
    %p176 = scmp.eq.s32.totalorder %s24, 0
    %p177 = por %p175, %p176
    %s179 = sadd.s32 %s178, 1
    %p182 = scmp.eq.s32.totalorder %s18, 1
    %p183 = scmp.ne.s32.totalorder %s178, %s180
    %p184 = scmp.eq.s32.totalorder %s18, 0
    %p185 = por %p183, %p184
    %p186 = scmp.ne.s32.totalorder %s178, %s180
    %p187 = scmp.eq.s32.totalorder %s23, 1
    %p188 = por %p186, %p187
    %p189 = scmp.ne.s32.totalorder %s180, %s181
    %p190 = scmp.eq.s32.totalorder %s23, 0
    %p191 = por %p189, %p190
    %p192 = scmp.ne.s32.totalorder %s180, %s181
    %p193 = scmp.eq.s32.totalorder %s24, 1
    %p194 = por %p192, %p193
    %p196 = scmp.ne.s32.totalorder %s181, %s195
    %p197 = scmp.eq.s32.totalorder %s24, 0
    %p198 = por %p196, %p197
    %s200 = sadd.s32 %s199, 1
    %p203 = scmp.eq.s32.totalorder %s18, 1
    %p204 = scmp.ne.s32.totalorder %s199, %s201
    %p205 = scmp.eq.s32.totalorder %s18, 0
    %p206 = por %p204, %p205
    %p207 = scmp.ne.s32.totalorder %s199, %s201
    %p208 = scmp.eq.s32.totalorder %s23, 1
    %p209 = por %p207, %p208
    %p210 = scmp.ne.s32.totalorder %s201, %s202
    %p211 = scmp.eq.s32.totalorder %s23, 0
    %p212 = por %p210, %p211
    %p213 = scmp.ne.s32.totalorder %s201, %s202
    %p214 = scmp.eq.s32.totalorder %s24, 1
    %p215 = por %p213, %p214
    %p217 = scmp.ne.s32.totalorder %s202, %s216
    %p218 = scmp.eq.s32.totalorder %s24, 0
    %p219 = por %p217, %p218
    %s221 = sadd.s32 %s220, 1
    %p224 = scmp.eq.s32.totalorder %s18, 1
    %p225 = scmp.ne.s32.totalorder %s220, %s222
    %p226 = scmp.eq.s32.totalorder %s18, 0
    %p227 = por %p225, %p226
    %p228 = scmp.ne.s32.totalorder %s220, %s222
    %p229 = scmp.eq.s32.totalorder %s23, 1
    %p230 = por %p228, %p229
    %p231 = scmp.ne.s32.totalorder %s222, %s223
    %p232 = scmp.eq.s32.totalorder %s23, 0
    %p233 = por %p231, %p232
    %p234 = scmp.ne.s32.totalorder %s222, %s223
    %p235 = scmp.eq.s32.totalorder %s24, 1
    %p236 = por %p234, %p235
    %p238 = scmp.ne.s32.totalorder %s223, %s237
    %p239 = scmp.eq.s32.totalorder %s24, 0
    %p240 = por %p238, %p239
    %s242 = sadd.s32 %s241, 1
    %p245 = scmp.eq.s32.totalorder %s18, 1
    %p246 = scmp.ne.s32.totalorder %s241, %s243
    %p247 = scmp.eq.s32.totalorder %s18, 0
    %p248 = por %p246, %p247
    %p249 = scmp.ne.s32.totalorder %s241, %s243
    %p250 = scmp.eq.s32.totalorder %s23, 1
    %p251 = por %p249, %p250
    %p252 = scmp.ne.s32.totalorder %s243, %s244
    %p253 = scmp.eq.s32.totalorder %s23, 0
    %p254 = por %p252, %p253
    %p255 = scmp.ne.s32.totalorder %s243, %s244
    %p256 = scmp.eq.s32.totalorder %s24, 1
    %p257 = por %p255, %p256
    %p259 = scmp.ne.s32.totalorder %s244, %s258
    %p260 = scmp.eq.s32.totalorder %s24, 0
    %p261 = por %p259, %p260
    %s263 = sadd.s32 %s262, 1
    %p266 = scmp.eq.s32.totalorder %s18, 1
    %p267 = scmp.ne.s32.totalorder %s262, %s264
    %p268 = scmp.eq.s32.totalorder %s18, 0
    %p269 = por %p267, %p268
    %p270 = scmp.ne.s32.totalorder %s262, %s264
    %p271 = scmp.eq.s32.totalorder %s23, 1
    %p272 = por %p270, %p271
    %p273 = scmp.ne.s32.totalorder %s264, %s265
    %p274 = scmp.eq.s32.totalorder %s23, 0
    %p275 = por %p273, %p274
    %p276 = scmp.ne.s32.totalorder %s264, %s265
    %p277 = scmp.eq.s32.totalorder %s24, 1
    %p278 = por %p276, %p277
    %p280 = scmp.ne.s32.totalorder %s265, %s279
    %p281 = scmp.eq.s32.totalorder %s24, 0
    %p282 = por %p280, %p281
    %s283 = ssub.s32 %s18, %s25
    %p284 = scmp.eq.s32.totalorder %s283, 0
    %s286 = sadd.s32 %s285, 1
    %s287 = scalar_select %p284, %s285, %s286
    %p290 = pneg %p284
    %p291 = scmp.eq.s32.totalorder %s18, 1
    %p292 = por %p290, %p291
    %p293 = scmp.ne.s32.totalorder %s285, %s288
    %p294 = scmp.eq.s32.totalorder %s18, 0
    %p295 = por %p293, %p294
    %p296 = scmp.ne.s32.totalorder %s285, %s288
    %p297 = scmp.eq.s32.totalorder %s23, 1
    %p298 = por %p296, %p297
    %p299 = scmp.ne.s32.totalorder %s288, %s289
    %p300 = scmp.eq.s32.totalorder %s23, 0
    %p301 = por %p299, %p300
    %p302 = scmp.ne.s32.totalorder %s288, %s289
    %p303 = scmp.eq.s32.totalorder %s24, 1
    %p304 = por %p302, %p303
    %p306 = scmp.ne.s32.totalorder %s289, %s305
    %p307 = scmp.eq.s32.totalorder %s24, 0
    %p308 = por %p306, %p307
    %p309 = scmp.le.s32.totalorder 1, %s18
    %p310 = scmp.lt.s32.totalorder %s18, 3
    %p311 = pnand %p309, %p310
    %p312 = pneg %p311
    // Predicated region
    $region9: #{attsets_forward.1} parent=5 // pred_check
      _
    $region10: #{attsets_forward.1} parent=5 // pred_check_branch
      %314 = sbr.rel (%p311) target = $region12
    $region11: #{attsets_forward.1} parent=5 // pred_region
      %s315 = ssub.s32 %s18, 1
      // Predicated region
      $region13: #{attsets_forward.1} parent=11 // pred_check
        %p316 = pneg %p65
      $region14: #{attsets_forward.1} parent=11 // pred_check_branch
        %318 = sbr.rel (%p316) target = $region16
      $region15: #{attsets_forward.1} parent=11 // pred_region
        _
      $region16: #{attsets_forward.1} parent=11 // pred_fallthru
        _
      // Predicated region
      $region17: #{attsets_forward.1} parent=11 // pred_check
        %p319 = pneg %p86
      $region18: #{attsets_forward.1} parent=11 // pred_check_branch
        %321 = sbr.rel (%p319) target = $region20
      $region19: #{attsets_forward.1} parent=11 // pred_region
        _
      $region20: #{attsets_forward.1} parent=11 // pred_fallthru
        _
      // Predicated region
      $region21: #{attsets_forward.1} parent=11 // pred_check
        %p322 = pneg %p107
      $region22: #{attsets_forward.1} parent=11 // pred_check_branch
        %324 = sbr.rel (%p322) target = $region24
      $region23: #{attsets_forward.1} parent=11 // pred_region
        _
      $region24: #{attsets_forward.1} parent=11 // pred_fallthru
        _
      // Predicated region
      $region25: #{attsets_forward.1} parent=11 // pred_check
        %p325 = pneg %p128
      $region26: #{attsets_forward.1} parent=11 // pred_check_branch
        %327 = sbr.rel (%p325) target = $region28
      $region27: #{attsets_forward.1} parent=11 // pred_region
        _
      $region28: #{attsets_forward.1} parent=11 // pred_fallthru
        _
      // Predicated region
      $region29: #{attsets_forward.1} parent=11 // pred_check
        %p328 = pneg %p149
      $region30: #{attsets_forward.1} parent=11 // pred_check_branch
        %330 = sbr.rel (%p328) target = $region32
      $region31: #{attsets_forward.1} parent=11 // pred_region
        _
      $region32: #{attsets_forward.1} parent=11 // pred_fallthru
        _
      // Predicated region
      $region33: #{attsets_forward.1} parent=11 // pred_check
        %p331 = pneg %p170
      $region34: #{attsets_forward.1} parent=11 // pred_check_branch
        %333 = sbr.rel (%p331) target = $region36
      $region35: #{attsets_forward.1} parent=11 // pred_region
        _
      $region36: #{attsets_forward.1} parent=11 // pred_fallthru
        _
      // Predicated region
      $region37: #{attsets_forward.1} parent=11 // pred_check
        %p334 = pneg %p191
      $region38: #{attsets_forward.1} parent=11 // pred_check_branch
        %336 = sbr.rel (%p334) target = $region40
      $region39: #{attsets_forward.1} parent=11 // pred_region
        _
      $region40: #{attsets_forward.1} parent=11 // pred_fallthru
        _
      // Predicated region
      $region41: #{attsets_forward.1} parent=11 // pred_check
        %p337 = pneg %p212
      $region42: #{attsets_forward.1} parent=11 // pred_check_branch
        %339 = sbr.rel (%p337) target = $region44
      $region43: #{attsets_forward.1} parent=11 // pred_region
        _
      $region44: #{attsets_forward.1} parent=11 // pred_fallthru
        _
      // Predicated region
      $region45: #{attsets_forward.1} parent=11 // pred_check
        %p340 = pneg %p233
      $region46: #{attsets_forward.1} parent=11 // pred_check_branch
        %342 = sbr.rel (%p340) target = $region48
      $region47: #{attsets_forward.1} parent=11 // pred_region
        _
      $region48: #{attsets_forward.1} parent=11 // pred_fallthru
        _
      // Predicated region
      $region49: #{attsets_forward.1} parent=11 // pred_check
        %p343 = pneg %p254
      $region50: #{attsets_forward.1} parent=11 // pred_check_branch
        %345 = sbr.rel (%p343) target = $region52
      $region51: #{attsets_forward.1} parent=11 // pred_region
        _
      $region52: #{attsets_forward.1} parent=11 // pred_fallthru
        _
      // Predicated region
      $region53: #{attsets_forward.1} parent=11 // pred_check
        %p346 = pneg %p275
      $region54: #{attsets_forward.1} parent=11 // pred_check_branch
        %348 = sbr.rel (%p346) target = $region56
      $region55: #{attsets_forward.1} parent=11 // pred_region
        _
      $region56: #{attsets_forward.1} parent=11 // pred_fallthru
        _
    $region12: #{attsets_forward.1} parent=5 // pred_fallthru
      _
    %p349 = scmp.lt.s32.totalorder %s18, 2
    // Predicated region
    $region57: #{attsets_forward.1} parent=5 // pred_check
      %p350 = pneg %p349
    $region58: #{attsets_forward.1} parent=5 // pred_check_branch
      %352 = sbr.rel (%p350) target = $region60
    $region59: #{attsets_forward.1} parent=5 // pred_region
      // Predicated region
      $region61: #{attsets_forward.1} parent=59 // pred_check
        %p353 = pneg %p38
      $region62: #{attsets_forward.1} parent=59 // pred_check_branch
        %355 = sbr.rel (%p353) target = $region64
      $region63: #{attsets_forward.1} parent=59 // pred_region
        %s356 = smul.u32 64, %s18
        %p357 = scmp.lt.s32.totalorder %s356, 127
        %s358 = scalar_select %p357, %s356, 127
        %s359 = smul.addr %s358, 8
        %s360 = scalar_lea.vmem %s0, %s359
        %s361 = smul.u32 64, %s18
      $region64: #{attsets_forward.1} parent=59 // pred_fallthru
        _
    $region60: #{attsets_forward.1} parent=5 // pred_fallthru
      _
    %p362 = scmp.le.s32.totalorder 1, %s18
    %p363 = scmp.lt.s32.totalorder %s18, 3
    %p364 = pnand %p362, %p363
    %p365 = pneg %p364
    // Predicated region
    $region65: #{attsets_forward.1} parent=5 // pred_check
      _
    $region66: #{attsets_forward.1} parent=5 // pred_check_branch
      %367 = sbr.rel (%p364) target = $region68
    $region67: #{attsets_forward.1} parent=5 // pred_region
      %s368 = ssub.s32 %s18, 1
      %s369 = smul.u32 64, %s23
      %p370 = scmp.lt.s32.totalorder %s369, 127
      %s371 = scalar_select %p370, %s369, 127
      %s372 = smul.addr %s371, 8
      %s373 = scalar_lea.vmem %s0, %s372
      %p374 = pneg %p44
      %p375 = pneg %p41
      %p376 = pneg %p65
      %p377 = pneg %p62
      %p378 = pneg %p86
      %p379 = pneg %p83
      %p380 = pneg %p107
      %p381 = pneg %p104
      %p382 = pneg %p128
      %p383 = pneg %p125
      %p384 = pneg %p149
      %p385 = pneg %p146
      %p386 = pneg %p170
      %p387 = pneg %p167
      %p388 = pneg %p191
      %p389 = pneg %p188
      %p390 = pneg %p212
      %p391 = pneg %p209
      %p392 = pneg %p233
      %p393 = pneg %p230
      %p394 = pneg %p254
      %p395 = pneg %p251
      %p396 = pneg %p275
      %p397 = pneg %p272
      %p398 = pneg %p301
      %p399 = pneg %p298
      %s400 = smul.u32 64, %s23
      %p401 = scmp.lt.s32.totalorder %s400, 127
      %s402 = scalar_select %p401, %s400, 127
      %s403 = smul.addr %s402, 8
      %s404 = scalar_lea.vmem %s12, %s403
      %s405 = smul.u32 64, %s23
      %p406 = scmp.lt.s32.totalorder %s405, 127
      %s407 = scalar_select %p406, %s405, 127
      %s408 = smul.addr %s407, 8
      %s409 = scalar_lea.vmem %s0, %s408
      %s410 = smul.u32 64, %s23
      %s411 = smul.u32 64, %s23
      %p412 = scmp.lt.s32.totalorder %s411, 127
      %s413 = scalar_select %p412, %s411, 127
      %s414 = smul.addr %s413, 8
      %s415 = scalar_lea.vmem %s12, %s414
      %s416 = smul.u32 64, %s23
      %v417 = vld [vmem:[%s409] sm:$0xff]
      %v418 = vld [vmem:[%s409 + $0x8] sm:$0xff]
      %v419 = vld [vmem:[%s409 + $0x10] sm:$0xff]
      %v420 = vld [vmem:[%s409 + $0x18] sm:$0xff]
      %v421 = vld [vmem:[%s409 + $0x20] sm:$0xff]
      %v422 = vld [vmem:[%s409 + $0x28] sm:$0xff]
      %v423 = vld [vmem:[%s409 + $0x30] sm:$0xff]
      %v424 = vld [vmem:[%s409 + $0x38] sm:$0xff]
      %v425 = vld [vmem:[%s409 + $0x40] sm:$0xff]
      %v426 = vld [vmem:[%s409 + $0x48] sm:$0xff]
      %v427 = vld [vmem:[%s409 + $0x50] sm:$0xff]
      %v428 = vld [vmem:[%s409 + $0x58] sm:$0xff]
      %v429 = vld [vmem:[%s409 + $0x60] sm:$0xff]
      %v430 = vld [vmem:[%s409 + $0x68] sm:$0xff]
      %v431 = vld [vmem:[%s409 + $0x70] sm:$0xff]
      %v432 = vld [vmem:[%s409 + $0x78] sm:$0xff]
      %v433 = vld [vmem:[%s409 + $0x80] sm:$0xff]
      %v434 = vld [vmem:[%s409 + $0x88] sm:$0xff]
      %v435 = vld [vmem:[%s409 + $0x90] sm:$0xff]
      %v436 = vld [vmem:[%s409 + $0x98] sm:$0xff]
      %v437 = vld [vmem:[%s409 + $0xa0] sm:$0xff]
      %v438 = vld [vmem:[%s409 + $0xa8] sm:$0xff]
      %v439 = vld [vmem:[%s409 + $0xb0] sm:$0xff]
      %v440 = vld [vmem:[%s409 + $0xb8] sm:$0xff]
      %v441 = vld [vmem:[%s409 + $0xc0] sm:$0xff]
      %v442 = vld [vmem:[%s409 + $0xc8] sm:$0xff]
      %v443 = vld [vmem:[%s409 + $0xd0] sm:$0xff]
      %v444 = vld [vmem:[%s409 + $0xd8] sm:$0xff]
      %v445 = vld [vmem:[%s409 + $0xe0] sm:$0xff]
      %v446 = vld [vmem:[%s409 + $0xe8] sm:$0xff]
      %v447 = vld [vmem:[%s409 + $0xf0] sm:$0xff]
      %v448 = vld [vmem:[%s409 + $0xf8] sm:$0xff]
      %v449 = vld [vmem:[%s409 + $0x100] sm:$0xff]
      %v450 = vld [vmem:[%s409 + $0x108] sm:$0xff]
      %v451 = vld [vmem:[%s409 + $0x110] sm:$0xff]
      %v452 = vld [vmem:[%s409 + $0x118] sm:$0xff]
      %v453 = vld [vmem:[%s409 + $0x120] sm:$0xff]
      %v454 = vld [vmem:[%s409 + $0x128] sm:$0xff]
      %v455 = vld [vmem:[%s409 + $0x130] sm:$0xff]
      %v456 = vld [vmem:[%s409 + $0x138] sm:$0xff]
      %v457 = vld [vmem:[%s409 + $0x140] sm:$0xff]
      %v458 = vld [vmem:[%s409 + $0x148] sm:$0xff]
      %v459 = vld [vmem:[%s409 + $0x150] sm:$0xff]
      %v460 = vld [vmem:[%s409 + $0x158] sm:$0xff]
      %v461 = vld [vmem:[%s409 + $0x160] sm:$0xff]
      %v462 = vld [vmem:[%s409 + $0x168] sm:$0xff]
      %v463 = vld [vmem:[%s409 + $0x170] sm:$0xff]
      %v464 = vld [vmem:[%s409 + $0x178] sm:$0xff]
      %v465 = vld [vmem:[%s409 + $0x180] sm:$0xff]
      %v466 = vld [vmem:[%s409 + $0x188] sm:$0xff]
      %v467 = vld [vmem:[%s409 + $0x190] sm:$0xff]
      %v468 = vld [vmem:[%s409 + $0x198] sm:$0xff]
      %v469 = vld [vmem:[%s409 + $0x1a0] sm:$0xff]
      %v470 = vld [vmem:[%s409 + $0x1a8] sm:$0xff]
      %v471 = vld [vmem:[%s409 + $0x1b0] sm:$0xff]
      %v472 = vld [vmem:[%s409 + $0x1b8] sm:$0xff]
      %v473 = vld [vmem:[%s409 + $0x1c0] sm:$0xff]
      %v474 = vld [vmem:[%s409 + $0x1c8] sm:$0xff]
      %v475 = vld [vmem:[%s409 + $0x1d0] sm:$0xff]
      %v476 = vld [vmem:[%s409 + $0x1d8] sm:$0xff]
      %v477 = vld [vmem:[%s409 + $0x1e0] sm:$0xff]
      %v478 = vld [vmem:[%s409 + $0x1e8] sm:$0xff]
      %v479 = vld [vmem:[%s409 + $0x1f0] sm:$0xff]
      %v480 = vld [vmem:[%s409 + $0x1f8] sm:$0xff]
      %v481 = vld [vmem:[%s1] sm:$0x77]
      %v482 = vld [vmem:[%s2] sm:$0x3]
      %v484 = vlaneseq
      %v485 = vshrl.u32 %v484, 7
      %v486 = vsub.s32 0, %v485
      %v487 = vrot.slane %v482, %v486
      %v488 = vlaneseq
      %v489 = vshrl.u32 %v488, 7
      %v490 = vsub.s32 1, %v489
      %v491 = vrot.slane %v482, %v490
      %v495 = vcombine.high %v481, %v481
      %vm496 = vcmask 23552
      %v498 = vsel %vm496, %v417, 0
      %v501 = vsel %vm496, %v418, 0
      %v504 = vsel %vm496, %v419, 0
      %v507 = vsel %vm496, %v420, 0
      %v510 = vsel %vm496, %v421, 0
      %v513 = vsel %vm496, %v422, 0
      %v516 = vsel %vm496, %v423, 0
      %v519 = vsel %vm496, %v424, 0
      %v522 = vsel %vm496, %v425, 0
      %v525 = vsel %vm496, %v426, 0
      %v528 = vsel %vm496, %v427, 0
      %v531 = vsel %vm496, %v428, 0
      %v534 = vsel %vm496, %v429, 0
      %v537 = vsel %vm496, %v430, 0
      %v540 = vsel %vm496, %v431, 0
      %v543 = vsel %vm496, %v432, 0
      %v546 = vsel %vm496, %v433, 0
      %v549 = vsel %vm496, %v434, 0
      %v552 = vsel %vm496, %v435, 0
      %v555 = vsel %vm496, %v436, 0
      %v558 = vsel %vm496, %v437, 0
      %v561 = vsel %vm496, %v438, 0
      %v564 = vsel %vm496, %v439, 0
      %v567 = vsel %vm496, %v440, 0
      %v570 = vsel %vm496, %v441, 0
      %v573 = vsel %vm496, %v442, 0
      %v576 = vsel %vm496, %v443, 0
      %v579 = vsel %vm496, %v444, 0
      %v582 = vsel %vm496, %v445, 0
      %v585 = vsel %vm496, %v446, 0
      %v588 = vsel %vm496, %v447, 0
      %v591 = vsel %vm496, %v448, 0
      %v594 = vsel %vm496, %v449, 0
      %v597 = vsel %vm496, %v450, 0
      %v600 = vsel %vm496, %v451, 0
      %v603 = vsel %vm496, %v452, 0
      %v606 = vsel %vm496, %v453, 0
      %v609 = vsel %vm496, %v454, 0
      %v612 = vsel %vm496, %v455, 0
      %v615 = vsel %vm496, %v456, 0
      %v618 = vsel %vm496, %v457, 0
      %v621 = vsel %vm496, %v458, 0
      %v624 = vsel %vm496, %v459, 0
      %v627 = vsel %vm496, %v460, 0
      %v630 = vsel %vm496, %v461, 0
      %v633 = vsel %vm496, %v462, 0
      %v636 = vsel %vm496, %v463, 0
      %v639 = vsel %vm496, %v464, 0
      %v642 = vsel %vm496, %v465, 0
      %v645 = vsel %vm496, %v466, 0
      %v648 = vsel %vm496, %v467, 0
      %v651 = vsel %vm496, %v468, 0
      %v654 = vsel %vm496, %v469, 0
      %v657 = vsel %vm496, %v470, 0
      %v660 = vsel %vm496, %v471, 0
      %v663 = vsel %vm496, %v472, 0
      %v666 = vsel %vm496, %v473, 0
      %v669 = vsel %vm496, %v474, 0
      %v672 = vsel %vm496, %v475, 0
      %v675 = vsel %vm496, %v476, 0
      %v678 = vsel %vm496, %v477, 0
      %v681 = vsel %vm496, %v478, 0
      %v684 = vsel %vm496, %v479, 0
      %v687 = vsel %vm496, %v480, 0
      %vm689 = vcmask 1042432
      %v690 = vsel %vm689, %v481, 0
      %v692 = vsel %vm689, %v495, 0
      %694 = vmatprep.subr.mxu0 0.0
      %695 = vmatpush1.msra.mxu0 0.0
      %696 = vmatprep.subr.mxu0 0.0
      %697 = vmatpush1.msra.mxu0 0.0
      %698 = vmatprep.subr.mxu0 0.0
      %699 = vmatpush1.msra.mxu0 0.0
      %700 = vmatprep.subr.mxu0 0.0
      %701 = vmatpush1.msra.mxu0 0.0
      %702 = vmatprep.subr.mxu0 0.0
      %703 = vmatpush1.msra.mxu0 0.0
      %704 = vmatprep.subr.mxu0 0.0
      %705 = vmatpush1.msra.mxu0 0.0
      %706 = vmatprep.subr.mxu0 0.0
      %707 = vmatpush1.msra.mxu0 0.0
      %708 = vmatprep.subr.mxu0 0.0
      %709 = vmatpush1.msra.mxu0 0.0
      %710 = vmatprep.subr.mxu0 0.0
      %711 = vmatpush1.msra.mxu0 0.0
      %712 = vmatprep.subr.mxu0 0.0
      %713 = vmatpush1.msra.mxu0 0.0
      %714 = vmatprep.subr.mxu0 0.0
      %715 = vmatpush1.msra.mxu0 0.0
      %716 = vmatprep.subr.mxu0 0.0
      %717 = vmatpush1.msra.mxu0 0.0
      %718 = vmatprep.subr.mxu0 0.0
      %719 = vmatpush1.msra.mxu0 0.0
      %720 = vmatprep.subr.mxu0 0.0
      %721 = vmatpush1.msra.mxu0 0.0
      %722 = vmatprep.subr.mxu0 0.0
      %723 = vmatpush1.msra.mxu0 0.0
      %724 = vmatprep.subr.mxu0 %v692
      %725 = vmatpush1.msra.mxu0 %v690
      %726 = vmatprep.subr.mxu0 0.0
      %727 = vmatpush2.msra.mxu0 0.0
      %728 = vmatprep.subr.mxu0 0.0
      %729 = vmatpush2.msra.mxu0 0.0
      %730 = vmatprep.subr.mxu0 0.0
      %731 = vmatpush2.msra.mxu0 0.0
      %732 = vmatprep.subr.mxu0 0.0
      %733 = vmatpush2.msra.mxu0 0.0
      %734 = vmatprep.subr.mxu0 0.0
      %735 = vmatpush2.msra.mxu0 0.0
      %736 = vmatprep.subr.mxu0 0.0
      %737 = vmatpush2.msra.mxu0 0.0
      %738 = vmatprep.subr.mxu0 0.0
      %739 = vmatpush2.msra.mxu0 0.0
      %740 = vmatprep.subr.mxu0 0.0
      %741 = vmatpush2.msra.mxu0 0.0
      %742 = vmatprep.subr.mxu0 0.0
      %743 = vmatpush2.msra.mxu0 0.0
      %744 = vmatprep.subr.mxu0 0.0
      %745 = vmatpush2.msra.mxu0 0.0
      %746 = vmatprep.subr.mxu0 0.0
      %747 = vmatpush2.msra.mxu0 0.0
      %748 = vmatprep.subr.mxu0 0.0
      %749 = vmatpush2.msra.mxu0 0.0
      %750 = vmatprep.subr.mxu0 0.0
      %751 = vmatpush2.msra.mxu0 0.0
      %752 = vmatprep.subr.mxu0 0.0
      %753 = vmatpush2.msra.mxu0 0.0
      %754 = vmatprep.subr.mxu0 0.0
      %755 = vmatpush2.msra.mxu0 0.0
      %756 = vmatprep.subr.mxu0 0.0
      %757 = vmatpush2.msra.mxu0 0.0
      %758 = vmatprep.mubr.f32.mxu0 0.0
      %759 = vmatmul.mubr.f32.gmra.mxu0 %v498
      %v760 = vpop.f32.mrf.mxu0
      %v761 = vadd.f32 %v487, %v760
      %v762 = vpop.f32.mrf.mxu0
      %v763 = vadd.f32 %v491, %v762
      %764 = vmatprep.mubr.f32.mxu0 0.0
      %765 = vmatmul.mubr.f32.gmra.mxu0 %v501
      %v766 = vpop.f32.mrf.mxu0
      %v767 = vadd.f32 %v487, %v766
      %v768 = vpop.f32.mrf.mxu0
      %v769 = vadd.f32 %v491, %v768
      %770 = vmatprep.mubr.f32.mxu0 0.0
      %771 = vmatmul.mubr.f32.gmra.mxu0 %v504
      %v772 = vpop.f32.mrf.mxu0
      %v773 = vadd.f32 %v487, %v772
      %v774 = vpop.f32.mrf.mxu0
      %v775 = vadd.f32 %v491, %v774
      %776 = vmatprep.mubr.f32.mxu0 0.0
      %777 = vmatmul.mubr.f32.gmra.mxu0 %v507
      %v778 = vpop.f32.mrf.mxu0
      %v779 = vadd.f32 %v487, %v778
      %v780 = vpop.f32.mrf.mxu0
      %v781 = vadd.f32 %v491, %v780
      %782 = vmatprep.mubr.f32.mxu0 0.0
      %783 = vmatmul.mubr.f32.gmra.mxu0 %v510
      %v784 = vpop.f32.mrf.mxu0
      %v785 = vadd.f32 %v487, %v784
      %v786 = vpop.f32.mrf.mxu0
      %v787 = vadd.f32 %v491, %v786
      %788 = vmatprep.mubr.f32.mxu0 0.0
      %789 = vmatmul.mubr.f32.gmra.mxu0 %v513
      %v790 = vpop.f32.mrf.mxu0
      %v791 = vadd.f32 %v487, %v790
      %v792 = vpop.f32.mrf.mxu0
      %v793 = vadd.f32 %v491, %v792
      %794 = vmatprep.mubr.f32.mxu0 0.0
      %795 = vmatmul.mubr.f32.gmra.mxu0 %v516
      %v796 = vpop.f32.mrf.mxu0
      %v797 = vadd.f32 %v487, %v796
      %v798 = vpop.f32.mrf.mxu0
      %v799 = vadd.f32 %v491, %v798
      %800 = vmatprep.mubr.f32.mxu0 0.0
      %801 = vmatmul.mubr.f32.gmra.mxu0 %v519
      %v802 = vpop.f32.mrf.mxu0
      %v803 = vadd.f32 %v487, %v802
      %v804 = vpop.f32.mrf.mxu0
      %v805 = vadd.f32 %v491, %v804
      %806 = vmatprep.mubr.f32.mxu0 0.0
      %807 = vmatmul.mubr.f32.gmra.mxu0 %v522
      %v808 = vpop.f32.mrf.mxu0
      %v809 = vadd.f32 %v487, %v808
      %v810 = vpop.f32.mrf.mxu0
      %v811 = vadd.f32 %v491, %v810
      %812 = vmatprep.mubr.f32.mxu0 0.0
      %813 = vmatmul.mubr.f32.gmra.mxu0 %v525
      %v814 = vpop.f32.mrf.mxu0
      %v815 = vadd.f32 %v487, %v814
      %v816 = vpop.f32.mrf.mxu0
      %v817 = vadd.f32 %v491, %v816
      %818 = vmatprep.mubr.f32.mxu0 0.0
      %819 = vmatmul.mubr.f32.gmra.mxu0 %v528
      %v820 = vpop.f32.mrf.mxu0
      %v821 = vadd.f32 %v487, %v820
      %v822 = vpop.f32.mrf.mxu0
      %v823 = vadd.f32 %v491, %v822
      %824 = vmatprep.mubr.f32.mxu0 0.0
      %825 = vmatmul.mubr.f32.gmra.mxu0 %v531
      %v826 = vpop.f32.mrf.mxu0
      %v827 = vadd.f32 %v487, %v826
      %v828 = vpop.f32.mrf.mxu0
      %v829 = vadd.f32 %v491, %v828
      %830 = vmatprep.mubr.f32.mxu0 0.0
      %831 = vmatmul.mubr.f32.gmra.mxu0 %v534
      %v832 = vpop.f32.mrf.mxu0
      %v833 = vadd.f32 %v487, %v832
      %v834 = vpop.f32.mrf.mxu0
      %v835 = vadd.f32 %v491, %v834
      %836 = vmatprep.mubr.f32.mxu0 0.0
      %837 = vmatmul.mubr.f32.gmra.mxu0 %v537
      %v838 = vpop.f32.mrf.mxu0
      %v839 = vadd.f32 %v487, %v838
      %v840 = vpop.f32.mrf.mxu0
      %v841 = vadd.f32 %v491, %v840
      %842 = vmatprep.mubr.f32.mxu0 0.0
      %843 = vmatmul.mubr.f32.gmra.mxu0 %v540
      %v844 = vpop.f32.mrf.mxu0
      %v845 = vadd.f32 %v487, %v844
      %v846 = vpop.f32.mrf.mxu0
      %v847 = vadd.f32 %v491, %v846
      %848 = vmatprep.mubr.f32.mxu0 0.0
      %849 = vmatmul.mubr.f32.gmra.mxu0 %v543
      %v850 = vpop.f32.mrf.mxu0
      %v851 = vadd.f32 %v487, %v850
      %v852 = vpop.f32.mrf.mxu0
      %v853 = vadd.f32 %v491, %v852
      %854 = vmatprep.mubr.f32.mxu0 0.0
      %855 = vmatmul.mubr.f32.gmra.mxu0 %v546
      %v856 = vpop.f32.mrf.mxu0
      %v857 = vadd.f32 %v487, %v856
      %v858 = vpop.f32.mrf.mxu0
      %v859 = vadd.f32 %v491, %v858
      %860 = vmatprep.mubr.f32.mxu0 0.0
      %861 = vmatmul.mubr.f32.gmra.mxu0 %v549
      %v862 = vpop.f32.mrf.mxu0
      %v863 = vadd.f32 %v487, %v862
      %v864 = vpop.f32.mrf.mxu0
      %v865 = vadd.f32 %v491, %v864
      %866 = vmatprep.mubr.f32.mxu0 0.0
      %867 = vmatmul.mubr.f32.gmra.mxu0 %v552
      %v868 = vpop.f32.mrf.mxu0
      %v869 = vadd.f32 %v487, %v868
      %v870 = vpop.f32.mrf.mxu0
      %v871 = vadd.f32 %v491, %v870
      %872 = vmatprep.mubr.f32.mxu0 0.0
      %873 = vmatmul.mubr.f32.gmra.mxu0 %v555
      %v874 = vpop.f32.mrf.mxu0
      %v875 = vadd.f32 %v487, %v874
      %v876 = vpop.f32.mrf.mxu0
      %v877 = vadd.f32 %v491, %v876
      %878 = vmatprep.mubr.f32.mxu0 0.0
      %879 = vmatmul.mubr.f32.gmra.mxu0 %v558
      %v880 = vpop.f32.mrf.mxu0
      %v881 = vadd.f32 %v487, %v880
      %v882 = vpop.f32.mrf.mxu0
      %v883 = vadd.f32 %v491, %v882
      %884 = vmatprep.mubr.f32.mxu0 0.0
      %885 = vmatmul.mubr.f32.gmra.mxu0 %v561
      %v886 = vpop.f32.mrf.mxu0
      %v887 = vadd.f32 %v487, %v886
      %v888 = vpop.f32.mrf.mxu0
      %v889 = vadd.f32 %v491, %v888
      %890 = vmatprep.mubr.f32.mxu0 0.0
      %891 = vmatmul.mubr.f32.gmra.mxu0 %v564
      %v892 = vpop.f32.mrf.mxu0
      %v893 = vadd.f32 %v487, %v892
      %v894 = vpop.f32.mrf.mxu0
      %v895 = vadd.f32 %v491, %v894
      %896 = vmatprep.mubr.f32.mxu0 0.0
      %897 = vmatmul.mubr.f32.gmra.mxu0 %v567
      %v898 = vpop.f32.mrf.mxu0
      %v899 = vadd.f32 %v487, %v898
      %v900 = vpop.f32.mrf.mxu0
      %v901 = vadd.f32 %v491, %v900
      %902 = vmatprep.mubr.f32.mxu0 0.0
      %903 = vmatmul.mubr.f32.gmra.mxu0 %v570
      %v904 = vpop.f32.mrf.mxu0
      %v905 = vadd.f32 %v487, %v904
      %v906 = vpop.f32.mrf.mxu0
      %v907 = vadd.f32 %v491, %v906
      %908 = vmatprep.mubr.f32.mxu0 0.0
      %909 = vmatmul.mubr.f32.gmra.mxu0 %v573
      %v910 = vpop.f32.mrf.mxu0
      %v911 = vadd.f32 %v487, %v910
      %v912 = vpop.f32.mrf.mxu0
      %v913 = vadd.f32 %v491, %v912
      %914 = vmatprep.mubr.f32.mxu0 0.0
      %915 = vmatmul.mubr.f32.gmra.mxu0 %v576
      %v916 = vpop.f32.mrf.mxu0
      %v917 = vadd.f32 %v487, %v916
      %v918 = vpop.f32.mrf.mxu0
      %v919 = vadd.f32 %v491, %v918
      %920 = vmatprep.mubr.f32.mxu0 0.0
      %921 = vmatmul.mubr.f32.gmra.mxu0 %v579
      %v922 = vpop.f32.mrf.mxu0
      %v923 = vadd.f32 %v487, %v922
      %v924 = vpop.f32.mrf.mxu0
      %v925 = vadd.f32 %v491, %v924
      %926 = vmatprep.mubr.f32.mxu0 0.0
      %927 = vmatmul.mubr.f32.gmra.mxu0 %v582
      %v928 = vpop.f32.mrf.mxu0
      %v929 = vadd.f32 %v487, %v928
      %v930 = vpop.f32.mrf.mxu0
      %v931 = vadd.f32 %v491, %v930
      %932 = vmatprep.mubr.f32.mxu0 0.0
      %933 = vmatmul.mubr.f32.gmra.mxu0 %v585
      %v934 = vpop.f32.mrf.mxu0
      %v935 = vadd.f32 %v487, %v934
      %v936 = vpop.f32.mrf.mxu0
      %v937 = vadd.f32 %v491, %v936
      %938 = vmatprep.mubr.f32.mxu0 0.0
      %939 = vmatmul.mubr.f32.gmra.mxu0 %v588
      %v940 = vpop.f32.mrf.mxu0
      %v941 = vadd.f32 %v487, %v940
      %v942 = vpop.f32.mrf.mxu0
      %v943 = vadd.f32 %v491, %v942
      %944 = vmatprep.mubr.f32.mxu0 0.0
      %945 = vmatmul.mubr.f32.gmra.mxu0 %v591
      %v946 = vpop.f32.mrf.mxu0
      %v947 = vadd.f32 %v487, %v946
      %v948 = vpop.f32.mrf.mxu0
      %v949 = vadd.f32 %v491, %v948
      %950 = vmatprep.mubr.f32.mxu0 0.0
      %951 = vmatmul.mubr.f32.gmra.mxu0 %v594
      %v952 = vpop.f32.mrf.mxu0
      %v953 = vadd.f32 %v487, %v952
      %v954 = vpop.f32.mrf.mxu0
      %v955 = vadd.f32 %v491, %v954
      %956 = vmatprep.mubr.f32.mxu0 0.0
      %957 = vmatmul.mubr.f32.gmra.mxu0 %v597
      %v958 = vpop.f32.mrf.mxu0
      %v959 = vadd.f32 %v487, %v958
      %v960 = vpop.f32.mrf.mxu0
      %v961 = vadd.f32 %v491, %v960
      %962 = vmatprep.mubr.f32.mxu0 0.0
      %963 = vmatmul.mubr.f32.gmra.mxu0 %v600
      %v964 = vpop.f32.mrf.mxu0
      %v965 = vadd.f32 %v487, %v964
      %v966 = vpop.f32.mrf.mxu0
      %v967 = vadd.f32 %v491, %v966
      %968 = vmatprep.mubr.f32.mxu0 0.0
      %969 = vmatmul.mubr.f32.gmra.mxu0 %v603
      %v970 = vpop.f32.mrf.mxu0
      %v971 = vadd.f32 %v487, %v970
      %v972 = vpop.f32.mrf.mxu0
      %v973 = vadd.f32 %v491, %v972
      %974 = vmatprep.mubr.f32.mxu0 0.0
      %975 = vmatmul.mubr.f32.gmra.mxu0 %v606
      %v976 = vpop.f32.mrf.mxu0
      %v977 = vadd.f32 %v487, %v976
      %v978 = vpop.f32.mrf.mxu0
      %v979 = vadd.f32 %v491, %v978
      %980 = vmatprep.mubr.f32.mxu0 0.0
      %981 = vmatmul.mubr.f32.gmra.mxu0 %v609
      %v982 = vpop.f32.mrf.mxu0
      %v983 = vadd.f32 %v487, %v982
      %v984 = vpop.f32.mrf.mxu0
      %v985 = vadd.f32 %v491, %v984
      %986 = vmatprep.mubr.f32.mxu0 0.0
      %987 = vmatmul.mubr.f32.gmra.mxu0 %v612
      %v988 = vpop.f32.mrf.mxu0
      %v989 = vadd.f32 %v487, %v988
      %v990 = vpop.f32.mrf.mxu0
      %v991 = vadd.f32 %v491, %v990
      %992 = vmatprep.mubr.f32.mxu0 0.0
      %993 = vmatmul.mubr.f32.gmra.mxu0 %v615
      %v994 = vpop.f32.mrf.mxu0
      %v995 = vadd.f32 %v487, %v994
      %v996 = vpop.f32.mrf.mxu0
      %v997 = vadd.f32 %v491, %v996
      %998 = vmatprep.mubr.f32.mxu0 0.0
      %999 = vmatmul.mubr.f32.gmra.mxu0 %v618
      %v1000 = vpop.f32.mrf.mxu0
      %v1001 = vadd.f32 %v487, %v1000
      %v1002 = vpop.f32.mrf.mxu0
      %v1003 = vadd.f32 %v491, %v1002
      %1004 = vmatprep.mubr.f32.mxu0 0.0
      %1005 = vmatmul.mubr.f32.gmra.mxu0 %v621
      %v1006 = vpop.f32.mrf.mxu0
      %v1007 = vadd.f32 %v487, %v1006
      %v1008 = vpop.f32.mrf.mxu0
      %v1009 = vadd.f32 %v491, %v1008
      %1010 = vmatprep.mubr.f32.mxu0 0.0
      %1011 = vmatmul.mubr.f32.gmra.mxu0 %v624
      %v1012 = vpop.f32.mrf.mxu0
      %v1013 = vadd.f32 %v487, %v1012
      %v1014 = vpop.f32.mrf.mxu0
      %v1015 = vadd.f32 %v491, %v1014
      %1016 = vmatprep.mubr.f32.mxu0 0.0
      %1017 = vmatmul.mubr.f32.gmra.mxu0 %v627
      %v1018 = vpop.f32.mrf.mxu0
      %v1019 = vadd.f32 %v487, %v1018
      %v1020 = vpop.f32.mrf.mxu0
      %v1021 = vadd.f32 %v491, %v1020
      %1022 = vmatprep.mubr.f32.mxu0 0.0
      %1023 = vmatmul.mubr.f32.gmra.mxu0 %v630
      %v1024 = vpop.f32.mrf.mxu0
      %v1025 = vadd.f32 %v487, %v1024
      %v1026 = vpop.f32.mrf.mxu0
      %v1027 = vadd.f32 %v491, %v1026
      %1028 = vmatprep.mubr.f32.mxu0 0.0
      %1029 = vmatmul.mubr.f32.gmra.mxu0 %v633
      %v1030 = vpop.f32.mrf.mxu0
      %v1031 = vadd.f32 %v487, %v1030
      %v1032 = vpop.f32.mrf.mxu0
      %v1033 = vadd.f32 %v491, %v1032
      %1034 = vmatprep.mubr.f32.mxu0 0.0
      %1035 = vmatmul.mubr.f32.gmra.mxu0 %v636
      %v1036 = vpop.f32.mrf.mxu0
      %v1037 = vadd.f32 %v487, %v1036
      %v1038 = vpop.f32.mrf.mxu0
      %v1039 = vadd.f32 %v491, %v1038
      %1040 = vmatprep.mubr.f32.mxu0 0.0
      %1041 = vmatmul.mubr.f32.gmra.mxu0 %v639
      %v1042 = vpop.f32.mrf.mxu0
      %v1043 = vadd.f32 %v487, %v1042
      %v1044 = vpop.f32.mrf.mxu0
      %v1045 = vadd.f32 %v491, %v1044
      %1046 = vmatprep.mubr.f32.mxu0 0.0
      %1047 = vmatmul.mubr.f32.gmra.mxu0 %v642
      %v1048 = vpop.f32.mrf.mxu0
      %v1049 = vadd.f32 %v487, %v1048
      %v1050 = vpop.f32.mrf.mxu0
      %v1051 = vadd.f32 %v491, %v1050
      %1052 = vmatprep.mubr.f32.mxu0 0.0
      %1053 = vmatmul.mubr.f32.gmra.mxu0 %v645
      %v1054 = vpop.f32.mrf.mxu0
      %v1055 = vadd.f32 %v487, %v1054
      %v1056 = vpop.f32.mrf.mxu0
      %v1057 = vadd.f32 %v491, %v1056
      %1058 = vmatprep.mubr.f32.mxu0 0.0
      %1059 = vmatmul.mubr.f32.gmra.mxu0 %v648
      %v1060 = vpop.f32.mrf.mxu0
      %v1061 = vadd.f32 %v487, %v1060
      %v1062 = vpop.f32.mrf.mxu0
      %v1063 = vadd.f32 %v491, %v1062
      %1064 = vmatprep.mubr.f32.mxu0 0.0
      %1065 = vmatmul.mubr.f32.gmra.mxu0 %v651
      %v1066 = vpop.f32.mrf.mxu0
      %v1067 = vadd.f32 %v487, %v1066
      %v1068 = vpop.f32.mrf.mxu0
      %v1069 = vadd.f32 %v491, %v1068
      %1070 = vmatprep.mubr.f32.mxu0 0.0
      %1071 = vmatmul.mubr.f32.gmra.mxu0 %v654
      %v1072 = vpop.f32.mrf.mxu0
      %v1073 = vadd.f32 %v487, %v1072
      %v1074 = vpop.f32.mrf.mxu0
      %v1075 = vadd.f32 %v491, %v1074
      %1076 = vmatprep.mubr.f32.mxu0 0.0
      %1077 = vmatmul.mubr.f32.gmra.mxu0 %v657
      %v1078 = vpop.f32.mrf.mxu0
      %v1079 = vadd.f32 %v487, %v1078
      %v1080 = vpop.f32.mrf.mxu0
      %v1081 = vadd.f32 %v491, %v1080
      %1082 = vmatprep.mubr.f32.mxu0 0.0
      %1083 = vmatmul.mubr.f32.gmra.mxu0 %v660
      %v1084 = vpop.f32.mrf.mxu0
      %v1085 = vadd.f32 %v487, %v1084
      %v1086 = vpop.f32.mrf.mxu0
      %v1087 = vadd.f32 %v491, %v1086
      %1088 = vmatprep.mubr.f32.mxu0 0.0
      %1089 = vmatmul.mubr.f32.gmra.mxu0 %v663
      %v1090 = vpop.f32.mrf.mxu0
      %v1091 = vadd.f32 %v487, %v1090
      %v1092 = vpop.f32.mrf.mxu0
      %v1093 = vadd.f32 %v491, %v1092
      %1094 = vmatprep.mubr.f32.mxu0 0.0
      %1095 = vmatmul.mubr.f32.gmra.mxu0 %v666
      %v1096 = vpop.f32.mrf.mxu0
      %v1097 = vadd.f32 %v487, %v1096
      %v1098 = vpop.f32.mrf.mxu0
      %v1099 = vadd.f32 %v491, %v1098
      %1100 = vmatprep.mubr.f32.mxu0 0.0
      %1101 = vmatmul.mubr.f32.gmra.mxu0 %v669
      %v1102 = vpop.f32.mrf.mxu0
      %v1103 = vadd.f32 %v487, %v1102
      %v1104 = vpop.f32.mrf.mxu0
      %v1105 = vadd.f32 %v491, %v1104
      %1106 = vmatprep.mubr.f32.mxu0 0.0
      %1107 = vmatmul.mubr.f32.gmra.mxu0 %v672
      %v1108 = vpop.f32.mrf.mxu0
      %v1109 = vadd.f32 %v487, %v1108
      %v1110 = vpop.f32.mrf.mxu0
      %v1111 = vadd.f32 %v491, %v1110
      %1112 = vmatprep.mubr.f32.mxu0 0.0
      %1113 = vmatmul.mubr.f32.gmra.mxu0 %v675
      %v1114 = vpop.f32.mrf.mxu0
      %v1115 = vadd.f32 %v487, %v1114
      %v1116 = vpop.f32.mrf.mxu0
      %v1117 = vadd.f32 %v491, %v1116
      %1118 = vmatprep.mubr.f32.mxu0 0.0
      %1119 = vmatmul.mubr.f32.gmra.mxu0 %v678
      %v1120 = vpop.f32.mrf.mxu0
      %v1121 = vadd.f32 %v487, %v1120
      %v1122 = vpop.f32.mrf.mxu0
      %v1123 = vadd.f32 %v491, %v1122
      %1124 = vmatprep.mubr.f32.mxu0 0.0
      %1125 = vmatmul.mubr.f32.gmra.mxu0 %v681
      %v1126 = vpop.f32.mrf.mxu0
      %v1127 = vadd.f32 %v487, %v1126
      %v1128 = vpop.f32.mrf.mxu0
      %v1129 = vadd.f32 %v491, %v1128
      %1130 = vmatprep.mubr.f32.mxu0 0.0
      %1131 = vmatmul.mubr.f32.gmra.mxu0 %v684
      %v1132 = vpop.f32.mrf.mxu0
      %v1133 = vadd.f32 %v487, %v1132
      %v1134 = vpop.f32.mrf.mxu0
      %v1135 = vadd.f32 %v491, %v1134
      %1136 = vmatprep.mubr.f32.mxu0 0.0
      %1137 = vmatmul.mubr.f32.gmra.mxu0 %v687
      %v1138 = vpop.f32.mrf.mxu0
      %v1139 = vadd.f32 %v487, %v1138
      %v1140 = vpop.f32.mrf.mxu0
      %v1141 = vadd.f32 %v491, %v1140
      %1142 = vdwg.mxu0
      %v1143 = vmax.f32 %v761, 0.0
      %v1144 = vmax.f32 %v767, 0.0
      %v1145 = vmax.f32 %v773, 0.0
      %v1146 = vmax.f32 %v779, 0.0
      %v1147 = vmax.f32 %v785, 0.0
      %v1148 = vmax.f32 %v791, 0.0
      %v1149 = vmax.f32 %v797, 0.0
      %v1150 = vmax.f32 %v803, 0.0
      %v1151 = vmax.f32 %v809, 0.0
      %v1152 = vmax.f32 %v815, 0.0
      %v1153 = vmax.f32 %v821, 0.0
      %v1154 = vmax.f32 %v827, 0.0
      %v1155 = vmax.f32 %v833, 0.0
      %v1156 = vmax.f32 %v839, 0.0
      %v1157 = vmax.f32 %v845, 0.0
      %v1158 = vmax.f32 %v851, 0.0
      %v1159 = vmax.f32 %v857, 0.0
      %v1160 = vmax.f32 %v863, 0.0
      %v1161 = vmax.f32 %v869, 0.0
      %v1162 = vmax.f32 %v875, 0.0
      %v1163 = vmax.f32 %v881, 0.0
      %v1164 = vmax.f32 %v887, 0.0
      %v1165 = vmax.f32 %v893, 0.0
      %v1166 = vmax.f32 %v899, 0.0
      %v1167 = vmax.f32 %v905, 0.0
      %v1168 = vmax.f32 %v911, 0.0
      %v1169 = vmax.f32 %v917, 0.0
      %v1170 = vmax.f32 %v923, 0.0
      %v1171 = vmax.f32 %v929, 0.0
      %v1172 = vmax.f32 %v935, 0.0
      %v1173 = vmax.f32 %v941, 0.0
      %v1174 = vmax.f32 %v947, 0.0
      %v1175 = vmax.f32 %v953, 0.0
      %v1176 = vmax.f32 %v959, 0.0
      %v1177 = vmax.f32 %v965, 0.0
      %v1178 = vmax.f32 %v971, 0.0
      %v1179 = vmax.f32 %v977, 0.0
      %v1180 = vmax.f32 %v983, 0.0
      %v1181 = vmax.f32 %v989, 0.0
      %v1182 = vmax.f32 %v995, 0.0
      %v1183 = vmax.f32 %v1001, 0.0
      %v1184 = vmax.f32 %v1007, 0.0
      %v1185 = vmax.f32 %v1013, 0.0
      %v1186 = vmax.f32 %v1019, 0.0
      %v1187 = vmax.f32 %v1025, 0.0
      %v1188 = vmax.f32 %v1031, 0.0
      %v1189 = vmax.f32 %v1037, 0.0
      %v1190 = vmax.f32 %v1043, 0.0
      %v1191 = vmax.f32 %v1049, 0.0
      %v1192 = vmax.f32 %v1055, 0.0
      %v1193 = vmax.f32 %v1061, 0.0
      %v1194 = vmax.f32 %v1067, 0.0
      %v1195 = vmax.f32 %v1073, 0.0
      %v1196 = vmax.f32 %v1079, 0.0
      %v1197 = vmax.f32 %v1085, 0.0
      %v1198 = vmax.f32 %v1091, 0.0
      %v1199 = vmax.f32 %v1097, 0.0
      %v1200 = vmax.f32 %v1103, 0.0
      %v1201 = vmax.f32 %v1109, 0.0
      %v1202 = vmax.f32 %v1115, 0.0
      %v1203 = vmax.f32 %v1121, 0.0
      %v1204 = vmax.f32 %v1127, 0.0
      %v1205 = vmax.f32 %v1133, 0.0
      %v1206 = vmax.f32 %v1139, 0.0
      %v1207 = vld [vmem:[%s3] sm:$0xff]
      %v1208 = vld [vmem:[%s3 + $0x8] sm:$0xff]
      %v1209 = vld [vmem:[%s3 + $0x10] sm:$0xff]
      %v1210 = vld [vmem:[%s3 + $0x18] sm:$0xff]
      %v1211 = vld [vmem:[%s3 + $0x20] sm:$0xff]
      %v1212 = vld [vmem:[%s3 + $0x28] sm:$0xff]
      %v1213 = vld [vmem:[%s3 + $0x30] sm:$0xff]
      %v1214 = vld [vmem:[%s3 + $0x38] sm:$0xff]
      %v1215 = vld [vmem:[%s3 + $0x40] sm:$0xff]
      %v1216 = vld [vmem:[%s3 + $0x48] sm:$0xff]
      %v1217 = vld [vmem:[%s3 + $0x50] sm:$0xff]
      %v1218 = vld [vmem:[%s3 + $0x58] sm:$0xff]
      %v1219 = vld [vmem:[%s3 + $0x60] sm:$0xff]
      %v1220 = vld [vmem:[%s3 + $0x68] sm:$0xff]
      %v1221 = vld [vmem:[%s3 + $0x70] sm:$0xff]
      %v1222 = vld [vmem:[%s3 + $0x78] sm:$0xff]
      %v1223 = vld [vmem:[%s4] sm:$0x1]
      %v1225 = vlaneseq
      %v1226 = vshrl.u32 %v1225, 7
      %v1227 = vsub.s32 0, %v1226
      %v1228 = vrot.slane %v1223, %v1227
      %1230 = vmatprep.subr.mxu0 0.0
      %1231 = vmatpush1.msra.mxu0 %v1222
      %1232 = vmatprep.subr.mxu0 0.0
      %1233 = vmatpush1.msra.mxu0 %v1221
      %1234 = vmatprep.subr.mxu0 0.0
      %1235 = vmatpush1.msra.mxu0 %v1220
      %1236 = vmatprep.subr.mxu0 0.0
      %1237 = vmatpush1.msra.mxu0 %v1219
      %1238 = vmatprep.subr.mxu0 0.0
      %1239 = vmatpush1.msra.mxu0 %v1218
      %1240 = vmatprep.subr.mxu0 0.0
      %1241 = vmatpush1.msra.mxu0 %v1217
      %1242 = vmatprep.subr.mxu0 0.0
      %1243 = vmatpush1.msra.mxu0 %v1216
      %1244 = vmatprep.subr.mxu0 0.0
      %1245 = vmatpush1.msra.mxu0 %v1215
      %1246 = vmatprep.subr.mxu0 0.0
      %1247 = vmatpush1.msra.mxu0 %v1214
      %1248 = vmatprep.subr.mxu0 0.0
      %1249 = vmatpush1.msra.mxu0 %v1213
      %1250 = vmatprep.subr.mxu0 0.0
      %1251 = vmatpush1.msra.mxu0 %v1212
      %1252 = vmatprep.subr.mxu0 0.0
      %1253 = vmatpush1.msra.mxu0 %v1211
      %1254 = vmatprep.subr.mxu0 0.0
      %1255 = vmatpush1.msra.mxu0 %v1210
      %1256 = vmatprep.subr.mxu0 0.0
      %1257 = vmatpush1.msra.mxu0 %v1209
      %1258 = vmatprep.subr.mxu0 0.0
      %1259 = vmatpush1.msra.mxu0 %v1208
      %1260 = vmatprep.subr.mxu0 0.0
      %1261 = vmatpush1.msra.mxu0 %v1207
      %1262 = vmatprep.subr.mxu0 0.0
      %1263 = vmatpush2.msra.mxu0 0.0
      %1264 = vmatprep.subr.mxu0 0.0
      %1265 = vmatpush2.msra.mxu0 0.0
      %1266 = vmatprep.subr.mxu0 0.0
      %1267 = vmatpush2.msra.mxu0 0.0
      %1268 = vmatprep.subr.mxu0 0.0
      %1269 = vmatpush2.msra.mxu0 0.0
      %1270 = vmatprep.subr.mxu0 0.0
      %1271 = vmatpush2.msra.mxu0 0.0
      %1272 = vmatprep.subr.mxu0 0.0
      %1273 = vmatpush2.msra.mxu0 0.0
      %1274 = vmatprep.subr.mxu0 0.0
      %1275 = vmatpush2.msra.mxu0 0.0
      %1276 = vmatprep.subr.mxu0 0.0
      %1277 = vmatpush2.msra.mxu0 0.0
      %1278 = vmatprep.subr.mxu0 0.0
      %1279 = vmatpush2.msra.mxu0 0.0
      %1280 = vmatprep.subr.mxu0 0.0
      %1281 = vmatpush2.msra.mxu0 0.0
      %1282 = vmatprep.subr.mxu0 0.0
      %1283 = vmatpush2.msra.mxu0 0.0
      %1284 = vmatprep.subr.mxu0 0.0
      %1285 = vmatpush2.msra.mxu0 0.0
      %1286 = vmatprep.subr.mxu0 0.0
      %1287 = vmatpush2.msra.mxu0 0.0
      %1288 = vmatprep.subr.mxu0 0.0
      %1289 = vmatpush2.msra.mxu0 0.0
      %1290 = vmatprep.subr.mxu0 0.0
      %1291 = vmatpush2.msra.mxu0 0.0
      %1292 = vmatprep.subr.mxu0 0.0
      %1293 = vmatpush2.msra.mxu0 0.0
      %1294 = vmatprep.mubr.f32.mxu0 0.0
      %1295 = vmatmul.mubr.f32.gmra.mxu0 %v1143
      %v1296 = vpop.f32.mrf.mxu0
      %v1297 = vadd.f32 %v1228, %v1296
      %v1298 = vpop.f32.mrf.mxu0
      %1299 = vmatprep.mubr.f32.mxu0 0.0
      %1300 = vmatmul.mubr.f32.gmra.mxu0 %v1144
      %v1301 = vpop.f32.mrf.mxu0
      %v1302 = vadd.f32 %v1228, %v1301
      %v1303 = vpop.f32.mrf.mxu0
      %1304 = vmatprep.mubr.f32.mxu0 0.0
      %1305 = vmatmul.mubr.f32.gmra.mxu0 %v1145
      %v1306 = vpop.f32.mrf.mxu0
      %v1307 = vadd.f32 %v1228, %v1306
      %v1308 = vpop.f32.mrf.mxu0
      %1309 = vmatprep.mubr.f32.mxu0 0.0
      %1310 = vmatmul.mubr.f32.gmra.mxu0 %v1146
      %v1311 = vpop.f32.mrf.mxu0
      %v1312 = vadd.f32 %v1228, %v1311
      %v1313 = vpop.f32.mrf.mxu0
      %1314 = vmatprep.mubr.f32.mxu0 0.0
      %1315 = vmatmul.mubr.f32.gmra.mxu0 %v1147
      %v1316 = vpop.f32.mrf.mxu0
      %v1317 = vadd.f32 %v1228, %v1316
      %v1318 = vpop.f32.mrf.mxu0
      %1319 = vmatprep.mubr.f32.mxu0 0.0
      %1320 = vmatmul.mubr.f32.gmra.mxu0 %v1148
      %v1321 = vpop.f32.mrf.mxu0
      %v1322 = vadd.f32 %v1228, %v1321
      %v1323 = vpop.f32.mrf.mxu0
      %1324 = vmatprep.mubr.f32.mxu0 0.0
      %1325 = vmatmul.mubr.f32.gmra.mxu0 %v1149
      %v1326 = vpop.f32.mrf.mxu0
      %v1327 = vadd.f32 %v1228, %v1326
      %v1328 = vpop.f32.mrf.mxu0
      %1329 = vmatprep.mubr.f32.mxu0 0.0
      %1330 = vmatmul.mubr.f32.gmra.mxu0 %v1150
      %v1331 = vpop.f32.mrf.mxu0
      %v1332 = vadd.f32 %v1228, %v1331
      %v1333 = vpop.f32.mrf.mxu0
      %1334 = vmatprep.mubr.f32.mxu0 0.0
      %1335 = vmatmul.mubr.f32.gmra.mxu0 %v1151
      %v1336 = vpop.f32.mrf.mxu0
      %v1337 = vadd.f32 %v1228, %v1336
      %v1338 = vpop.f32.mrf.mxu0
      %1339 = vmatprep.mubr.f32.mxu0 0.0
      %1340 = vmatmul.mubr.f32.gmra.mxu0 %v1152
      %v1341 = vpop.f32.mrf.mxu0
      %v1342 = vadd.f32 %v1228, %v1341
      %v1343 = vpop.f32.mrf.mxu0
      %1344 = vmatprep.mubr.f32.mxu0 0.0
      %1345 = vmatmul.mubr.f32.gmra.mxu0 %v1153
      %v1346 = vpop.f32.mrf.mxu0
      %v1347 = vadd.f32 %v1228, %v1346
      %v1348 = vpop.f32.mrf.mxu0
      %1349 = vmatprep.mubr.f32.mxu0 0.0
      %1350 = vmatmul.mubr.f32.gmra.mxu0 %v1154
      %v1351 = vpop.f32.mrf.mxu0
      %v1352 = vadd.f32 %v1228, %v1351
      %v1353 = vpop.f32.mrf.mxu0
      %1354 = vmatprep.mubr.f32.mxu0 0.0
      %1355 = vmatmul.mubr.f32.gmra.mxu0 %v1155
      %v1356 = vpop.f32.mrf.mxu0
      %v1357 = vadd.f32 %v1228, %v1356
      %v1358 = vpop.f32.mrf.mxu0
      %1359 = vmatprep.mubr.f32.mxu0 0.0
      %1360 = vmatmul.mubr.f32.gmra.mxu0 %v1156
      %v1361 = vpop.f32.mrf.mxu0
      %v1362 = vadd.f32 %v1228, %v1361
      %v1363 = vpop.f32.mrf.mxu0
      %1364 = vmatprep.mubr.f32.mxu0 0.0
      %1365 = vmatmul.mubr.f32.gmra.mxu0 %v1157
      %v1366 = vpop.f32.mrf.mxu0
      %v1367 = vadd.f32 %v1228, %v1366
      %v1368 = vpop.f32.mrf.mxu0
      %1369 = vmatprep.mubr.f32.mxu0 0.0
      %1370 = vmatmul.mubr.f32.gmra.mxu0 %v1158
      %v1371 = vpop.f32.mrf.mxu0
      %v1372 = vadd.f32 %v1228, %v1371
      %v1373 = vpop.f32.mrf.mxu0
      %1374 = vmatprep.mubr.f32.mxu0 0.0
      %1375 = vmatmul.mubr.f32.gmra.mxu0 %v1159
      %v1376 = vpop.f32.mrf.mxu0
      %v1377 = vadd.f32 %v1228, %v1376
      %v1378 = vpop.f32.mrf.mxu0
      %1379 = vmatprep.mubr.f32.mxu0 0.0
      %1380 = vmatmul.mubr.f32.gmra.mxu0 %v1160
      %v1381 = vpop.f32.mrf.mxu0
      %v1382 = vadd.f32 %v1228, %v1381
      %v1383 = vpop.f32.mrf.mxu0
      %1384 = vmatprep.mubr.f32.mxu0 0.0
      %1385 = vmatmul.mubr.f32.gmra.mxu0 %v1161
      %v1386 = vpop.f32.mrf.mxu0
      %v1387 = vadd.f32 %v1228, %v1386
      %v1388 = vpop.f32.mrf.mxu0
      %1389 = vmatprep.mubr.f32.mxu0 0.0
      %1390 = vmatmul.mubr.f32.gmra.mxu0 %v1162
      %v1391 = vpop.f32.mrf.mxu0
      %v1392 = vadd.f32 %v1228, %v1391
      %v1393 = vpop.f32.mrf.mxu0
      %1394 = vmatprep.mubr.f32.mxu0 0.0
      %1395 = vmatmul.mubr.f32.gmra.mxu0 %v1163
      %v1396 = vpop.f32.mrf.mxu0
      %v1397 = vadd.f32 %v1228, %v1396
      %v1398 = vpop.f32.mrf.mxu0
      %1399 = vmatprep.mubr.f32.mxu0 0.0
      %1400 = vmatmul.mubr.f32.gmra.mxu0 %v1164
      %v1401 = vpop.f32.mrf.mxu0
      %v1402 = vadd.f32 %v1228, %v1401
      %v1403 = vpop.f32.mrf.mxu0
      %1404 = vmatprep.mubr.f32.mxu0 0.0
      %1405 = vmatmul.mubr.f32.gmra.mxu0 %v1165
      %v1406 = vpop.f32.mrf.mxu0
      %v1407 = vadd.f32 %v1228, %v1406
      %v1408 = vpop.f32.mrf.mxu0
      %1409 = vmatprep.mubr.f32.mxu0 0.0
      %1410 = vmatmul.mubr.f32.gmra.mxu0 %v1166
      %v1411 = vpop.f32.mrf.mxu0
      %v1412 = vadd.f32 %v1228, %v1411
      %v1413 = vpop.f32.mrf.mxu0
      %1414 = vmatprep.mubr.f32.mxu0 0.0
      %1415 = vmatmul.mubr.f32.gmra.mxu0 %v1167
      %v1416 = vpop.f32.mrf.mxu0
      %v1417 = vadd.f32 %v1228, %v1416
      %v1418 = vpop.f32.mrf.mxu0
      %1419 = vmatprep.mubr.f32.mxu0 0.0
      %1420 = vmatmul.mubr.f32.gmra.mxu0 %v1168
      %v1421 = vpop.f32.mrf.mxu0
      %v1422 = vadd.f32 %v1228, %v1421
      %v1423 = vpop.f32.mrf.mxu0
      %1424 = vmatprep.mubr.f32.mxu0 0.0
      %1425 = vmatmul.mubr.f32.gmra.mxu0 %v1169
      %v1426 = vpop.f32.mrf.mxu0
      %v1427 = vadd.f32 %v1228, %v1426
      %v1428 = vpop.f32.mrf.mxu0
      %1429 = vmatprep.mubr.f32.mxu0 0.0
      %1430 = vmatmul.mubr.f32.gmra.mxu0 %v1170
      %v1431 = vpop.f32.mrf.mxu0
      %v1432 = vadd.f32 %v1228, %v1431
      %v1433 = vpop.f32.mrf.mxu0
      %1434 = vmatprep.mubr.f32.mxu0 0.0
      %1435 = vmatmul.mubr.f32.gmra.mxu0 %v1171
      %v1436 = vpop.f32.mrf.mxu0
      %v1437 = vadd.f32 %v1228, %v1436
      %v1438 = vpop.f32.mrf.mxu0
      %1439 = vmatprep.mubr.f32.mxu0 0.0
      %1440 = vmatmul.mubr.f32.gmra.mxu0 %v1172
      %v1441 = vpop.f32.mrf.mxu0
      %v1442 = vadd.f32 %v1228, %v1441
      %v1443 = vpop.f32.mrf.mxu0
      %1444 = vmatprep.mubr.f32.mxu0 0.0
      %1445 = vmatmul.mubr.f32.gmra.mxu0 %v1173
      %v1446 = vpop.f32.mrf.mxu0
      %v1447 = vadd.f32 %v1228, %v1446
      %v1448 = vpop.f32.mrf.mxu0
      %1449 = vmatprep.mubr.f32.mxu0 0.0
      %1450 = vmatmul.mubr.f32.gmra.mxu0 %v1174
      %v1451 = vpop.f32.mrf.mxu0
      %v1452 = vadd.f32 %v1228, %v1451
      %v1453 = vpop.f32.mrf.mxu0
      %1454 = vmatprep.mubr.f32.mxu0 0.0
      %1455 = vmatmul.mubr.f32.gmra.mxu0 %v1175
      %v1456 = vpop.f32.mrf.mxu0
      %v1457 = vadd.f32 %v1228, %v1456
      %v1458 = vpop.f32.mrf.mxu0
      %1459 = vmatprep.mubr.f32.mxu0 0.0
      %1460 = vmatmul.mubr.f32.gmra.mxu0 %v1176
      %v1461 = vpop.f32.mrf.mxu0
      %v1462 = vadd.f32 %v1228, %v1461
      %v1463 = vpop.f32.mrf.mxu0
      %1464 = vmatprep.mubr.f32.mxu0 0.0
      %1465 = vmatmul.mubr.f32.gmra.mxu0 %v1177
      %v1466 = vpop.f32.mrf.mxu0
      %v1467 = vadd.f32 %v1228, %v1466
      %v1468 = vpop.f32.mrf.mxu0
      %1469 = vmatprep.mubr.f32.mxu0 0.0
      %1470 = vmatmul.mubr.f32.gmra.mxu0 %v1178
      %v1471 = vpop.f32.mrf.mxu0
      %v1472 = vadd.f32 %v1228, %v1471
      %v1473 = vpop.f32.mrf.mxu0
      %1474 = vmatprep.mubr.f32.mxu0 0.0
      %1475 = vmatmul.mubr.f32.gmra.mxu0 %v1179
      %v1476 = vpop.f32.mrf.mxu0
      %v1477 = vadd.f32 %v1228, %v1476
      %v1478 = vpop.f32.mrf.mxu0
      %1479 = vmatprep.mubr.f32.mxu0 0.0
      %1480 = vmatmul.mubr.f32.gmra.mxu0 %v1180
      %v1481 = vpop.f32.mrf.mxu0
      %v1482 = vadd.f32 %v1228, %v1481
      %v1483 = vpop.f32.mrf.mxu0
      %1484 = vmatprep.mubr.f32.mxu0 0.0
      %1485 = vmatmul.mubr.f32.gmra.mxu0 %v1181
      %v1486 = vpop.f32.mrf.mxu0
      %v1487 = vadd.f32 %v1228, %v1486
      %v1488 = vpop.f32.mrf.mxu0
      %1489 = vmatprep.mubr.f32.mxu0 0.0
      %1490 = vmatmul.mubr.f32.gmra.mxu0 %v1182
      %v1491 = vpop.f32.mrf.mxu0
      %v1492 = vadd.f32 %v1228, %v1491
      %v1493 = vpop.f32.mrf.mxu0
      %1494 = vmatprep.mubr.f32.mxu0 0.0
      %1495 = vmatmul.mubr.f32.gmra.mxu0 %v1183
      %v1496 = vpop.f32.mrf.mxu0
      %v1497 = vadd.f32 %v1228, %v1496
      %v1498 = vpop.f32.mrf.mxu0
      %1499 = vmatprep.mubr.f32.mxu0 0.0
      %1500 = vmatmul.mubr.f32.gmra.mxu0 %v1184
      %v1501 = vpop.f32.mrf.mxu0
      %v1502 = vadd.f32 %v1228, %v1501
      %v1503 = vpop.f32.mrf.mxu0
      %1504 = vmatprep.mubr.f32.mxu0 0.0
      %1505 = vmatmul.mubr.f32.gmra.mxu0 %v1185
      %v1506 = vpop.f32.mrf.mxu0
      %v1507 = vadd.f32 %v1228, %v1506
      %v1508 = vpop.f32.mrf.mxu0
      %1509 = vmatprep.mubr.f32.mxu0 0.0
      %1510 = vmatmul.mubr.f32.gmra.mxu0 %v1186
      %v1511 = vpop.f32.mrf.mxu0
      %v1512 = vadd.f32 %v1228, %v1511
      %v1513 = vpop.f32.mrf.mxu0
      %1514 = vmatprep.mubr.f32.mxu0 0.0
      %1515 = vmatmul.mubr.f32.gmra.mxu0 %v1187
      %v1516 = vpop.f32.mrf.mxu0
      %v1517 = vadd.f32 %v1228, %v1516
      %v1518 = vpop.f32.mrf.mxu0
      %1519 = vmatprep.mubr.f32.mxu0 0.0
      %1520 = vmatmul.mubr.f32.gmra.mxu0 %v1188
      %v1521 = vpop.f32.mrf.mxu0
      %v1522 = vadd.f32 %v1228, %v1521
      %v1523 = vpop.f32.mrf.mxu0
      %1524 = vmatprep.mubr.f32.mxu0 0.0
      %1525 = vmatmul.mubr.f32.gmra.mxu0 %v1189
      %v1526 = vpop.f32.mrf.mxu0
      %v1527 = vadd.f32 %v1228, %v1526
      %v1528 = vpop.f32.mrf.mxu0
      %1529 = vmatprep.mubr.f32.mxu0 0.0
      %1530 = vmatmul.mubr.f32.gmra.mxu0 %v1190
      %v1531 = vpop.f32.mrf.mxu0
      %v1532 = vadd.f32 %v1228, %v1531
      %v1533 = vpop.f32.mrf.mxu0
      %1534 = vmatprep.mubr.f32.mxu0 0.0
      %1535 = vmatmul.mubr.f32.gmra.mxu0 %v1191
      %v1536 = vpop.f32.mrf.mxu0
      %v1537 = vadd.f32 %v1228, %v1536
      %v1538 = vpop.f32.mrf.mxu0
      %1539 = vmatprep.mubr.f32.mxu0 0.0
      %1540 = vmatmul.mubr.f32.gmra.mxu0 %v1192
      %v1541 = vpop.f32.mrf.mxu0
      %v1542 = vadd.f32 %v1228, %v1541
      %v1543 = vpop.f32.mrf.mxu0
      %1544 = vmatprep.mubr.f32.mxu0 0.0
      %1545 = vmatmul.mubr.f32.gmra.mxu0 %v1193
      %v1546 = vpop.f32.mrf.mxu0
      %v1547 = vadd.f32 %v1228, %v1546
      %v1548 = vpop.f32.mrf.mxu0
      %1549 = vmatprep.mubr.f32.mxu0 0.0
      %1550 = vmatmul.mubr.f32.gmra.mxu0 %v1194
      %v1551 = vpop.f32.mrf.mxu0
      %v1552 = vadd.f32 %v1228, %v1551
      %v1553 = vpop.f32.mrf.mxu0
      %1554 = vmatprep.mubr.f32.mxu0 0.0
      %1555 = vmatmul.mubr.f32.gmra.mxu0 %v1195
      %v1556 = vpop.f32.mrf.mxu0
      %v1557 = vadd.f32 %v1228, %v1556
      %v1558 = vpop.f32.mrf.mxu0
      %1559 = vmatprep.mubr.f32.mxu0 0.0
      %1560 = vmatmul.mubr.f32.gmra.mxu0 %v1196
      %v1561 = vpop.f32.mrf.mxu0
      %v1562 = vadd.f32 %v1228, %v1561
      %v1563 = vpop.f32.mrf.mxu0
      %1564 = vmatprep.mubr.f32.mxu0 0.0
      %1565 = vmatmul.mubr.f32.gmra.mxu0 %v1197
      %v1566 = vpop.f32.mrf.mxu0
      %v1567 = vadd.f32 %v1228, %v1566
      %v1568 = vpop.f32.mrf.mxu0
      %1569 = vmatprep.mubr.f32.mxu0 0.0
      %1570 = vmatmul.mubr.f32.gmra.mxu0 %v1198
      %v1571 = vpop.f32.mrf.mxu0
      %v1572 = vadd.f32 %v1228, %v1571
      %v1573 = vpop.f32.mrf.mxu0
      %1574 = vmatprep.mubr.f32.mxu0 0.0
      %1575 = vmatmul.mubr.f32.gmra.mxu0 %v1199
      %v1576 = vpop.f32.mrf.mxu0
      %v1577 = vadd.f32 %v1228, %v1576
      %v1578 = vpop.f32.mrf.mxu0
      %1579 = vmatprep.mubr.f32.mxu0 0.0
      %1580 = vmatmul.mubr.f32.gmra.mxu0 %v1200
      %v1581 = vpop.f32.mrf.mxu0
      %v1582 = vadd.f32 %v1228, %v1581
      %v1583 = vpop.f32.mrf.mxu0
      %1584 = vmatprep.mubr.f32.mxu0 0.0
      %1585 = vmatmul.mubr.f32.gmra.mxu0 %v1201
      %v1586 = vpop.f32.mrf.mxu0
      %v1587 = vadd.f32 %v1228, %v1586
      %v1588 = vpop.f32.mrf.mxu0
      %1589 = vmatprep.mubr.f32.mxu0 0.0
      %1590 = vmatmul.mubr.f32.gmra.mxu0 %v1202
      %v1591 = vpop.f32.mrf.mxu0
      %v1592 = vadd.f32 %v1228, %v1591
      %v1593 = vpop.f32.mrf.mxu0
      %1594 = vmatprep.mubr.f32.mxu0 0.0
      %1595 = vmatmul.mubr.f32.gmra.mxu0 %v1203
      %v1596 = vpop.f32.mrf.mxu0
      %v1597 = vadd.f32 %v1228, %v1596
      %v1598 = vpop.f32.mrf.mxu0
      %1599 = vmatprep.mubr.f32.mxu0 0.0
      %1600 = vmatmul.mubr.f32.gmra.mxu0 %v1204
      %v1601 = vpop.f32.mrf.mxu0
      %v1602 = vadd.f32 %v1228, %v1601
      %v1603 = vpop.f32.mrf.mxu0
      %1604 = vmatprep.mubr.f32.mxu0 0.0
      %1605 = vmatmul.mubr.f32.gmra.mxu0 %v1205
      %v1606 = vpop.f32.mrf.mxu0
      %v1607 = vadd.f32 %v1228, %v1606
      %v1608 = vpop.f32.mrf.mxu0
      %1609 = vmatprep.mubr.f32.mxu0 0.0
      %1610 = vmatmul.mubr.f32.gmra.mxu0 %v1206
      %v1611 = vpop.f32.mrf.mxu0
      %v1612 = vadd.f32 %v1228, %v1611
      %v1613 = vpop.f32.mrf.mxu0
      %1614 = vdwg.mxu0
      %v1615 = vmax.f32 %v1297, 0.0
      %v1616 = vmax.f32 %v1302, 0.0
      %v1617 = vmax.f32 %v1307, 0.0
      %v1618 = vmax.f32 %v1312, 0.0
      %v1619 = vmax.f32 %v1317, 0.0
      %v1620 = vmax.f32 %v1322, 0.0
      %v1621 = vmax.f32 %v1327, 0.0
      %v1622 = vmax.f32 %v1332, 0.0
      %v1623 = vmax.f32 %v1337, 0.0
      %v1624 = vmax.f32 %v1342, 0.0
      %v1625 = vmax.f32 %v1347, 0.0
      %v1626 = vmax.f32 %v1352, 0.0
      %v1627 = vmax.f32 %v1357, 0.0
      %v1628 = vmax.f32 %v1362, 0.0
      %v1629 = vmax.f32 %v1367, 0.0
      %v1630 = vmax.f32 %v1372, 0.0
      %v1631 = vmax.f32 %v1377, 0.0
      %v1632 = vmax.f32 %v1382, 0.0
      %v1633 = vmax.f32 %v1387, 0.0
      %v1634 = vmax.f32 %v1392, 0.0
      %v1635 = vmax.f32 %v1397, 0.0
      %v1636 = vmax.f32 %v1402, 0.0
      %v1637 = vmax.f32 %v1407, 0.0
      %v1638 = vmax.f32 %v1412, 0.0
      %v1639 = vmax.f32 %v1417, 0.0
      %v1640 = vmax.f32 %v1422, 0.0
      %v1641 = vmax.f32 %v1427, 0.0
      %v1642 = vmax.f32 %v1432, 0.0
      %v1643 = vmax.f32 %v1437, 0.0
      %v1644 = vmax.f32 %v1442, 0.0
      %v1645 = vmax.f32 %v1447, 0.0
      %v1646 = vmax.f32 %v1452, 0.0
      %v1647 = vmax.f32 %v1457, 0.0
      %v1648 = vmax.f32 %v1462, 0.0
      %v1649 = vmax.f32 %v1467, 0.0
      %v1650 = vmax.f32 %v1472, 0.0
      %v1651 = vmax.f32 %v1477, 0.0
      %v1652 = vmax.f32 %v1482, 0.0
      %v1653 = vmax.f32 %v1487, 0.0
      %v1654 = vmax.f32 %v1492, 0.0
      %v1655 = vmax.f32 %v1497, 0.0
      %v1656 = vmax.f32 %v1502, 0.0
      %v1657 = vmax.f32 %v1507, 0.0
      %v1658 = vmax.f32 %v1512, 0.0
      %v1659 = vmax.f32 %v1517, 0.0
      %v1660 = vmax.f32 %v1522, 0.0
      %v1661 = vmax.f32 %v1527, 0.0
      %v1662 = vmax.f32 %v1532, 0.0
      %v1663 = vmax.f32 %v1537, 0.0
      %v1664 = vmax.f32 %v1542, 0.0
      %v1665 = vmax.f32 %v1547, 0.0
      %v1666 = vmax.f32 %v1552, 0.0
      %v1667 = vmax.f32 %v1557, 0.0
      %v1668 = vmax.f32 %v1562, 0.0
      %v1669 = vmax.f32 %v1567, 0.0
      %v1670 = vmax.f32 %v1572, 0.0
      %v1671 = vmax.f32 %v1577, 0.0
      %v1672 = vmax.f32 %v1582, 0.0
      %v1673 = vmax.f32 %v1587, 0.0
      %v1674 = vmax.f32 %v1592, 0.0
      %v1675 = vmax.f32 %v1597, 0.0
      %v1676 = vmax.f32 %v1602, 0.0
      %v1677 = vmax.f32 %v1607, 0.0
      %v1678 = vmax.f32 %v1612, 0.0
      %v1679 = vld [vmem:[%s5] sm:$0xff]
      %v1680 = vld [vmem:[%s5 + $0x8] sm:$0xff]
      %v1681 = vld [vmem:[%s5 + $0x10] sm:$0xff]
      %v1682 = vld [vmem:[%s5 + $0x18] sm:$0xff]
      %v1683 = vld [vmem:[%s5 + $0x20] sm:$0xff]
      %v1684 = vld [vmem:[%s5 + $0x28] sm:$0xff]
      %v1685 = vld [vmem:[%s5 + $0x30] sm:$0xff]
      %v1686 = vld [vmem:[%s5 + $0x38] sm:$0xff]
      %v1687 = vld [vmem:[%s5 + $0x40] sm:$0xff]
      %v1688 = vld [vmem:[%s5 + $0x48] sm:$0xff]
      %v1689 = vld [vmem:[%s5 + $0x50] sm:$0xff]
      %v1690 = vld [vmem:[%s5 + $0x58] sm:$0xff]
      %v1691 = vld [vmem:[%s5 + $0x60] sm:$0xff]
      %v1692 = vld [vmem:[%s5 + $0x68] sm:$0xff]
      %v1693 = vld [vmem:[%s5 + $0x70] sm:$0xff]
      %v1694 = vld [vmem:[%s5 + $0x78] sm:$0xff]
      %v1695 = vld [vmem:[%s6] sm:$0x1]
      %v1697 = vlaneseq
      %v1698 = vshrl.u32 %v1697, 7
      %v1699 = vsub.s32 0, %v1698
      %v1700 = vrot.slane %v1695, %v1699
      %1702 = vmatprep.subr.mxu0 0.0
      %1703 = vmatpush1.msra.mxu0 %v1694
      %1704 = vmatprep.subr.mxu0 0.0
      %1705 = vmatpush1.msra.mxu0 %v1693
      %1706 = vmatprep.subr.mxu0 0.0
      %1707 = vmatpush1.msra.mxu0 %v1692
      %1708 = vmatprep.subr.mxu0 0.0
      %1709 = vmatpush1.msra.mxu0 %v1691
      %1710 = vmatprep.subr.mxu0 0.0
      %1711 = vmatpush1.msra.mxu0 %v1690
      %1712 = vmatprep.subr.mxu0 0.0
      %1713 = vmatpush1.msra.mxu0 %v1689
      %1714 = vmatprep.subr.mxu0 0.0
      %1715 = vmatpush1.msra.mxu0 %v1688
      %1716 = vmatprep.subr.mxu0 0.0
      %1717 = vmatpush1.msra.mxu0 %v1687
      %1718 = vmatprep.subr.mxu0 0.0
      %1719 = vmatpush1.msra.mxu0 %v1686
      %1720 = vmatprep.subr.mxu0 0.0
      %1721 = vmatpush1.msra.mxu0 %v1685
      %1722 = vmatprep.subr.mxu0 0.0
      %1723 = vmatpush1.msra.mxu0 %v1684
      %1724 = vmatprep.subr.mxu0 0.0
      %1725 = vmatpush1.msra.mxu0 %v1683
      %1726 = vmatprep.subr.mxu0 0.0
      %1727 = vmatpush1.msra.mxu0 %v1682
      %1728 = vmatprep.subr.mxu0 0.0
      %1729 = vmatpush1.msra.mxu0 %v1681
      %1730 = vmatprep.subr.mxu0 0.0
      %1731 = vmatpush1.msra.mxu0 %v1680
      %1732 = vmatprep.subr.mxu0 0.0
      %1733 = vmatpush1.msra.mxu0 %v1679
      %1734 = vmatprep.subr.mxu0 0.0
      %1735 = vmatpush2.msra.mxu0 0.0
      %1736 = vmatprep.subr.mxu0 0.0
      %1737 = vmatpush2.msra.mxu0 0.0
      %1738 = vmatprep.subr.mxu0 0.0
      %1739 = vmatpush2.msra.mxu0 0.0
      %1740 = vmatprep.subr.mxu0 0.0
      %1741 = vmatpush2.msra.mxu0 0.0
      %1742 = vmatprep.subr.mxu0 0.0
      %1743 = vmatpush2.msra.mxu0 0.0
      %1744 = vmatprep.subr.mxu0 0.0
      %1745 = vmatpush2.msra.mxu0 0.0
      %1746 = vmatprep.subr.mxu0 0.0
      %1747 = vmatpush2.msra.mxu0 0.0
      %1748 = vmatprep.subr.mxu0 0.0
      %1749 = vmatpush2.msra.mxu0 0.0
      %1750 = vmatprep.subr.mxu0 0.0
      %1751 = vmatpush2.msra.mxu0 0.0
      %1752 = vmatprep.subr.mxu0 0.0
      %1753 = vmatpush2.msra.mxu0 0.0
      %1754 = vmatprep.subr.mxu0 0.0
      %1755 = vmatpush2.msra.mxu0 0.0
      %1756 = vmatprep.subr.mxu0 0.0
      %1757 = vmatpush2.msra.mxu0 0.0
      %1758 = vmatprep.subr.mxu0 0.0
      %1759 = vmatpush2.msra.mxu0 0.0
      %1760 = vmatprep.subr.mxu0 0.0
      %1761 = vmatpush2.msra.mxu0 0.0
      %1762 = vmatprep.subr.mxu0 0.0
      %1763 = vmatpush2.msra.mxu0 0.0
      %1764 = vmatprep.subr.mxu0 0.0
      %1765 = vmatpush2.msra.mxu0 0.0
      %1766 = vmatprep.mubr.f32.mxu0 0.0
      %1767 = vmatmul.mubr.f32.gmra.mxu0 %v1615
      %v1768 = vpop.f32.mrf.mxu0
      %v1769 = vadd.f32 %v1700, %v1768
      %v1770 = vpop.f32.mrf.mxu0
      %1771 = vmatprep.mubr.f32.mxu0 0.0
      %1772 = vmatmul.mubr.f32.gmra.mxu0 %v1616
      %v1773 = vpop.f32.mrf.mxu0
      %v1774 = vadd.f32 %v1700, %v1773
      %v1775 = vpop.f32.mrf.mxu0
      %1776 = vmatprep.mubr.f32.mxu0 0.0
      %1777 = vmatmul.mubr.f32.gmra.mxu0 %v1617
      %v1778 = vpop.f32.mrf.mxu0
      %v1779 = vadd.f32 %v1700, %v1778
      %v1780 = vpop.f32.mrf.mxu0
      %1781 = vmatprep.mubr.f32.mxu0 0.0
      %1782 = vmatmul.mubr.f32.gmra.mxu0 %v1618
      %v1783 = vpop.f32.mrf.mxu0
      %v1784 = vadd.f32 %v1700, %v1783
      %v1785 = vpop.f32.mrf.mxu0
      %1786 = vmatprep.mubr.f32.mxu0 0.0
      %1787 = vmatmul.mubr.f32.gmra.mxu0 %v1619
      %v1788 = vpop.f32.mrf.mxu0
      %v1789 = vadd.f32 %v1700, %v1788
      %v1790 = vpop.f32.mrf.mxu0
      %1791 = vmatprep.mubr.f32.mxu0 0.0
      %1792 = vmatmul.mubr.f32.gmra.mxu0 %v1620
      %v1793 = vpop.f32.mrf.mxu0
      %v1794 = vadd.f32 %v1700, %v1793
      %v1795 = vpop.f32.mrf.mxu0
      %1796 = vmatprep.mubr.f32.mxu0 0.0
      %1797 = vmatmul.mubr.f32.gmra.mxu0 %v1621
      %v1798 = vpop.f32.mrf.mxu0
      %v1799 = vadd.f32 %v1700, %v1798
      %v1800 = vpop.f32.mrf.mxu0
      %1801 = vmatprep.mubr.f32.mxu0 0.0
      %1802 = vmatmul.mubr.f32.gmra.mxu0 %v1622
      %v1803 = vpop.f32.mrf.mxu0
      %v1804 = vadd.f32 %v1700, %v1803
      %v1805 = vpop.f32.mrf.mxu0
      %1806 = vmatprep.mubr.f32.mxu0 0.0
      %1807 = vmatmul.mubr.f32.gmra.mxu0 %v1623
      %v1808 = vpop.f32.mrf.mxu0
      %v1809 = vadd.f32 %v1700, %v1808
      %v1810 = vpop.f32.mrf.mxu0
      %1811 = vmatprep.mubr.f32.mxu0 0.0
      %1812 = vmatmul.mubr.f32.gmra.mxu0 %v1624
      %v1813 = vpop.f32.mrf.mxu0
      %v1814 = vadd.f32 %v1700, %v1813
      %v1815 = vpop.f32.mrf.mxu0
      %1816 = vmatprep.mubr.f32.mxu0 0.0
      %1817 = vmatmul.mubr.f32.gmra.mxu0 %v1625
      %v1818 = vpop.f32.mrf.mxu0
      %v1819 = vadd.f32 %v1700, %v1818
      %v1820 = vpop.f32.mrf.mxu0
      %1821 = vmatprep.mubr.f32.mxu0 0.0
      %1822 = vmatmul.mubr.f32.gmra.mxu0 %v1626
      %v1823 = vpop.f32.mrf.mxu0
      %v1824 = vadd.f32 %v1700, %v1823
      %v1825 = vpop.f32.mrf.mxu0
      %1826 = vmatprep.mubr.f32.mxu0 0.0
      %1827 = vmatmul.mubr.f32.gmra.mxu0 %v1627
      %v1828 = vpop.f32.mrf.mxu0
      %v1829 = vadd.f32 %v1700, %v1828
      %v1830 = vpop.f32.mrf.mxu0
      %1831 = vmatprep.mubr.f32.mxu0 0.0
      %1832 = vmatmul.mubr.f32.gmra.mxu0 %v1628
      %v1833 = vpop.f32.mrf.mxu0
      %v1834 = vadd.f32 %v1700, %v1833
      %v1835 = vpop.f32.mrf.mxu0
      %1836 = vmatprep.mubr.f32.mxu0 0.0
      %1837 = vmatmul.mubr.f32.gmra.mxu0 %v1629
      %v1838 = vpop.f32.mrf.mxu0
      %v1839 = vadd.f32 %v1700, %v1838
      %v1840 = vpop.f32.mrf.mxu0
      %1841 = vmatprep.mubr.f32.mxu0 0.0
      %1842 = vmatmul.mubr.f32.gmra.mxu0 %v1630
      %v1843 = vpop.f32.mrf.mxu0
      %v1844 = vadd.f32 %v1700, %v1843
      %v1845 = vpop.f32.mrf.mxu0
      %1846 = vmatprep.mubr.f32.mxu0 0.0
      %1847 = vmatmul.mubr.f32.gmra.mxu0 %v1631
      %v1848 = vpop.f32.mrf.mxu0
      %v1849 = vadd.f32 %v1700, %v1848
      %v1850 = vpop.f32.mrf.mxu0
      %1851 = vmatprep.mubr.f32.mxu0 0.0
      %1852 = vmatmul.mubr.f32.gmra.mxu0 %v1632
      %v1853 = vpop.f32.mrf.mxu0
      %v1854 = vadd.f32 %v1700, %v1853
      %v1855 = vpop.f32.mrf.mxu0
      %1856 = vmatprep.mubr.f32.mxu0 0.0
      %1857 = vmatmul.mubr.f32.gmra.mxu0 %v1633
      %v1858 = vpop.f32.mrf.mxu0
      %v1859 = vadd.f32 %v1700, %v1858
      %v1860 = vpop.f32.mrf.mxu0
      %1861 = vmatprep.mubr.f32.mxu0 0.0
      %1862 = vmatmul.mubr.f32.gmra.mxu0 %v1634
      %v1863 = vpop.f32.mrf.mxu0
      %v1864 = vadd.f32 %v1700, %v1863
      %v1865 = vpop.f32.mrf.mxu0
      %1866 = vmatprep.mubr.f32.mxu0 0.0
      %1867 = vmatmul.mubr.f32.gmra.mxu0 %v1635
      %v1868 = vpop.f32.mrf.mxu0
      %v1869 = vadd.f32 %v1700, %v1868
      %v1870 = vpop.f32.mrf.mxu0
      %1871 = vmatprep.mubr.f32.mxu0 0.0
      %1872 = vmatmul.mubr.f32.gmra.mxu0 %v1636
      %v1873 = vpop.f32.mrf.mxu0
      %v1874 = vadd.f32 %v1700, %v1873
      %v1875 = vpop.f32.mrf.mxu0
      %1876 = vmatprep.mubr.f32.mxu0 0.0
      %1877 = vmatmul.mubr.f32.gmra.mxu0 %v1637
      %v1878 = vpop.f32.mrf.mxu0
      %v1879 = vadd.f32 %v1700, %v1878
      %v1880 = vpop.f32.mrf.mxu0
      %1881 = vmatprep.mubr.f32.mxu0 0.0
      %1882 = vmatmul.mubr.f32.gmra.mxu0 %v1638
      %v1883 = vpop.f32.mrf.mxu0
      %v1884 = vadd.f32 %v1700, %v1883
      %v1885 = vpop.f32.mrf.mxu0
      %1886 = vmatprep.mubr.f32.mxu0 0.0
      %1887 = vmatmul.mubr.f32.gmra.mxu0 %v1639
      %v1888 = vpop.f32.mrf.mxu0
      %v1889 = vadd.f32 %v1700, %v1888
      %v1890 = vpop.f32.mrf.mxu0
      %1891 = vmatprep.mubr.f32.mxu0 0.0
      %1892 = vmatmul.mubr.f32.gmra.mxu0 %v1640
      %v1893 = vpop.f32.mrf.mxu0
      %v1894 = vadd.f32 %v1700, %v1893
      %v1895 = vpop.f32.mrf.mxu0
      %1896 = vmatprep.mubr.f32.mxu0 0.0
      %1897 = vmatmul.mubr.f32.gmra.mxu0 %v1641
      %v1898 = vpop.f32.mrf.mxu0
      %v1899 = vadd.f32 %v1700, %v1898
      %v1900 = vpop.f32.mrf.mxu0
      %1901 = vmatprep.mubr.f32.mxu0 0.0
      %1902 = vmatmul.mubr.f32.gmra.mxu0 %v1642
      %v1903 = vpop.f32.mrf.mxu0
      %v1904 = vadd.f32 %v1700, %v1903
      %v1905 = vpop.f32.mrf.mxu0
      %1906 = vmatprep.mubr.f32.mxu0 0.0
      %1907 = vmatmul.mubr.f32.gmra.mxu0 %v1643
      %v1908 = vpop.f32.mrf.mxu0
      %v1909 = vadd.f32 %v1700, %v1908
      %v1910 = vpop.f32.mrf.mxu0
      %1911 = vmatprep.mubr.f32.mxu0 0.0
      %1912 = vmatmul.mubr.f32.gmra.mxu0 %v1644
      %v1913 = vpop.f32.mrf.mxu0
      %v1914 = vadd.f32 %v1700, %v1913
      %v1915 = vpop.f32.mrf.mxu0
      %1916 = vmatprep.mubr.f32.mxu0 0.0
      %1917 = vmatmul.mubr.f32.gmra.mxu0 %v1645
      %v1918 = vpop.f32.mrf.mxu0
      %v1919 = vadd.f32 %v1700, %v1918
      %v1920 = vpop.f32.mrf.mxu0
      %1921 = vmatprep.mubr.f32.mxu0 0.0
      %1922 = vmatmul.mubr.f32.gmra.mxu0 %v1646
      %v1923 = vpop.f32.mrf.mxu0
      %v1924 = vadd.f32 %v1700, %v1923
      %v1925 = vpop.f32.mrf.mxu0
      %1926 = vmatprep.mubr.f32.mxu0 0.0
      %1927 = vmatmul.mubr.f32.gmra.mxu0 %v1647
      %v1928 = vpop.f32.mrf.mxu0
      %v1929 = vadd.f32 %v1700, %v1928
      %v1930 = vpop.f32.mrf.mxu0
      %1931 = vmatprep.mubr.f32.mxu0 0.0
      %1932 = vmatmul.mubr.f32.gmra.mxu0 %v1648
      %v1933 = vpop.f32.mrf.mxu0
      %v1934 = vadd.f32 %v1700, %v1933
      %v1935 = vpop.f32.mrf.mxu0
      %1936 = vmatprep.mubr.f32.mxu0 0.0
      %1937 = vmatmul.mubr.f32.gmra.mxu0 %v1649
      %v1938 = vpop.f32.mrf.mxu0
      %v1939 = vadd.f32 %v1700, %v1938
      %v1940 = vpop.f32.mrf.mxu0
      %1941 = vmatprep.mubr.f32.mxu0 0.0
      %1942 = vmatmul.mubr.f32.gmra.mxu0 %v1650
      %v1943 = vpop.f32.mrf.mxu0
      %v1944 = vadd.f32 %v1700, %v1943
      %v1945 = vpop.f32.mrf.mxu0
      %1946 = vmatprep.mubr.f32.mxu0 0.0
      %1947 = vmatmul.mubr.f32.gmra.mxu0 %v1651
      %v1948 = vpop.f32.mrf.mxu0
      %v1949 = vadd.f32 %v1700, %v1948
      %v1950 = vpop.f32.mrf.mxu0
      %1951 = vmatprep.mubr.f32.mxu0 0.0
      %1952 = vmatmul.mubr.f32.gmra.mxu0 %v1652
      %v1953 = vpop.f32.mrf.mxu0
      %v1954 = vadd.f32 %v1700, %v1953
      %v1955 = vpop.f32.mrf.mxu0
      %1956 = vmatprep.mubr.f32.mxu0 0.0
      %1957 = vmatmul.mubr.f32.gmra.mxu0 %v1653
      %v1958 = vpop.f32.mrf.mxu0
      %v1959 = vadd.f32 %v1700, %v1958
      %v1960 = vpop.f32.mrf.mxu0
      %1961 = vmatprep.mubr.f32.mxu0 0.0
      %1962 = vmatmul.mubr.f32.gmra.mxu0 %v1654
      %v1963 = vpop.f32.mrf.mxu0
      %v1964 = vadd.f32 %v1700, %v1963
      %v1965 = vpop.f32.mrf.mxu0
      %1966 = vmatprep.mubr.f32.mxu0 0.0
      %1967 = vmatmul.mubr.f32.gmra.mxu0 %v1655
      %v1968 = vpop.f32.mrf.mxu0
      %v1969 = vadd.f32 %v1700, %v1968
      %v1970 = vpop.f32.mrf.mxu0
      %1971 = vmatprep.mubr.f32.mxu0 0.0
      %1972 = vmatmul.mubr.f32.gmra.mxu0 %v1656
      %v1973 = vpop.f32.mrf.mxu0
      %v1974 = vadd.f32 %v1700, %v1973
      %v1975 = vpop.f32.mrf.mxu0
      %1976 = vmatprep.mubr.f32.mxu0 0.0
      %1977 = vmatmul.mubr.f32.gmra.mxu0 %v1657
      %v1978 = vpop.f32.mrf.mxu0
      %v1979 = vadd.f32 %v1700, %v1978
      %v1980 = vpop.f32.mrf.mxu0
      %1981 = vmatprep.mubr.f32.mxu0 0.0
      %1982 = vmatmul.mubr.f32.gmra.mxu0 %v1658
      %v1983 = vpop.f32.mrf.mxu0
      %v1984 = vadd.f32 %v1700, %v1983
      %v1985 = vpop.f32.mrf.mxu0
      %1986 = vmatprep.mubr.f32.mxu0 0.0
      %1987 = vmatmul.mubr.f32.gmra.mxu0 %v1659
      %v1988 = vpop.f32.mrf.mxu0
      %v1989 = vadd.f32 %v1700, %v1988
      %v1990 = vpop.f32.mrf.mxu0
      %1991 = vmatprep.mubr.f32.mxu0 0.0
      %1992 = vmatmul.mubr.f32.gmra.mxu0 %v1660
      %v1993 = vpop.f32.mrf.mxu0
      %v1994 = vadd.f32 %v1700, %v1993
      %v1995 = vpop.f32.mrf.mxu0
      %1996 = vmatprep.mubr.f32.mxu0 0.0
      %1997 = vmatmul.mubr.f32.gmra.mxu0 %v1661
      %v1998 = vpop.f32.mrf.mxu0
      %v1999 = vadd.f32 %v1700, %v1998
      %v2000 = vpop.f32.mrf.mxu0
      %2001 = vmatprep.mubr.f32.mxu0 0.0
      %2002 = vmatmul.mubr.f32.gmra.mxu0 %v1662
      %v2003 = vpop.f32.mrf.mxu0
      %v2004 = vadd.f32 %v1700, %v2003
      %v2005 = vpop.f32.mrf.mxu0
      %2006 = vmatprep.mubr.f32.mxu0 0.0
      %2007 = vmatmul.mubr.f32.gmra.mxu0 %v1663
      %v2008 = vpop.f32.mrf.mxu0
      %v2009 = vadd.f32 %v1700, %v2008
      %v2010 = vpop.f32.mrf.mxu0
      %2011 = vmatprep.mubr.f32.mxu0 0.0
      %2012 = vmatmul.mubr.f32.gmra.mxu0 %v1664
      %v2013 = vpop.f32.mrf.mxu0
      %v2014 = vadd.f32 %v1700, %v2013
      %v2015 = vpop.f32.mrf.mxu0
      %2016 = vmatprep.mubr.f32.mxu0 0.0
      %2017 = vmatmul.mubr.f32.gmra.mxu0 %v1665
      %v2018 = vpop.f32.mrf.mxu0
      %v2019 = vadd.f32 %v1700, %v2018
      %v2020 = vpop.f32.mrf.mxu0
      %2021 = vmatprep.mubr.f32.mxu0 0.0
      %2022 = vmatmul.mubr.f32.gmra.mxu0 %v1666
      %v2023 = vpop.f32.mrf.mxu0
      %v2024 = vadd.f32 %v1700, %v2023
      %v2025 = vpop.f32.mrf.mxu0
      %2026 = vmatprep.mubr.f32.mxu0 0.0
      %2027 = vmatmul.mubr.f32.gmra.mxu0 %v1667
      %v2028 = vpop.f32.mrf.mxu0
      %v2029 = vadd.f32 %v1700, %v2028
      %v2030 = vpop.f32.mrf.mxu0
      %2031 = vmatprep.mubr.f32.mxu0 0.0
      %2032 = vmatmul.mubr.f32.gmra.mxu0 %v1668
      %v2033 = vpop.f32.mrf.mxu0
      %v2034 = vadd.f32 %v1700, %v2033
      %v2035 = vpop.f32.mrf.mxu0
      %2036 = vmatprep.mubr.f32.mxu0 0.0
      %2037 = vmatmul.mubr.f32.gmra.mxu0 %v1669
      %v2038 = vpop.f32.mrf.mxu0
      %v2039 = vadd.f32 %v1700, %v2038
      %v2040 = vpop.f32.mrf.mxu0
      %2041 = vmatprep.mubr.f32.mxu0 0.0
      %2042 = vmatmul.mubr.f32.gmra.mxu0 %v1670
      %v2043 = vpop.f32.mrf.mxu0
      %v2044 = vadd.f32 %v1700, %v2043
      %v2045 = vpop.f32.mrf.mxu0
      %2046 = vmatprep.mubr.f32.mxu0 0.0
      %2047 = vmatmul.mubr.f32.gmra.mxu0 %v1671
      %v2048 = vpop.f32.mrf.mxu0
      %v2049 = vadd.f32 %v1700, %v2048
      %v2050 = vpop.f32.mrf.mxu0
      %2051 = vmatprep.mubr.f32.mxu0 0.0
      %2052 = vmatmul.mubr.f32.gmra.mxu0 %v1672
      %v2053 = vpop.f32.mrf.mxu0
      %v2054 = vadd.f32 %v1700, %v2053
      %v2055 = vpop.f32.mrf.mxu0
      %2056 = vmatprep.mubr.f32.mxu0 0.0
      %2057 = vmatmul.mubr.f32.gmra.mxu0 %v1673
      %v2058 = vpop.f32.mrf.mxu0
      %v2059 = vadd.f32 %v1700, %v2058
      %v2060 = vpop.f32.mrf.mxu0
      %2061 = vmatprep.mubr.f32.mxu0 0.0
      %2062 = vmatmul.mubr.f32.gmra.mxu0 %v1674
      %v2063 = vpop.f32.mrf.mxu0
      %v2064 = vadd.f32 %v1700, %v2063
      %v2065 = vpop.f32.mrf.mxu0
      %2066 = vmatprep.mubr.f32.mxu0 0.0
      %2067 = vmatmul.mubr.f32.gmra.mxu0 %v1675
      %v2068 = vpop.f32.mrf.mxu0
      %v2069 = vadd.f32 %v1700, %v2068
      %v2070 = vpop.f32.mrf.mxu0
      %2071 = vmatprep.mubr.f32.mxu0 0.0
      %2072 = vmatmul.mubr.f32.gmra.mxu0 %v1676
      %v2073 = vpop.f32.mrf.mxu0
      %v2074 = vadd.f32 %v1700, %v2073
      %v2075 = vpop.f32.mrf.mxu0
      %2076 = vmatprep.mubr.f32.mxu0 0.0
      %2077 = vmatmul.mubr.f32.gmra.mxu0 %v1677
      %v2078 = vpop.f32.mrf.mxu0
      %v2079 = vadd.f32 %v1700, %v2078
      %v2080 = vpop.f32.mrf.mxu0
      %2081 = vmatprep.mubr.f32.mxu0 0.0
      %2082 = vmatmul.mubr.f32.gmra.mxu0 %v1678
      %v2083 = vpop.f32.mrf.mxu0
      %v2084 = vadd.f32 %v1700, %v2083
      %v2085 = vpop.f32.mrf.mxu0
      %2086 = vdwg.mxu0
      %v2087 = vmax.f32 %v1769, 0.0
      %v2088 = vmax.f32 %v1774, 0.0
      %v2089 = vmax.f32 %v1779, 0.0
      %v2090 = vmax.f32 %v1784, 0.0
      %v2091 = vmax.f32 %v1789, 0.0
      %v2092 = vmax.f32 %v1794, 0.0
      %v2093 = vmax.f32 %v1799, 0.0
      %v2094 = vmax.f32 %v1804, 0.0
      %v2095 = vmax.f32 %v1809, 0.0
      %v2096 = vmax.f32 %v1814, 0.0
      %v2097 = vmax.f32 %v1819, 0.0
      %v2098 = vmax.f32 %v1824, 0.0
      %v2099 = vmax.f32 %v1829, 0.0
      %v2100 = vmax.f32 %v1834, 0.0
      %v2101 = vmax.f32 %v1839, 0.0
      %v2102 = vmax.f32 %v1844, 0.0
      %v2103 = vmax.f32 %v1849, 0.0
      %v2104 = vmax.f32 %v1854, 0.0
      %v2105 = vmax.f32 %v1859, 0.0
      %v2106 = vmax.f32 %v1864, 0.0
      %v2107 = vmax.f32 %v1869, 0.0
      %v2108 = vmax.f32 %v1874, 0.0
      %v2109 = vmax.f32 %v1879, 0.0
      %v2110 = vmax.f32 %v1884, 0.0
      %v2111 = vmax.f32 %v1889, 0.0
      %v2112 = vmax.f32 %v1894, 0.0
      %v2113 = vmax.f32 %v1899, 0.0
      %v2114 = vmax.f32 %v1904, 0.0
      %v2115 = vmax.f32 %v1909, 0.0
      %v2116 = vmax.f32 %v1914, 0.0
      %v2117 = vmax.f32 %v1919, 0.0
      %v2118 = vmax.f32 %v1924, 0.0
      %v2119 = vmax.f32 %v1929, 0.0
      %v2120 = vmax.f32 %v1934, 0.0
      %v2121 = vmax.f32 %v1939, 0.0
      %v2122 = vmax.f32 %v1944, 0.0
      %v2123 = vmax.f32 %v1949, 0.0
      %v2124 = vmax.f32 %v1954, 0.0
      %v2125 = vmax.f32 %v1959, 0.0
      %v2126 = vmax.f32 %v1964, 0.0
      %v2127 = vmax.f32 %v1969, 0.0
      %v2128 = vmax.f32 %v1974, 0.0
      %v2129 = vmax.f32 %v1979, 0.0
      %v2130 = vmax.f32 %v1984, 0.0
      %v2131 = vmax.f32 %v1989, 0.0
      %v2132 = vmax.f32 %v1994, 0.0
      %v2133 = vmax.f32 %v1999, 0.0
      %v2134 = vmax.f32 %v2004, 0.0
      %v2135 = vmax.f32 %v2009, 0.0
      %v2136 = vmax.f32 %v2014, 0.0
      %v2137 = vmax.f32 %v2019, 0.0
      %v2138 = vmax.f32 %v2024, 0.0
      %v2139 = vmax.f32 %v2029, 0.0
      %v2140 = vmax.f32 %v2034, 0.0
      %v2141 = vmax.f32 %v2039, 0.0
      %v2142 = vmax.f32 %v2044, 0.0
      %v2143 = vmax.f32 %v2049, 0.0
      %v2144 = vmax.f32 %v2054, 0.0
      %v2145 = vmax.f32 %v2059, 0.0
      %v2146 = vmax.f32 %v2064, 0.0
      %v2147 = vmax.f32 %v2069, 0.0
      %v2148 = vmax.f32 %v2074, 0.0
      %v2149 = vmax.f32 %v2079, 0.0
      %v2150 = vmax.f32 %v2084, 0.0
      %v2151 = vld [vmem:[%s7] sm:$0xff]
      %v2152 = vld [vmem:[%s7 + $0x8] sm:$0xff]
      %v2153 = vld [vmem:[%s7 + $0x10] sm:$0xff]
      %v2154 = vld [vmem:[%s7 + $0x18] sm:$0xff]
      %v2155 = vld [vmem:[%s7 + $0x20] sm:$0xff]
      %v2156 = vld [vmem:[%s7 + $0x28] sm:$0xff]
      %v2157 = vld [vmem:[%s7 + $0x30] sm:$0xff]
      %v2158 = vld [vmem:[%s7 + $0x38] sm:$0xff]
      %v2159 = vld [vmem:[%s7 + $0x40] sm:$0xff]
      %v2160 = vld [vmem:[%s7 + $0x48] sm:$0xff]
      %v2161 = vld [vmem:[%s7 + $0x50] sm:$0xff]
      %v2162 = vld [vmem:[%s7 + $0x58] sm:$0xff]
      %v2163 = vld [vmem:[%s7 + $0x60] sm:$0xff]
      %v2164 = vld [vmem:[%s7 + $0x68] sm:$0xff]
      %v2165 = vld [vmem:[%s7 + $0x70] sm:$0xff]
      %v2166 = vld [vmem:[%s7 + $0x78] sm:$0xff]
      %2167 = vmatprep.subr.mxu0 0.0
      %2168 = vmatpush1.msra.mxu0 %v2166
      %2169 = vmatprep.subr.mxu0 0.0
      %2170 = vmatpush1.msra.mxu0 %v2165
      %2171 = vmatprep.subr.mxu0 0.0
      %2172 = vmatpush1.msra.mxu0 %v2164
      %2173 = vmatprep.subr.mxu0 0.0
      %2174 = vmatpush1.msra.mxu0 %v2163
      %2175 = vmatprep.subr.mxu0 0.0
      %2176 = vmatpush1.msra.mxu0 %v2162
      %2177 = vmatprep.subr.mxu0 0.0
      %2178 = vmatpush1.msra.mxu0 %v2161
      %2179 = vmatprep.subr.mxu0 0.0
      %2180 = vmatpush1.msra.mxu0 %v2160
      %2181 = vmatprep.subr.mxu0 0.0
      %2182 = vmatpush1.msra.mxu0 %v2159
      %2183 = vmatprep.subr.mxu0 0.0
      %2184 = vmatpush1.msra.mxu0 %v2158
      %2185 = vmatprep.subr.mxu0 0.0
      %2186 = vmatpush1.msra.mxu0 %v2157
      %2187 = vmatprep.subr.mxu0 0.0
      %2188 = vmatpush1.msra.mxu0 %v2156
      %2189 = vmatprep.subr.mxu0 0.0
      %2190 = vmatpush1.msra.mxu0 %v2155
      %2191 = vmatprep.subr.mxu0 0.0
      %2192 = vmatpush1.msra.mxu0 %v2154
      %2193 = vmatprep.subr.mxu0 0.0
      %2194 = vmatpush1.msra.mxu0 %v2153
      %2195 = vmatprep.subr.mxu0 0.0
      %2196 = vmatpush1.msra.mxu0 %v2152
      %2197 = vmatprep.subr.mxu0 0.0
      %2198 = vmatpush1.msra.mxu0 %v2151
      %2199 = vmatprep.subr.mxu0 0.0
      %2200 = vmatpush2.msra.mxu0 0.0
      %2201 = vmatprep.subr.mxu0 0.0
      %2202 = vmatpush2.msra.mxu0 0.0
      %2203 = vmatprep.subr.mxu0 0.0
      %2204 = vmatpush2.msra.mxu0 0.0
      %2205 = vmatprep.subr.mxu0 0.0
      %2206 = vmatpush2.msra.mxu0 0.0
      %2207 = vmatprep.subr.mxu0 0.0
      %2208 = vmatpush2.msra.mxu0 0.0
      %2209 = vmatprep.subr.mxu0 0.0
      %2210 = vmatpush2.msra.mxu0 0.0
      %2211 = vmatprep.subr.mxu0 0.0
      %2212 = vmatpush2.msra.mxu0 0.0
      %2213 = vmatprep.subr.mxu0 0.0
      %2214 = vmatpush2.msra.mxu0 0.0
      %2215 = vmatprep.subr.mxu0 0.0
      %2216 = vmatpush2.msra.mxu0 0.0
      %2217 = vmatprep.subr.mxu0 0.0
      %2218 = vmatpush2.msra.mxu0 0.0
      %2219 = vmatprep.subr.mxu0 0.0
      %2220 = vmatpush2.msra.mxu0 0.0
      %2221 = vmatprep.subr.mxu0 0.0
      %2222 = vmatpush2.msra.mxu0 0.0
      %2223 = vmatprep.subr.mxu0 0.0
      %2224 = vmatpush2.msra.mxu0 0.0
      %2225 = vmatprep.subr.mxu0 0.0
      %2226 = vmatpush2.msra.mxu0 0.0
      %2227 = vmatprep.subr.mxu0 0.0
      %2228 = vmatpush2.msra.mxu0 0.0
      %2229 = vmatprep.subr.mxu0 0.0
      %2230 = vmatpush2.msra.mxu0 0.0
      %2231 = vmatprep.mubr.f32.mxu0 0.0
      %2232 = vmatmul.mubr.f32.gmra.mxu0 %v2087
      %v2233 = vpop.f32.mrf.mxu0
      %v2234 = vadd.f32 %v763, %v2233
      %v2235 = vpop.f32.mrf.mxu0
      %2236 = vmatprep.mubr.f32.mxu0 0.0
      %2237 = vmatmul.mubr.f32.gmra.mxu0 %v2088
      %v2238 = vpop.f32.mrf.mxu0
      %v2239 = vadd.f32 %v769, %v2238
      %v2240 = vpop.f32.mrf.mxu0
      %2241 = vmatprep.mubr.f32.mxu0 0.0
      %2242 = vmatmul.mubr.f32.gmra.mxu0 %v2089
      %v2243 = vpop.f32.mrf.mxu0
      %v2244 = vadd.f32 %v775, %v2243
      %v2245 = vpop.f32.mrf.mxu0
      %2246 = vmatprep.mubr.f32.mxu0 0.0
      %2247 = vmatmul.mubr.f32.gmra.mxu0 %v2090
      %v2248 = vpop.f32.mrf.mxu0
      %v2249 = vadd.f32 %v781, %v2248
      %v2250 = vpop.f32.mrf.mxu0
      %2251 = vmatprep.mubr.f32.mxu0 0.0
      %2252 = vmatmul.mubr.f32.gmra.mxu0 %v2091
      %v2253 = vpop.f32.mrf.mxu0
      %v2254 = vadd.f32 %v787, %v2253
      %v2255 = vpop.f32.mrf.mxu0
      %2256 = vmatprep.mubr.f32.mxu0 0.0
      %2257 = vmatmul.mubr.f32.gmra.mxu0 %v2092
      %v2258 = vpop.f32.mrf.mxu0
      %v2259 = vadd.f32 %v793, %v2258
      %v2260 = vpop.f32.mrf.mxu0
      %2261 = vmatprep.mubr.f32.mxu0 0.0
      %2262 = vmatmul.mubr.f32.gmra.mxu0 %v2093
      %v2263 = vpop.f32.mrf.mxu0
      %v2264 = vadd.f32 %v799, %v2263
      %v2265 = vpop.f32.mrf.mxu0
      %2266 = vmatprep.mubr.f32.mxu0 0.0
      %2267 = vmatmul.mubr.f32.gmra.mxu0 %v2094
      %v2268 = vpop.f32.mrf.mxu0
      %v2269 = vadd.f32 %v805, %v2268
      %v2270 = vpop.f32.mrf.mxu0
      %2271 = vmatprep.mubr.f32.mxu0 0.0
      %2272 = vmatmul.mubr.f32.gmra.mxu0 %v2095
      %v2273 = vpop.f32.mrf.mxu0
      %v2274 = vadd.f32 %v811, %v2273
      %v2275 = vpop.f32.mrf.mxu0
      %2276 = vmatprep.mubr.f32.mxu0 0.0
      %2277 = vmatmul.mubr.f32.gmra.mxu0 %v2096
      %v2278 = vpop.f32.mrf.mxu0
      %v2279 = vadd.f32 %v817, %v2278
      %v2280 = vpop.f32.mrf.mxu0
      %2281 = vmatprep.mubr.f32.mxu0 0.0
      %2282 = vmatmul.mubr.f32.gmra.mxu0 %v2097
      %v2283 = vpop.f32.mrf.mxu0
      %v2284 = vadd.f32 %v823, %v2283
      %v2285 = vpop.f32.mrf.mxu0
      %2286 = vmatprep.mubr.f32.mxu0 0.0
      %2287 = vmatmul.mubr.f32.gmra.mxu0 %v2098
      %v2288 = vpop.f32.mrf.mxu0
      %v2289 = vadd.f32 %v829, %v2288
      %v2290 = vpop.f32.mrf.mxu0
      %2291 = vmatprep.mubr.f32.mxu0 0.0
      %2292 = vmatmul.mubr.f32.gmra.mxu0 %v2099
      %v2293 = vpop.f32.mrf.mxu0
      %v2294 = vadd.f32 %v835, %v2293
      %v2295 = vpop.f32.mrf.mxu0
      %2296 = vmatprep.mubr.f32.mxu0 0.0
      %2297 = vmatmul.mubr.f32.gmra.mxu0 %v2100
      %v2298 = vpop.f32.mrf.mxu0
      %v2299 = vadd.f32 %v841, %v2298
      %v2300 = vpop.f32.mrf.mxu0
      %2301 = vmatprep.mubr.f32.mxu0 0.0
      %2302 = vmatmul.mubr.f32.gmra.mxu0 %v2101
      %v2303 = vpop.f32.mrf.mxu0
      %v2304 = vadd.f32 %v847, %v2303
      %v2305 = vpop.f32.mrf.mxu0
      %2306 = vmatprep.mubr.f32.mxu0 0.0
      %2307 = vmatmul.mubr.f32.gmra.mxu0 %v2102
      %v2308 = vpop.f32.mrf.mxu0
      %v2309 = vadd.f32 %v853, %v2308
      %v2310 = vpop.f32.mrf.mxu0
      %2311 = vmatprep.mubr.f32.mxu0 0.0
      %2312 = vmatmul.mubr.f32.gmra.mxu0 %v2103
      %v2313 = vpop.f32.mrf.mxu0
      %v2314 = vadd.f32 %v859, %v2313
      %v2315 = vpop.f32.mrf.mxu0
      %2316 = vmatprep.mubr.f32.mxu0 0.0
      %2317 = vmatmul.mubr.f32.gmra.mxu0 %v2104
      %v2318 = vpop.f32.mrf.mxu0
      %v2319 = vadd.f32 %v865, %v2318
      %v2320 = vpop.f32.mrf.mxu0
      %2321 = vmatprep.mubr.f32.mxu0 0.0
      %2322 = vmatmul.mubr.f32.gmra.mxu0 %v2105
      %v2323 = vpop.f32.mrf.mxu0
      %v2324 = vadd.f32 %v871, %v2323
      %v2325 = vpop.f32.mrf.mxu0
      %2326 = vmatprep.mubr.f32.mxu0 0.0
      %2327 = vmatmul.mubr.f32.gmra.mxu0 %v2106
      %v2328 = vpop.f32.mrf.mxu0
      %v2329 = vadd.f32 %v877, %v2328
      %v2330 = vpop.f32.mrf.mxu0
      %2331 = vmatprep.mubr.f32.mxu0 0.0
      %2332 = vmatmul.mubr.f32.gmra.mxu0 %v2107
      %v2333 = vpop.f32.mrf.mxu0
      %v2334 = vadd.f32 %v883, %v2333
      %v2335 = vpop.f32.mrf.mxu0
      %2336 = vmatprep.mubr.f32.mxu0 0.0
      %2337 = vmatmul.mubr.f32.gmra.mxu0 %v2108
      %v2338 = vpop.f32.mrf.mxu0
      %v2339 = vadd.f32 %v889, %v2338
      %v2340 = vpop.f32.mrf.mxu0
      %2341 = vmatprep.mubr.f32.mxu0 0.0
      %2342 = vmatmul.mubr.f32.gmra.mxu0 %v2109
      %v2343 = vpop.f32.mrf.mxu0
      %v2344 = vadd.f32 %v895, %v2343
      %v2345 = vpop.f32.mrf.mxu0
      %2346 = vmatprep.mubr.f32.mxu0 0.0
      %2347 = vmatmul.mubr.f32.gmra.mxu0 %v2110
      %v2348 = vpop.f32.mrf.mxu0
      %v2349 = vadd.f32 %v901, %v2348
      %v2350 = vpop.f32.mrf.mxu0
      %2351 = vmatprep.mubr.f32.mxu0 0.0
      %2352 = vmatmul.mubr.f32.gmra.mxu0 %v2111
      %v2353 = vpop.f32.mrf.mxu0
      %v2354 = vadd.f32 %v907, %v2353
      %v2355 = vpop.f32.mrf.mxu0
      %2356 = vmatprep.mubr.f32.mxu0 0.0
      %2357 = vmatmul.mubr.f32.gmra.mxu0 %v2112
      %v2358 = vpop.f32.mrf.mxu0
      %v2359 = vadd.f32 %v913, %v2358
      %v2360 = vpop.f32.mrf.mxu0
      %2361 = vmatprep.mubr.f32.mxu0 0.0
      %2362 = vmatmul.mubr.f32.gmra.mxu0 %v2113
      %v2363 = vpop.f32.mrf.mxu0
      %v2364 = vadd.f32 %v919, %v2363
      %v2365 = vpop.f32.mrf.mxu0
      %2366 = vmatprep.mubr.f32.mxu0 0.0
      %2367 = vmatmul.mubr.f32.gmra.mxu0 %v2114
      %v2368 = vpop.f32.mrf.mxu0
      %v2369 = vadd.f32 %v925, %v2368
      %v2370 = vpop.f32.mrf.mxu0
      %2371 = vmatprep.mubr.f32.mxu0 0.0
      %2372 = vmatmul.mubr.f32.gmra.mxu0 %v2115
      %v2373 = vpop.f32.mrf.mxu0
      %v2374 = vadd.f32 %v931, %v2373
      %v2375 = vpop.f32.mrf.mxu0
      %2376 = vmatprep.mubr.f32.mxu0 0.0
      %2377 = vmatmul.mubr.f32.gmra.mxu0 %v2116
      %v2378 = vpop.f32.mrf.mxu0
      %v2379 = vadd.f32 %v937, %v2378
      %v2380 = vpop.f32.mrf.mxu0
      %2381 = vmatprep.mubr.f32.mxu0 0.0
      %2382 = vmatmul.mubr.f32.gmra.mxu0 %v2117
      %v2383 = vpop.f32.mrf.mxu0
      %v2384 = vadd.f32 %v943, %v2383
      %v2385 = vpop.f32.mrf.mxu0
      %2386 = vmatprep.mubr.f32.mxu0 0.0
      %2387 = vmatmul.mubr.f32.gmra.mxu0 %v2118
      %v2388 = vpop.f32.mrf.mxu0
      %v2389 = vadd.f32 %v949, %v2388
      %v2390 = vpop.f32.mrf.mxu0
      %2391 = vmatprep.mubr.f32.mxu0 0.0
      %2392 = vmatmul.mubr.f32.gmra.mxu0 %v2119
      %v2393 = vpop.f32.mrf.mxu0
      %v2394 = vadd.f32 %v955, %v2393
      %v2395 = vpop.f32.mrf.mxu0
      %2396 = vmatprep.mubr.f32.mxu0 0.0
      %2397 = vmatmul.mubr.f32.gmra.mxu0 %v2120
      %v2398 = vpop.f32.mrf.mxu0
      %v2399 = vadd.f32 %v961, %v2398
      %v2400 = vpop.f32.mrf.mxu0
      %2401 = vmatprep.mubr.f32.mxu0 0.0
      %2402 = vmatmul.mubr.f32.gmra.mxu0 %v2121
      %v2403 = vpop.f32.mrf.mxu0
      %v2404 = vadd.f32 %v967, %v2403
      %v2405 = vpop.f32.mrf.mxu0
      %2406 = vmatprep.mubr.f32.mxu0 0.0
      %2407 = vmatmul.mubr.f32.gmra.mxu0 %v2122
      %v2408 = vpop.f32.mrf.mxu0
      %v2409 = vadd.f32 %v973, %v2408
      %v2410 = vpop.f32.mrf.mxu0
      %2411 = vmatprep.mubr.f32.mxu0 0.0
      %2412 = vmatmul.mubr.f32.gmra.mxu0 %v2123
      %v2413 = vpop.f32.mrf.mxu0
      %v2414 = vadd.f32 %v979, %v2413
      %v2415 = vpop.f32.mrf.mxu0
      %2416 = vmatprep.mubr.f32.mxu0 0.0
      %2417 = vmatmul.mubr.f32.gmra.mxu0 %v2124
      %v2418 = vpop.f32.mrf.mxu0
      %v2419 = vadd.f32 %v985, %v2418
      %v2420 = vpop.f32.mrf.mxu0
      %2421 = vmatprep.mubr.f32.mxu0 0.0
      %2422 = vmatmul.mubr.f32.gmra.mxu0 %v2125
      %v2423 = vpop.f32.mrf.mxu0
      %v2424 = vadd.f32 %v991, %v2423
      %v2425 = vpop.f32.mrf.mxu0
      %2426 = vmatprep.mubr.f32.mxu0 0.0
      %2427 = vmatmul.mubr.f32.gmra.mxu0 %v2126
      %v2428 = vpop.f32.mrf.mxu0
      %v2429 = vadd.f32 %v997, %v2428
      %v2430 = vpop.f32.mrf.mxu0
      %2431 = vmatprep.mubr.f32.mxu0 0.0
      %2432 = vmatmul.mubr.f32.gmra.mxu0 %v2127
      %v2433 = vpop.f32.mrf.mxu0
      %v2434 = vadd.f32 %v1003, %v2433
      %v2435 = vpop.f32.mrf.mxu0
      %2436 = vmatprep.mubr.f32.mxu0 0.0
      %2437 = vmatmul.mubr.f32.gmra.mxu0 %v2128
      %v2438 = vpop.f32.mrf.mxu0
      %v2439 = vadd.f32 %v1009, %v2438
      %v2440 = vpop.f32.mrf.mxu0
      %2441 = vmatprep.mubr.f32.mxu0 0.0
      %2442 = vmatmul.mubr.f32.gmra.mxu0 %v2129
      %v2443 = vpop.f32.mrf.mxu0
      %v2444 = vadd.f32 %v1015, %v2443
      %v2445 = vpop.f32.mrf.mxu0
      %2446 = vmatprep.mubr.f32.mxu0 0.0
      %2447 = vmatmul.mubr.f32.gmra.mxu0 %v2130
      %v2448 = vpop.f32.mrf.mxu0
      %v2449 = vadd.f32 %v1021, %v2448
      %v2450 = vpop.f32.mrf.mxu0
      %2451 = vmatprep.mubr.f32.mxu0 0.0
      %2452 = vmatmul.mubr.f32.gmra.mxu0 %v2131
      %v2453 = vpop.f32.mrf.mxu0
      %v2454 = vadd.f32 %v1027, %v2453
      %v2455 = vpop.f32.mrf.mxu0
      %2456 = vmatprep.mubr.f32.mxu0 0.0
      %2457 = vmatmul.mubr.f32.gmra.mxu0 %v2132
      %v2458 = vpop.f32.mrf.mxu0
      %v2459 = vadd.f32 %v1033, %v2458
      %v2460 = vpop.f32.mrf.mxu0
      %2461 = vmatprep.mubr.f32.mxu0 0.0
      %2462 = vmatmul.mubr.f32.gmra.mxu0 %v2133
      %v2463 = vpop.f32.mrf.mxu0
      %v2464 = vadd.f32 %v1039, %v2463
      %v2465 = vpop.f32.mrf.mxu0
      %2466 = vmatprep.mubr.f32.mxu0 0.0
      %2467 = vmatmul.mubr.f32.gmra.mxu0 %v2134
      %v2468 = vpop.f32.mrf.mxu0
      %v2469 = vadd.f32 %v1045, %v2468
      %v2470 = vpop.f32.mrf.mxu0
      %2471 = vmatprep.mubr.f32.mxu0 0.0
      %2472 = vmatmul.mubr.f32.gmra.mxu0 %v2135
      %v2473 = vpop.f32.mrf.mxu0
      %v2474 = vadd.f32 %v1051, %v2473
      %v2475 = vpop.f32.mrf.mxu0
      %2476 = vmatprep.mubr.f32.mxu0 0.0
      %2477 = vmatmul.mubr.f32.gmra.mxu0 %v2136
      %v2478 = vpop.f32.mrf.mxu0
      %v2479 = vadd.f32 %v1057, %v2478
      %v2480 = vpop.f32.mrf.mxu0
      %2481 = vmatprep.mubr.f32.mxu0 0.0
      %2482 = vmatmul.mubr.f32.gmra.mxu0 %v2137
      %v2483 = vpop.f32.mrf.mxu0
      %v2484 = vadd.f32 %v1063, %v2483
      %v2485 = vpop.f32.mrf.mxu0
      %2486 = vmatprep.mubr.f32.mxu0 0.0
      %2487 = vmatmul.mubr.f32.gmra.mxu0 %v2138
      %v2488 = vpop.f32.mrf.mxu0
      %v2489 = vadd.f32 %v1069, %v2488
      %v2490 = vpop.f32.mrf.mxu0
      %2491 = vmatprep.mubr.f32.mxu0 0.0
      %2492 = vmatmul.mubr.f32.gmra.mxu0 %v2139
      %v2493 = vpop.f32.mrf.mxu0
      %v2494 = vadd.f32 %v1075, %v2493
      %v2495 = vpop.f32.mrf.mxu0
      %2496 = vmatprep.mubr.f32.mxu0 0.0
      %2497 = vmatmul.mubr.f32.gmra.mxu0 %v2140
      %v2498 = vpop.f32.mrf.mxu0
      %v2499 = vadd.f32 %v1081, %v2498
      %v2500 = vpop.f32.mrf.mxu0
      %2501 = vmatprep.mubr.f32.mxu0 0.0
      %2502 = vmatmul.mubr.f32.gmra.mxu0 %v2141
      %v2503 = vpop.f32.mrf.mxu0
      %v2504 = vadd.f32 %v1087, %v2503
      %v2505 = vpop.f32.mrf.mxu0
      %2506 = vmatprep.mubr.f32.mxu0 0.0
      %2507 = vmatmul.mubr.f32.gmra.mxu0 %v2142
      %v2508 = vpop.f32.mrf.mxu0
      %v2509 = vadd.f32 %v1093, %v2508
      %v2510 = vpop.f32.mrf.mxu0
      %2511 = vmatprep.mubr.f32.mxu0 0.0
      %2512 = vmatmul.mubr.f32.gmra.mxu0 %v2143
      %v2513 = vpop.f32.mrf.mxu0
      %v2514 = vadd.f32 %v1099, %v2513
      %v2515 = vpop.f32.mrf.mxu0
      %2516 = vmatprep.mubr.f32.mxu0 0.0
      %2517 = vmatmul.mubr.f32.gmra.mxu0 %v2144
      %v2518 = vpop.f32.mrf.mxu0
      %v2519 = vadd.f32 %v1105, %v2518
      %v2520 = vpop.f32.mrf.mxu0
      %2521 = vmatprep.mubr.f32.mxu0 0.0
      %2522 = vmatmul.mubr.f32.gmra.mxu0 %v2145
      %v2523 = vpop.f32.mrf.mxu0
      %v2524 = vadd.f32 %v1111, %v2523
      %v2525 = vpop.f32.mrf.mxu0
      %2526 = vmatprep.mubr.f32.mxu0 0.0
      %2527 = vmatmul.mubr.f32.gmra.mxu0 %v2146
      %v2528 = vpop.f32.mrf.mxu0
      %v2529 = vadd.f32 %v1117, %v2528
      %v2530 = vpop.f32.mrf.mxu0
      %2531 = vmatprep.mubr.f32.mxu0 0.0
      %2532 = vmatmul.mubr.f32.gmra.mxu0 %v2147
      %v2533 = vpop.f32.mrf.mxu0
      %v2534 = vadd.f32 %v1123, %v2533
      %v2535 = vpop.f32.mrf.mxu0
      %2536 = vmatprep.mubr.f32.mxu0 0.0
      %2537 = vmatmul.mubr.f32.gmra.mxu0 %v2148
      %v2538 = vpop.f32.mrf.mxu0
      %v2539 = vadd.f32 %v1129, %v2538
      %v2540 = vpop.f32.mrf.mxu0
      %2541 = vmatprep.mubr.f32.mxu0 0.0
      %2542 = vmatmul.mubr.f32.gmra.mxu0 %v2149
      %v2543 = vpop.f32.mrf.mxu0
      %v2544 = vadd.f32 %v1135, %v2543
      %v2545 = vpop.f32.mrf.mxu0
      %2546 = vmatprep.mubr.f32.mxu0 0.0
      %2547 = vmatmul.mubr.f32.gmra.mxu0 %v2150
      %v2548 = vpop.f32.mrf.mxu0
      %v2549 = vadd.f32 %v1141, %v2548
      %v2550 = vpop.f32.mrf.mxu0
      %2551 = vdwg.mxu0
      %vm2552 = vcmp.gt.f32.partialorder %v2234, 0.0
      %vm2553 = vcmp.gt.f32.partialorder %v2239, 0.0
      %vm2554 = vcmp.gt.f32.partialorder %v2244, 0.0
      %vm2555 = vcmp.gt.f32.partialorder %v2249, 0.0
      %vm2556 = vcmp.gt.f32.partialorder %v2254, 0.0
      %vm2557 = vcmp.gt.f32.partialorder %v2259, 0.0
      %vm2558 = vcmp.gt.f32.partialorder %v2264, 0.0
      %vm2559 = vcmp.gt.f32.partialorder %v2269, 0.0
      %vm2560 = vcmp.gt.f32.partialorder %v2274, 0.0
      %vm2561 = vcmp.gt.f32.partialorder %v2279, 0.0
      %vm2562 = vcmp.gt.f32.partialorder %v2284, 0.0
      %vm2563 = vcmp.gt.f32.partialorder %v2289, 0.0
      %vm2564 = vcmp.gt.f32.partialorder %v2294, 0.0
      %vm2565 = vcmp.gt.f32.partialorder %v2299, 0.0
      %vm2566 = vcmp.gt.f32.partialorder %v2304, 0.0
      %vm2567 = vcmp.gt.f32.partialorder %v2309, 0.0
      %vm2568 = vcmp.gt.f32.partialorder %v2314, 0.0
      %vm2569 = vcmp.gt.f32.partialorder %v2319, 0.0
      %vm2570 = vcmp.gt.f32.partialorder %v2324, 0.0
      %vm2571 = vcmp.gt.f32.partialorder %v2329, 0.0
      %vm2572 = vcmp.gt.f32.partialorder %v2334, 0.0
      %vm2573 = vcmp.gt.f32.partialorder %v2339, 0.0
      %vm2574 = vcmp.gt.f32.partialorder %v2344, 0.0
      %vm2575 = vcmp.gt.f32.partialorder %v2349, 0.0
      %vm2576 = vcmp.gt.f32.partialorder %v2354, 0.0
      %vm2577 = vcmp.gt.f32.partialorder %v2359, 0.0
      %vm2578 = vcmp.gt.f32.partialorder %v2364, 0.0
      %vm2579 = vcmp.gt.f32.partialorder %v2369, 0.0
      %vm2580 = vcmp.gt.f32.partialorder %v2374, 0.0
      %vm2581 = vcmp.gt.f32.partialorder %v2379, 0.0
      %vm2582 = vcmp.gt.f32.partialorder %v2384, 0.0
      %vm2583 = vcmp.gt.f32.partialorder %v2389, 0.0
      %vm2584 = vcmp.gt.f32.partialorder %v2394, 0.0
      %vm2585 = vcmp.gt.f32.partialorder %v2399, 0.0
      %vm2586 = vcmp.gt.f32.partialorder %v2404, 0.0
      %vm2587 = vcmp.gt.f32.partialorder %v2409, 0.0
      %vm2588 = vcmp.gt.f32.partialorder %v2414, 0.0
      %vm2589 = vcmp.gt.f32.partialorder %v2419, 0.0
      %vm2590 = vcmp.gt.f32.partialorder %v2424, 0.0
      %vm2591 = vcmp.gt.f32.partialorder %v2429, 0.0
      %vm2592 = vcmp.gt.f32.partialorder %v2434, 0.0
      %vm2593 = vcmp.gt.f32.partialorder %v2439, 0.0
      %vm2594 = vcmp.gt.f32.partialorder %v2444, 0.0
      %vm2595 = vcmp.gt.f32.partialorder %v2449, 0.0
      %vm2596 = vcmp.gt.f32.partialorder %v2454, 0.0
      %vm2597 = vcmp.gt.f32.partialorder %v2459, 0.0
      %vm2598 = vcmp.gt.f32.partialorder %v2464, 0.0
      %vm2599 = vcmp.gt.f32.partialorder %v2469, 0.0
      %vm2600 = vcmp.gt.f32.partialorder %v2474, 0.0
      %vm2601 = vcmp.gt.f32.partialorder %v2479, 0.0
      %vm2602 = vcmp.gt.f32.partialorder %v2484, 0.0
      %vm2603 = vcmp.gt.f32.partialorder %v2489, 0.0
      %vm2604 = vcmp.gt.f32.partialorder %v2494, 0.0
      %vm2605 = vcmp.gt.f32.partialorder %v2499, 0.0
      %vm2606 = vcmp.gt.f32.partialorder %v2504, 0.0
      %vm2607 = vcmp.gt.f32.partialorder %v2509, 0.0
      %vm2608 = vcmp.gt.f32.partialorder %v2514, 0.0
      %vm2609 = vcmp.gt.f32.partialorder %v2519, 0.0
      %vm2610 = vcmp.gt.f32.partialorder %v2524, 0.0
      %vm2611 = vcmp.gt.f32.partialorder %v2529, 0.0
      %vm2612 = vcmp.gt.f32.partialorder %v2534, 0.0
      %vm2613 = vcmp.gt.f32.partialorder %v2539, 0.0
      %vm2614 = vcmp.gt.f32.partialorder %v2544, 0.0
      %vm2615 = vcmp.gt.f32.partialorder %v2549, 0.0
      %v2616 = vmul.f32 %v2234, 0.01
      %v2617 = vmul.f32 %v2239, 0.01
      %v2618 = vmul.f32 %v2244, 0.01
      %v2619 = vmul.f32 %v2249, 0.01
      %v2620 = vmul.f32 %v2254, 0.01
      %v2621 = vmul.f32 %v2259, 0.01
      %v2622 = vmul.f32 %v2264, 0.01
      %v2623 = vmul.f32 %v2269, 0.01
      %v2624 = vmul.f32 %v2274, 0.01
      %v2625 = vmul.f32 %v2279, 0.01
      %v2626 = vmul.f32 %v2284, 0.01
      %v2627 = vmul.f32 %v2289, 0.01
      %v2628 = vmul.f32 %v2294, 0.01
      %v2629 = vmul.f32 %v2299, 0.01
      %v2630 = vmul.f32 %v2304, 0.01
      %v2631 = vmul.f32 %v2309, 0.01
      %v2632 = vmul.f32 %v2314, 0.01
      %v2633 = vmul.f32 %v2319, 0.01
      %v2634 = vmul.f32 %v2324, 0.01
      %v2635 = vmul.f32 %v2329, 0.01
      %v2636 = vmul.f32 %v2334, 0.01
      %v2637 = vmul.f32 %v2339, 0.01
      %v2638 = vmul.f32 %v2344, 0.01
      %v2639 = vmul.f32 %v2349, 0.01
      %v2640 = vmul.f32 %v2354, 0.01
      %v2641 = vmul.f32 %v2359, 0.01
      %v2642 = vmul.f32 %v2364, 0.01
      %v2643 = vmul.f32 %v2369, 0.01
      %v2644 = vmul.f32 %v2374, 0.01
      %v2645 = vmul.f32 %v2379, 0.01
      %v2646 = vmul.f32 %v2384, 0.01
      %v2647 = vmul.f32 %v2389, 0.01
      %v2648 = vmul.f32 %v2394, 0.01
      %v2649 = vmul.f32 %v2399, 0.01
      %v2650 = vmul.f32 %v2404, 0.01
      %v2651 = vmul.f32 %v2409, 0.01
      %v2652 = vmul.f32 %v2414, 0.01
      %v2653 = vmul.f32 %v2419, 0.01
      %v2654 = vmul.f32 %v2424, 0.01
      %v2655 = vmul.f32 %v2429, 0.01
      %v2656 = vmul.f32 %v2434, 0.01
      %v2657 = vmul.f32 %v2439, 0.01
      %v2658 = vmul.f32 %v2444, 0.01
      %v2659 = vmul.f32 %v2449, 0.01
      %v2660 = vmul.f32 %v2454, 0.01
      %v2661 = vmul.f32 %v2459, 0.01
      %v2662 = vmul.f32 %v2464, 0.01
      %v2663 = vmul.f32 %v2469, 0.01
      %v2664 = vmul.f32 %v2474, 0.01
      %v2665 = vmul.f32 %v2479, 0.01
      %v2666 = vmul.f32 %v2484, 0.01
      %v2667 = vmul.f32 %v2489, 0.01
      %v2668 = vmul.f32 %v2494, 0.01
      %v2669 = vmul.f32 %v2499, 0.01
      %v2670 = vmul.f32 %v2504, 0.01
      %v2671 = vmul.f32 %v2509, 0.01
      %v2672 = vmul.f32 %v2514, 0.01
      %v2673 = vmul.f32 %v2519, 0.01
      %v2674 = vmul.f32 %v2524, 0.01
      %v2675 = vmul.f32 %v2529, 0.01
      %v2676 = vmul.f32 %v2534, 0.01
      %v2677 = vmul.f32 %v2539, 0.01
      %v2678 = vmul.f32 %v2544, 0.01
      %v2679 = vmul.f32 %v2549, 0.01
      %v2680 = vsel %vm2552, %v2234, %v2616
      %v2681 = vsel %vm2553, %v2239, %v2617
      %v2682 = vsel %vm2554, %v2244, %v2618
      %v2683 = vsel %vm2555, %v2249, %v2619
      %v2684 = vsel %vm2556, %v2254, %v2620
      %v2685 = vsel %vm2557, %v2259, %v2621
      %v2686 = vsel %vm2558, %v2264, %v2622
      %v2687 = vsel %vm2559, %v2269, %v2623
      %v2688 = vsel %vm2560, %v2274, %v2624
      %v2689 = vsel %vm2561, %v2279, %v2625
      %v2690 = vsel %vm2562, %v2284, %v2626
      %v2691 = vsel %vm2563, %v2289, %v2627
      %v2692 = vsel %vm2564, %v2294, %v2628
      %v2693 = vsel %vm2565, %v2299, %v2629
      %v2694 = vsel %vm2566, %v2304, %v2630
      %v2695 = vsel %vm2567, %v2309, %v2631
      %v2696 = vsel %vm2568, %v2314, %v2632
      %v2697 = vsel %vm2569, %v2319, %v2633
      %v2698 = vsel %vm2570, %v2324, %v2634
      %v2699 = vsel %vm2571, %v2329, %v2635
      %v2700 = vsel %vm2572, %v2334, %v2636
      %v2701 = vsel %vm2573, %v2339, %v2637
      %v2702 = vsel %vm2574, %v2344, %v2638
      %v2703 = vsel %vm2575, %v2349, %v2639
      %v2704 = vsel %vm2576, %v2354, %v2640
      %v2705 = vsel %vm2577, %v2359, %v2641
      %v2706 = vsel %vm2578, %v2364, %v2642
      %v2707 = vsel %vm2579, %v2369, %v2643
      %v2708 = vsel %vm2580, %v2374, %v2644
      %v2709 = vsel %vm2581, %v2379, %v2645
      %v2710 = vsel %vm2582, %v2384, %v2646
      %v2711 = vsel %vm2583, %v2389, %v2647
      %v2712 = vsel %vm2584, %v2394, %v2648
      %v2713 = vsel %vm2585, %v2399, %v2649
      %v2714 = vsel %vm2586, %v2404, %v2650
      %v2715 = vsel %vm2587, %v2409, %v2651
      %v2716 = vsel %vm2588, %v2414, %v2652
      %v2717 = vsel %vm2589, %v2419, %v2653
      %v2718 = vsel %vm2590, %v2424, %v2654
      %v2719 = vsel %vm2591, %v2429, %v2655
      %v2720 = vsel %vm2592, %v2434, %v2656
      %v2721 = vsel %vm2593, %v2439, %v2657
      %v2722 = vsel %vm2594, %v2444, %v2658
      %v2723 = vsel %vm2595, %v2449, %v2659
      %v2724 = vsel %vm2596, %v2454, %v2660
      %v2725 = vsel %vm2597, %v2459, %v2661
      %v2726 = vsel %vm2598, %v2464, %v2662
      %v2727 = vsel %vm2599, %v2469, %v2663
      %v2728 = vsel %vm2600, %v2474, %v2664
      %v2729 = vsel %vm2601, %v2479, %v2665
      %v2730 = vsel %vm2602, %v2484, %v2666
      %v2731 = vsel %vm2603, %v2489, %v2667
      %v2732 = vsel %vm2604, %v2494, %v2668
      %v2733 = vsel %vm2605, %v2499, %v2669
      %v2734 = vsel %vm2606, %v2504, %v2670
      %v2735 = vsel %vm2607, %v2509, %v2671
      %v2736 = vsel %vm2608, %v2514, %v2672
      %v2737 = vsel %vm2609, %v2519, %v2673
      %v2738 = vsel %vm2610, %v2524, %v2674
      %v2739 = vsel %vm2611, %v2529, %v2675
      %v2740 = vsel %vm2612, %v2534, %v2676
      %v2741 = vsel %vm2613, %v2539, %v2677
      %v2742 = vsel %vm2614, %v2544, %v2678
      %v2743 = vsel %vm2615, %v2549, %v2679
      %v2744 = vld [vmem:[%s8] sm:$0xff]
      %v2745 = vld [vmem:[%s8 + $0x8] sm:$0xff]
      %v2746 = vld [vmem:[%s8 + $0x10] sm:$0xff]
      %v2747 = vld [vmem:[%s8 + $0x18] sm:$0xff]
      %v2748 = vld [vmem:[%s8 + $0x20] sm:$0xff]
      %v2749 = vld [vmem:[%s8 + $0x28] sm:$0xff]
      %v2750 = vld [vmem:[%s8 + $0x30] sm:$0xff]
      %v2751 = vld [vmem:[%s8 + $0x38] sm:$0xff]
      %v2752 = vld [vmem:[%s8 + $0x40] sm:$0xff]
      %v2753 = vld [vmem:[%s8 + $0x48] sm:$0xff]
      %v2754 = vld [vmem:[%s8 + $0x50] sm:$0xff]
      %v2755 = vld [vmem:[%s8 + $0x58] sm:$0xff]
      %v2756 = vld [vmem:[%s8 + $0x60] sm:$0xff]
      %v2757 = vld [vmem:[%s8 + $0x68] sm:$0xff]
      %v2758 = vld [vmem:[%s8 + $0x70] sm:$0xff]
      %v2759 = vld [vmem:[%s8 + $0x78] sm:$0xff]
      %v2760 = vld [vmem:[%s9] sm:$0x1]
      %v2762 = vlaneseq
      %v2763 = vshrl.u32 %v2762, 7
      %v2764 = vsub.s32 0, %v2763
      %v2765 = vrot.slane %v2760, %v2764
      %2767 = vmatprep.subr.mxu0 0.0
      %2768 = vmatpush1.msra.mxu0 %v2759
      %2769 = vmatprep.subr.mxu0 0.0
      %2770 = vmatpush1.msra.mxu0 %v2758
      %2771 = vmatprep.subr.mxu0 0.0
      %2772 = vmatpush1.msra.mxu0 %v2757
      %2773 = vmatprep.subr.mxu0 0.0
      %2774 = vmatpush1.msra.mxu0 %v2756
      %2775 = vmatprep.subr.mxu0 0.0
      %2776 = vmatpush1.msra.mxu0 %v2755
      %2777 = vmatprep.subr.mxu0 0.0
      %2778 = vmatpush1.msra.mxu0 %v2754
      %2779 = vmatprep.subr.mxu0 0.0
      %2780 = vmatpush1.msra.mxu0 %v2753
      %2781 = vmatprep.subr.mxu0 0.0
      %2782 = vmatpush1.msra.mxu0 %v2752
      %2783 = vmatprep.subr.mxu0 0.0
      %2784 = vmatpush1.msra.mxu0 %v2751
      %2785 = vmatprep.subr.mxu0 0.0
      %2786 = vmatpush1.msra.mxu0 %v2750
      %2787 = vmatprep.subr.mxu0 0.0
      %2788 = vmatpush1.msra.mxu0 %v2749
      %2789 = vmatprep.subr.mxu0 0.0
      %2790 = vmatpush1.msra.mxu0 %v2748
      %2791 = vmatprep.subr.mxu0 0.0
      %2792 = vmatpush1.msra.mxu0 %v2747
      %2793 = vmatprep.subr.mxu0 0.0
      %2794 = vmatpush1.msra.mxu0 %v2746
      %2795 = vmatprep.subr.mxu0 0.0
      %2796 = vmatpush1.msra.mxu0 %v2745
      %2797 = vmatprep.subr.mxu0 0.0
      %2798 = vmatpush1.msra.mxu0 %v2744
      %2799 = vmatprep.subr.mxu0 0.0
      %2800 = vmatpush2.msra.mxu0 0.0
      %2801 = vmatprep.subr.mxu0 0.0
      %2802 = vmatpush2.msra.mxu0 0.0
      %2803 = vmatprep.subr.mxu0 0.0
      %2804 = vmatpush2.msra.mxu0 0.0
      %2805 = vmatprep.subr.mxu0 0.0
      %2806 = vmatpush2.msra.mxu0 0.0
      %2807 = vmatprep.subr.mxu0 0.0
      %2808 = vmatpush2.msra.mxu0 0.0
      %2809 = vmatprep.subr.mxu0 0.0
      %2810 = vmatpush2.msra.mxu0 0.0
      %2811 = vmatprep.subr.mxu0 0.0
      %2812 = vmatpush2.msra.mxu0 0.0
      %2813 = vmatprep.subr.mxu0 0.0
      %2814 = vmatpush2.msra.mxu0 0.0
      %2815 = vmatprep.subr.mxu0 0.0
      %2816 = vmatpush2.msra.mxu0 0.0
      %2817 = vmatprep.subr.mxu0 0.0
      %2818 = vmatpush2.msra.mxu0 0.0
      %2819 = vmatprep.subr.mxu0 0.0
      %2820 = vmatpush2.msra.mxu0 0.0
      %2821 = vmatprep.subr.mxu0 0.0
      %2822 = vmatpush2.msra.mxu0 0.0
      %2823 = vmatprep.subr.mxu0 0.0
      %2824 = vmatpush2.msra.mxu0 0.0
      %2825 = vmatprep.subr.mxu0 0.0
      %2826 = vmatpush2.msra.mxu0 0.0
      %2827 = vmatprep.subr.mxu0 0.0
      %2828 = vmatpush2.msra.mxu0 0.0
      %2829 = vmatprep.subr.mxu0 0.0
      %2830 = vmatpush2.msra.mxu0 0.0
      %2831 = vmatprep.mubr.f32.mxu0 0.0
      %2832 = vmatmul.mubr.f32.gmra.mxu0 %v2680
      %v2833 = vpop.f32.mrf.mxu0
      %v2834 = vadd.f32 %v2765, %v2833
      %v2835 = vpop.f32.mrf.mxu0
      %2836 = vmatprep.mubr.f32.mxu0 0.0
      %2837 = vmatmul.mubr.f32.gmra.mxu0 %v2681
      %v2838 = vpop.f32.mrf.mxu0
      %v2839 = vadd.f32 %v2765, %v2838
      %v2840 = vpop.f32.mrf.mxu0
      %2841 = vmatprep.mubr.f32.mxu0 0.0
      %2842 = vmatmul.mubr.f32.gmra.mxu0 %v2682
      %v2843 = vpop.f32.mrf.mxu0
      %v2844 = vadd.f32 %v2765, %v2843
      %v2845 = vpop.f32.mrf.mxu0
      %2846 = vmatprep.mubr.f32.mxu0 0.0
      %2847 = vmatmul.mubr.f32.gmra.mxu0 %v2683
      %v2848 = vpop.f32.mrf.mxu0
      %v2849 = vadd.f32 %v2765, %v2848
      %v2850 = vpop.f32.mrf.mxu0
      %2851 = vmatprep.mubr.f32.mxu0 0.0
      %2852 = vmatmul.mubr.f32.gmra.mxu0 %v2684
      %v2853 = vpop.f32.mrf.mxu0
      %v2854 = vadd.f32 %v2765, %v2853
      %v2855 = vpop.f32.mrf.mxu0
      %2856 = vmatprep.mubr.f32.mxu0 0.0
      %2857 = vmatmul.mubr.f32.gmra.mxu0 %v2685
      %v2858 = vpop.f32.mrf.mxu0
      %v2859 = vadd.f32 %v2765, %v2858
      %v2860 = vpop.f32.mrf.mxu0
      %2861 = vmatprep.mubr.f32.mxu0 0.0
      %2862 = vmatmul.mubr.f32.gmra.mxu0 %v2686
      %v2863 = vpop.f32.mrf.mxu0
      %v2864 = vadd.f32 %v2765, %v2863
      %v2865 = vpop.f32.mrf.mxu0
      %2866 = vmatprep.mubr.f32.mxu0 0.0
      %2867 = vmatmul.mubr.f32.gmra.mxu0 %v2687
      %v2868 = vpop.f32.mrf.mxu0
      %v2869 = vadd.f32 %v2765, %v2868
      %v2870 = vpop.f32.mrf.mxu0
      %2871 = vmatprep.mubr.f32.mxu0 0.0
      %2872 = vmatmul.mubr.f32.gmra.mxu0 %v2688
      %v2873 = vpop.f32.mrf.mxu0
      %v2874 = vadd.f32 %v2765, %v2873
      %v2875 = vpop.f32.mrf.mxu0
      %2876 = vmatprep.mubr.f32.mxu0 0.0
      %2877 = vmatmul.mubr.f32.gmra.mxu0 %v2689
      %v2878 = vpop.f32.mrf.mxu0
      %v2879 = vadd.f32 %v2765, %v2878
      %v2880 = vpop.f32.mrf.mxu0
      %2881 = vmatprep.mubr.f32.mxu0 0.0
      %2882 = vmatmul.mubr.f32.gmra.mxu0 %v2690
      %v2883 = vpop.f32.mrf.mxu0
      %v2884 = vadd.f32 %v2765, %v2883
      %v2885 = vpop.f32.mrf.mxu0
      %2886 = vmatprep.mubr.f32.mxu0 0.0
      %2887 = vmatmul.mubr.f32.gmra.mxu0 %v2691
      %v2888 = vpop.f32.mrf.mxu0
      %v2889 = vadd.f32 %v2765, %v2888
      %v2890 = vpop.f32.mrf.mxu0
      %2891 = vmatprep.mubr.f32.mxu0 0.0
      %2892 = vmatmul.mubr.f32.gmra.mxu0 %v2692
      %v2893 = vpop.f32.mrf.mxu0
      %v2894 = vadd.f32 %v2765, %v2893
      %v2895 = vpop.f32.mrf.mxu0
      %2896 = vmatprep.mubr.f32.mxu0 0.0
      %2897 = vmatmul.mubr.f32.gmra.mxu0 %v2693
      %v2898 = vpop.f32.mrf.mxu0
      %v2899 = vadd.f32 %v2765, %v2898
      %v2900 = vpop.f32.mrf.mxu0
      %2901 = vmatprep.mubr.f32.mxu0 0.0
      %2902 = vmatmul.mubr.f32.gmra.mxu0 %v2694
      %v2903 = vpop.f32.mrf.mxu0
      %v2904 = vadd.f32 %v2765, %v2903
      %v2905 = vpop.f32.mrf.mxu0
      %2906 = vmatprep.mubr.f32.mxu0 0.0
      %2907 = vmatmul.mubr.f32.gmra.mxu0 %v2695
      %v2908 = vpop.f32.mrf.mxu0
      %v2909 = vadd.f32 %v2765, %v2908
      %v2910 = vpop.f32.mrf.mxu0
      %2911 = vmatprep.mubr.f32.mxu0 0.0
      %2912 = vmatmul.mubr.f32.gmra.mxu0 %v2696
      %v2913 = vpop.f32.mrf.mxu0
      %v2914 = vadd.f32 %v2765, %v2913
      %v2915 = vpop.f32.mrf.mxu0
      %2916 = vmatprep.mubr.f32.mxu0 0.0
      %2917 = vmatmul.mubr.f32.gmra.mxu0 %v2697
      %v2918 = vpop.f32.mrf.mxu0
      %v2919 = vadd.f32 %v2765, %v2918
      %v2920 = vpop.f32.mrf.mxu0
      %2921 = vmatprep.mubr.f32.mxu0 0.0
      %2922 = vmatmul.mubr.f32.gmra.mxu0 %v2698
      %v2923 = vpop.f32.mrf.mxu0
      %v2924 = vadd.f32 %v2765, %v2923
      %v2925 = vpop.f32.mrf.mxu0
      %2926 = vmatprep.mubr.f32.mxu0 0.0
      %2927 = vmatmul.mubr.f32.gmra.mxu0 %v2699
      %v2928 = vpop.f32.mrf.mxu0
      %v2929 = vadd.f32 %v2765, %v2928
      %v2930 = vpop.f32.mrf.mxu0
      %2931 = vmatprep.mubr.f32.mxu0 0.0
      %2932 = vmatmul.mubr.f32.gmra.mxu0 %v2700
      %v2933 = vpop.f32.mrf.mxu0
      %v2934 = vadd.f32 %v2765, %v2933
      %v2935 = vpop.f32.mrf.mxu0
      %2936 = vmatprep.mubr.f32.mxu0 0.0
      %2937 = vmatmul.mubr.f32.gmra.mxu0 %v2701
      %v2938 = vpop.f32.mrf.mxu0
      %v2939 = vadd.f32 %v2765, %v2938
      %v2940 = vpop.f32.mrf.mxu0
      %2941 = vmatprep.mubr.f32.mxu0 0.0
      %2942 = vmatmul.mubr.f32.gmra.mxu0 %v2702
      %v2943 = vpop.f32.mrf.mxu0
      %v2944 = vadd.f32 %v2765, %v2943
      %v2945 = vpop.f32.mrf.mxu0
      %2946 = vmatprep.mubr.f32.mxu0 0.0
      %2947 = vmatmul.mubr.f32.gmra.mxu0 %v2703
      %v2948 = vpop.f32.mrf.mxu0
      %v2949 = vadd.f32 %v2765, %v2948
      %v2950 = vpop.f32.mrf.mxu0
      %2951 = vmatprep.mubr.f32.mxu0 0.0
      %2952 = vmatmul.mubr.f32.gmra.mxu0 %v2704
      %v2953 = vpop.f32.mrf.mxu0
      %v2954 = vadd.f32 %v2765, %v2953
      %v2955 = vpop.f32.mrf.mxu0
      %2956 = vmatprep.mubr.f32.mxu0 0.0
      %2957 = vmatmul.mubr.f32.gmra.mxu0 %v2705
      %v2958 = vpop.f32.mrf.mxu0
      %v2959 = vadd.f32 %v2765, %v2958
      %v2960 = vpop.f32.mrf.mxu0
      %2961 = vmatprep.mubr.f32.mxu0 0.0
      %2962 = vmatmul.mubr.f32.gmra.mxu0 %v2706
      %v2963 = vpop.f32.mrf.mxu0
      %v2964 = vadd.f32 %v2765, %v2963
      %v2965 = vpop.f32.mrf.mxu0
      %2966 = vmatprep.mubr.f32.mxu0 0.0
      %2967 = vmatmul.mubr.f32.gmra.mxu0 %v2707
      %v2968 = vpop.f32.mrf.mxu0
      %v2969 = vadd.f32 %v2765, %v2968
      %v2970 = vpop.f32.mrf.mxu0
      %2971 = vmatprep.mubr.f32.mxu0 0.0
      %2972 = vmatmul.mubr.f32.gmra.mxu0 %v2708
      %v2973 = vpop.f32.mrf.mxu0
      %v2974 = vadd.f32 %v2765, %v2973
      %v2975 = vpop.f32.mrf.mxu0
      %2976 = vmatprep.mubr.f32.mxu0 0.0
      %2977 = vmatmul.mubr.f32.gmra.mxu0 %v2709
      %v2978 = vpop.f32.mrf.mxu0
      %v2979 = vadd.f32 %v2765, %v2978
      %v2980 = vpop.f32.mrf.mxu0
      %2981 = vmatprep.mubr.f32.mxu0 0.0
      %2982 = vmatmul.mubr.f32.gmra.mxu0 %v2710
      %v2983 = vpop.f32.mrf.mxu0
      %v2984 = vadd.f32 %v2765, %v2983
      %v2985 = vpop.f32.mrf.mxu0
      %2986 = vmatprep.mubr.f32.mxu0 0.0
      %2987 = vmatmul.mubr.f32.gmra.mxu0 %v2711
      %v2988 = vpop.f32.mrf.mxu0
      %v2989 = vadd.f32 %v2765, %v2988
      %v2990 = vpop.f32.mrf.mxu0
      %2991 = vmatprep.mubr.f32.mxu0 0.0
      %2992 = vmatmul.mubr.f32.gmra.mxu0 %v2712
      %v2993 = vpop.f32.mrf.mxu0
      %v2994 = vadd.f32 %v2765, %v2993
      %v2995 = vpop.f32.mrf.mxu0
      %2996 = vmatprep.mubr.f32.mxu0 0.0
      %2997 = vmatmul.mubr.f32.gmra.mxu0 %v2713
      %v2998 = vpop.f32.mrf.mxu0
      %v2999 = vadd.f32 %v2765, %v2998
      %v3000 = vpop.f32.mrf.mxu0
      %3001 = vmatprep.mubr.f32.mxu0 0.0
      %3002 = vmatmul.mubr.f32.gmra.mxu0 %v2714
      %v3003 = vpop.f32.mrf.mxu0
      %v3004 = vadd.f32 %v2765, %v3003
      %v3005 = vpop.f32.mrf.mxu0
      %3006 = vmatprep.mubr.f32.mxu0 0.0
      %3007 = vmatmul.mubr.f32.gmra.mxu0 %v2715
      %v3008 = vpop.f32.mrf.mxu0
      %v3009 = vadd.f32 %v2765, %v3008
      %v3010 = vpop.f32.mrf.mxu0
      %3011 = vmatprep.mubr.f32.mxu0 0.0
      %3012 = vmatmul.mubr.f32.gmra.mxu0 %v2716
      %v3013 = vpop.f32.mrf.mxu0
      %v3014 = vadd.f32 %v2765, %v3013
      %v3015 = vpop.f32.mrf.mxu0
      %3016 = vmatprep.mubr.f32.mxu0 0.0
      %3017 = vmatmul.mubr.f32.gmra.mxu0 %v2717
      %v3018 = vpop.f32.mrf.mxu0
      %v3019 = vadd.f32 %v2765, %v3018
      %v3020 = vpop.f32.mrf.mxu0
      %3021 = vmatprep.mubr.f32.mxu0 0.0
      %3022 = vmatmul.mubr.f32.gmra.mxu0 %v2718
      %v3023 = vpop.f32.mrf.mxu0
      %v3024 = vadd.f32 %v2765, %v3023
      %v3025 = vpop.f32.mrf.mxu0
      %3026 = vmatprep.mubr.f32.mxu0 0.0
      %3027 = vmatmul.mubr.f32.gmra.mxu0 %v2719
      %v3028 = vpop.f32.mrf.mxu0
      %v3029 = vadd.f32 %v2765, %v3028
      %v3030 = vpop.f32.mrf.mxu0
      %3031 = vmatprep.mubr.f32.mxu0 0.0
      %3032 = vmatmul.mubr.f32.gmra.mxu0 %v2720
      %v3033 = vpop.f32.mrf.mxu0
      %v3034 = vadd.f32 %v2765, %v3033
      %v3035 = vpop.f32.mrf.mxu0
      %3036 = vmatprep.mubr.f32.mxu0 0.0
      %3037 = vmatmul.mubr.f32.gmra.mxu0 %v2721
      %v3038 = vpop.f32.mrf.mxu0
      %v3039 = vadd.f32 %v2765, %v3038
      %v3040 = vpop.f32.mrf.mxu0
      %3041 = vmatprep.mubr.f32.mxu0 0.0
      %3042 = vmatmul.mubr.f32.gmra.mxu0 %v2722
      %v3043 = vpop.f32.mrf.mxu0
      %v3044 = vadd.f32 %v2765, %v3043
      %v3045 = vpop.f32.mrf.mxu0
      %3046 = vmatprep.mubr.f32.mxu0 0.0
      %3047 = vmatmul.mubr.f32.gmra.mxu0 %v2723
      %v3048 = vpop.f32.mrf.mxu0
      %v3049 = vadd.f32 %v2765, %v3048
      %v3050 = vpop.f32.mrf.mxu0
      %3051 = vmatprep.mubr.f32.mxu0 0.0
      %3052 = vmatmul.mubr.f32.gmra.mxu0 %v2724
      %v3053 = vpop.f32.mrf.mxu0
      %v3054 = vadd.f32 %v2765, %v3053
      %v3055 = vpop.f32.mrf.mxu0
      %3056 = vmatprep.mubr.f32.mxu0 0.0
      %3057 = vmatmul.mubr.f32.gmra.mxu0 %v2725
      %v3058 = vpop.f32.mrf.mxu0
      %v3059 = vadd.f32 %v2765, %v3058
      %v3060 = vpop.f32.mrf.mxu0
      %3061 = vmatprep.mubr.f32.mxu0 0.0
      %3062 = vmatmul.mubr.f32.gmra.mxu0 %v2726
      %v3063 = vpop.f32.mrf.mxu0
      %v3064 = vadd.f32 %v2765, %v3063
      %v3065 = vpop.f32.mrf.mxu0
      %3066 = vmatprep.mubr.f32.mxu0 0.0
      %3067 = vmatmul.mubr.f32.gmra.mxu0 %v2727
      %v3068 = vpop.f32.mrf.mxu0
      %v3069 = vadd.f32 %v2765, %v3068
      %v3070 = vpop.f32.mrf.mxu0
      %3071 = vmatprep.mubr.f32.mxu0 0.0
      %3072 = vmatmul.mubr.f32.gmra.mxu0 %v2728
      %v3073 = vpop.f32.mrf.mxu0
      %v3074 = vadd.f32 %v2765, %v3073
      %v3075 = vpop.f32.mrf.mxu0
      %3076 = vmatprep.mubr.f32.mxu0 0.0
      %3077 = vmatmul.mubr.f32.gmra.mxu0 %v2729
      %v3078 = vpop.f32.mrf.mxu0
      %v3079 = vadd.f32 %v2765, %v3078
      %v3080 = vpop.f32.mrf.mxu0
      %3081 = vmatprep.mubr.f32.mxu0 0.0
      %3082 = vmatmul.mubr.f32.gmra.mxu0 %v2730
      %v3083 = vpop.f32.mrf.mxu0
      %v3084 = vadd.f32 %v2765, %v3083
      %v3085 = vpop.f32.mrf.mxu0
      %3086 = vmatprep.mubr.f32.mxu0 0.0
      %3087 = vmatmul.mubr.f32.gmra.mxu0 %v2731
      %v3088 = vpop.f32.mrf.mxu0
      %v3089 = vadd.f32 %v2765, %v3088
      %v3090 = vpop.f32.mrf.mxu0
      %3091 = vmatprep.mubr.f32.mxu0 0.0
      %3092 = vmatmul.mubr.f32.gmra.mxu0 %v2732
      %v3093 = vpop.f32.mrf.mxu0
      %v3094 = vadd.f32 %v2765, %v3093
      %v3095 = vpop.f32.mrf.mxu0
      %3096 = vmatprep.mubr.f32.mxu0 0.0
      %3097 = vmatmul.mubr.f32.gmra.mxu0 %v2733
      %v3098 = vpop.f32.mrf.mxu0
      %v3099 = vadd.f32 %v2765, %v3098
      %v3100 = vpop.f32.mrf.mxu0
      %3101 = vmatprep.mubr.f32.mxu0 0.0
      %3102 = vmatmul.mubr.f32.gmra.mxu0 %v2734
      %v3103 = vpop.f32.mrf.mxu0
      %v3104 = vadd.f32 %v2765, %v3103
      %v3105 = vpop.f32.mrf.mxu0
      %3106 = vmatprep.mubr.f32.mxu0 0.0
      %3107 = vmatmul.mubr.f32.gmra.mxu0 %v2735
      %v3108 = vpop.f32.mrf.mxu0
      %v3109 = vadd.f32 %v2765, %v3108
      %v3110 = vpop.f32.mrf.mxu0
      %3111 = vmatprep.mubr.f32.mxu0 0.0
      %3112 = vmatmul.mubr.f32.gmra.mxu0 %v2736
      %v3113 = vpop.f32.mrf.mxu0
      %v3114 = vadd.f32 %v2765, %v3113
      %v3115 = vpop.f32.mrf.mxu0
      %3116 = vmatprep.mubr.f32.mxu0 0.0
      %3117 = vmatmul.mubr.f32.gmra.mxu0 %v2737
      %v3118 = vpop.f32.mrf.mxu0
      %v3119 = vadd.f32 %v2765, %v3118
      %v3120 = vpop.f32.mrf.mxu0
      %3121 = vmatprep.mubr.f32.mxu0 0.0
      %3122 = vmatmul.mubr.f32.gmra.mxu0 %v2738
      %v3123 = vpop.f32.mrf.mxu0
      %v3124 = vadd.f32 %v2765, %v3123
      %v3125 = vpop.f32.mrf.mxu0
      %3126 = vmatprep.mubr.f32.mxu0 0.0
      %3127 = vmatmul.mubr.f32.gmra.mxu0 %v2739
      %v3128 = vpop.f32.mrf.mxu0
      %v3129 = vadd.f32 %v2765, %v3128
      %v3130 = vpop.f32.mrf.mxu0
      %3131 = vmatprep.mubr.f32.mxu0 0.0
      %3132 = vmatmul.mubr.f32.gmra.mxu0 %v2740
      %v3133 = vpop.f32.mrf.mxu0
      %v3134 = vadd.f32 %v2765, %v3133
      %v3135 = vpop.f32.mrf.mxu0
      %3136 = vmatprep.mubr.f32.mxu0 0.0
      %3137 = vmatmul.mubr.f32.gmra.mxu0 %v2741
      %v3138 = vpop.f32.mrf.mxu0
      %v3139 = vadd.f32 %v2765, %v3138
      %v3140 = vpop.f32.mrf.mxu0
      %3141 = vmatprep.mubr.f32.mxu0 0.0
      %3142 = vmatmul.mubr.f32.gmra.mxu0 %v2742
      %v3143 = vpop.f32.mrf.mxu0
      %v3144 = vadd.f32 %v2765, %v3143
      %v3145 = vpop.f32.mrf.mxu0
      %3146 = vmatprep.mubr.f32.mxu0 0.0
      %3147 = vmatmul.mubr.f32.gmra.mxu0 %v2743
      %v3148 = vpop.f32.mrf.mxu0
      %v3149 = vadd.f32 %v2765, %v3148
      %v3150 = vpop.f32.mrf.mxu0
      %3151 = vdwg.mxu0
      %3152 = vmax.xlane.f32.xlu0 %v2834
      %v3153 = vpop.xlane.xlu0 %3152
      %3154 = vmax.xlane.f32.xlu0 %v2839
      %v3155 = vpop.xlane.xlu0 %3154
      %3156 = vmax.xlane.f32.xlu0 %v2844
      %v3157 = vpop.xlane.xlu0 %3156
      %3158 = vmax.xlane.f32.xlu0 %v2849
      %v3159 = vpop.xlane.xlu0 %3158
      %3160 = vmax.xlane.f32.xlu0 %v2854
      %v3161 = vpop.xlane.xlu0 %3160
      %3162 = vmax.xlane.f32.xlu0 %v2859
      %v3163 = vpop.xlane.xlu0 %3162
      %3164 = vmax.xlane.f32.xlu0 %v2864
      %v3165 = vpop.xlane.xlu0 %3164
      %3166 = vmax.xlane.f32.xlu0 %v2869
      %v3167 = vpop.xlane.xlu0 %3166
      %3168 = vmax.xlane.f32.xlu0 %v2874
      %v3169 = vpop.xlane.xlu0 %3168
      %3170 = vmax.xlane.f32.xlu0 %v2879
      %v3171 = vpop.xlane.xlu0 %3170
      %3172 = vmax.xlane.f32.xlu0 %v2884
      %v3173 = vpop.xlane.xlu0 %3172
      %3174 = vmax.xlane.f32.xlu0 %v2889
      %v3175 = vpop.xlane.xlu0 %3174
      %3176 = vmax.xlane.f32.xlu0 %v2894
      %v3177 = vpop.xlane.xlu0 %3176
      %3178 = vmax.xlane.f32.xlu0 %v2899
      %v3179 = vpop.xlane.xlu0 %3178
      %3180 = vmax.xlane.f32.xlu0 %v2904
      %v3181 = vpop.xlane.xlu0 %3180
      %3182 = vmax.xlane.f32.xlu0 %v2909
      %v3183 = vpop.xlane.xlu0 %3182
      %3184 = vmax.xlane.f32.xlu0 %v2914
      %v3185 = vpop.xlane.xlu0 %3184
      %3186 = vmax.xlane.f32.xlu0 %v2919
      %v3187 = vpop.xlane.xlu0 %3186
      %3188 = vmax.xlane.f32.xlu0 %v2924
      %v3189 = vpop.xlane.xlu0 %3188
      %3190 = vmax.xlane.f32.xlu0 %v2929
      %v3191 = vpop.xlane.xlu0 %3190
      %3192 = vmax.xlane.f32.xlu0 %v2934
      %v3193 = vpop.xlane.xlu0 %3192
      %3194 = vmax.xlane.f32.xlu0 %v2939
      %v3195 = vpop.xlane.xlu0 %3194
      %3196 = vmax.xlane.f32.xlu0 %v2944
      %v3197 = vpop.xlane.xlu0 %3196
      %3198 = vmax.xlane.f32.xlu0 %v2949
      %v3199 = vpop.xlane.xlu0 %3198
      %3200 = vmax.xlane.f32.xlu0 %v2954
      %v3201 = vpop.xlane.xlu0 %3200
      %3202 = vmax.xlane.f32.xlu0 %v2959
      %v3203 = vpop.xlane.xlu0 %3202
      %3204 = vmax.xlane.f32.xlu0 %v2964
      %v3205 = vpop.xlane.xlu0 %3204
      %3206 = vmax.xlane.f32.xlu0 %v2969
      %v3207 = vpop.xlane.xlu0 %3206
      %3208 = vmax.xlane.f32.xlu0 %v2974
      %v3209 = vpop.xlane.xlu0 %3208
      %3210 = vmax.xlane.f32.xlu0 %v2979
      %v3211 = vpop.xlane.xlu0 %3210
      %3212 = vmax.xlane.f32.xlu0 %v2984
      %v3213 = vpop.xlane.xlu0 %3212
      %3214 = vmax.xlane.f32.xlu0 %v2989
      %v3215 = vpop.xlane.xlu0 %3214
      %3216 = vmax.xlane.f32.xlu0 %v2994
      %v3217 = vpop.xlane.xlu0 %3216
      %3218 = vmax.xlane.f32.xlu0 %v2999
      %v3219 = vpop.xlane.xlu0 %3218
      %3220 = vmax.xlane.f32.xlu0 %v3004
      %v3221 = vpop.xlane.xlu0 %3220
      %3222 = vmax.xlane.f32.xlu0 %v3009
      %v3223 = vpop.xlane.xlu0 %3222
      %3224 = vmax.xlane.f32.xlu0 %v3014
      %v3225 = vpop.xlane.xlu0 %3224
      %3226 = vmax.xlane.f32.xlu0 %v3019
      %v3227 = vpop.xlane.xlu0 %3226
      %3228 = vmax.xlane.f32.xlu0 %v3024
      %v3229 = vpop.xlane.xlu0 %3228
      %3230 = vmax.xlane.f32.xlu0 %v3029
      %v3231 = vpop.xlane.xlu0 %3230
      %3232 = vmax.xlane.f32.xlu0 %v3034
      %v3233 = vpop.xlane.xlu0 %3232
      %3234 = vmax.xlane.f32.xlu0 %v3039
      %v3235 = vpop.xlane.xlu0 %3234
      %3236 = vmax.xlane.f32.xlu0 %v3044
      %v3237 = vpop.xlane.xlu0 %3236
      %3238 = vmax.xlane.f32.xlu0 %v3049
      %v3239 = vpop.xlane.xlu0 %3238
      %3240 = vmax.xlane.f32.xlu0 %v3054
      %v3241 = vpop.xlane.xlu0 %3240
      %3242 = vmax.xlane.f32.xlu0 %v3059
      %v3243 = vpop.xlane.xlu0 %3242
      %3244 = vmax.xlane.f32.xlu0 %v3064
      %v3245 = vpop.xlane.xlu0 %3244
      %3246 = vmax.xlane.f32.xlu0 %v3069
      %v3247 = vpop.xlane.xlu0 %3246
      %3248 = vmax.xlane.f32.xlu0 %v3074
      %v3249 = vpop.xlane.xlu0 %3248
      %3250 = vmax.xlane.f32.xlu0 %v3079
      %v3251 = vpop.xlane.xlu0 %3250
      %3252 = vmax.xlane.f32.xlu0 %v3084
      %v3253 = vpop.xlane.xlu0 %3252
      %3254 = vmax.xlane.f32.xlu0 %v3089
      %v3255 = vpop.xlane.xlu0 %3254
      %3256 = vmax.xlane.f32.xlu0 %v3094
      %v3257 = vpop.xlane.xlu0 %3256
      %3258 = vmax.xlane.f32.xlu0 %v3099
      %v3259 = vpop.xlane.xlu0 %3258
      %3260 = vmax.xlane.f32.xlu0 %v3104
      %v3261 = vpop.xlane.xlu0 %3260
      %3262 = vmax.xlane.f32.xlu0 %v3109
      %v3263 = vpop.xlane.xlu0 %3262
      %3264 = vmax.xlane.f32.xlu0 %v3114
      %v3265 = vpop.xlane.xlu0 %3264
      %3266 = vmax.xlane.f32.xlu0 %v3119
      %v3267 = vpop.xlane.xlu0 %3266
      %3268 = vmax.xlane.f32.xlu0 %v3124
      %v3269 = vpop.xlane.xlu0 %3268
      %3270 = vmax.xlane.f32.xlu0 %v3129
      %v3271 = vpop.xlane.xlu0 %3270
      %3272 = vmax.xlane.f32.xlu0 %v3134
      %v3273 = vpop.xlane.xlu0 %3272
      %3274 = vmax.xlane.f32.xlu0 %v3139
      %v3275 = vpop.xlane.xlu0 %3274
      %3276 = vmax.xlane.f32.xlu0 %v3144
      %v3277 = vpop.xlane.xlu0 %3276
      %3278 = vmax.xlane.f32.xlu0 %v3149
      %v3279 = vpop.xlane.xlu0 %3278
      %v3280 = vsub.f32 %v2834, %v3153
      %v3281 = vsub.f32 %v2839, %v3155
      %v3282 = vsub.f32 %v2844, %v3157
      %v3283 = vsub.f32 %v2849, %v3159
      %v3284 = vsub.f32 %v2854, %v3161
      %v3285 = vsub.f32 %v2859, %v3163
      %v3286 = vsub.f32 %v2864, %v3165
      %v3287 = vsub.f32 %v2869, %v3167
      %v3288 = vsub.f32 %v2874, %v3169
      %v3289 = vsub.f32 %v2879, %v3171
      %v3290 = vsub.f32 %v2884, %v3173
      %v3291 = vsub.f32 %v2889, %v3175
      %v3292 = vsub.f32 %v2894, %v3177
      %v3293 = vsub.f32 %v2899, %v3179
      %v3294 = vsub.f32 %v2904, %v3181
      %v3295 = vsub.f32 %v2909, %v3183
      %v3296 = vsub.f32 %v2914, %v3185
      %v3297 = vsub.f32 %v2919, %v3187
      %v3298 = vsub.f32 %v2924, %v3189
      %v3299 = vsub.f32 %v2929, %v3191
      %v3300 = vsub.f32 %v2934, %v3193
      %v3301 = vsub.f32 %v2939, %v3195
      %v3302 = vsub.f32 %v2944, %v3197
      %v3303 = vsub.f32 %v2949, %v3199
      %v3304 = vsub.f32 %v2954, %v3201
      %v3305 = vsub.f32 %v2959, %v3203
      %v3306 = vsub.f32 %v2964, %v3205
      %v3307 = vsub.f32 %v2969, %v3207
      %v3308 = vsub.f32 %v2974, %v3209
      %v3309 = vsub.f32 %v2979, %v3211
      %v3310 = vsub.f32 %v2984, %v3213
      %v3311 = vsub.f32 %v2989, %v3215
      %v3312 = vsub.f32 %v2994, %v3217
      %v3313 = vsub.f32 %v2999, %v3219
      %v3314 = vsub.f32 %v3004, %v3221
      %v3315 = vsub.f32 %v3009, %v3223
      %v3316 = vsub.f32 %v3014, %v3225
      %v3317 = vsub.f32 %v3019, %v3227
      %v3318 = vsub.f32 %v3024, %v3229
      %v3319 = vsub.f32 %v3029, %v3231
      %v3320 = vsub.f32 %v3034, %v3233
      %v3321 = vsub.f32 %v3039, %v3235
      %v3322 = vsub.f32 %v3044, %v3237
      %v3323 = vsub.f32 %v3049, %v3239
      %v3324 = vsub.f32 %v3054, %v3241
      %v3325 = vsub.f32 %v3059, %v3243
      %v3326 = vsub.f32 %v3064, %v3245
      %v3327 = vsub.f32 %v3069, %v3247
      %v3328 = vsub.f32 %v3074, %v3249
      %v3329 = vsub.f32 %v3079, %v3251
      %v3330 = vsub.f32 %v3084, %v3253
      %v3331 = vsub.f32 %v3089, %v3255
      %v3332 = vsub.f32 %v3094, %v3257
      %v3333 = vsub.f32 %v3099, %v3259
      %v3334 = vsub.f32 %v3104, %v3261
      %v3335 = vsub.f32 %v3109, %v3263
      %v3336 = vsub.f32 %v3114, %v3265
      %v3337 = vsub.f32 %v3119, %v3267
      %v3338 = vsub.f32 %v3124, %v3269
      %v3339 = vsub.f32 %v3129, %v3271
      %v3340 = vsub.f32 %v3134, %v3273
      %v3341 = vsub.f32 %v3139, %v3275
      %v3342 = vsub.f32 %v3144, %v3277
      %v3343 = vsub.f32 %v3149, %v3279
      %v3344 = vmul.f32 %v3280, 1.442695
      %v3345 = vpow.pop %v3344
      %v3346 = vmul.f32 %v3281, 1.442695
      %v3347 = vpow.pop %v3346
      %v3348 = vmul.f32 %v3282, 1.442695
      %v3349 = vpow.pop %v3348
      %v3350 = vmul.f32 %v3283, 1.442695
      %v3351 = vpow.pop %v3350
      %v3352 = vmul.f32 %v3284, 1.442695
      %v3353 = vpow.pop %v3352
      %v3354 = vmul.f32 %v3285, 1.442695
      %v3355 = vpow.pop %v3354
      %v3356 = vmul.f32 %v3286, 1.442695
      %v3357 = vpow.pop %v3356
      %v3358 = vmul.f32 %v3287, 1.442695
      %v3359 = vpow.pop %v3358
      %v3360 = vmul.f32 %v3288, 1.442695
      %v3361 = vpow.pop %v3360
      %v3362 = vmul.f32 %v3289, 1.442695
      %v3363 = vpow.pop %v3362
      %v3364 = vmul.f32 %v3290, 1.442695
      %v3365 = vpow.pop %v3364
      %v3366 = vmul.f32 %v3291, 1.442695
      %v3367 = vpow.pop %v3366
      %v3368 = vmul.f32 %v3292, 1.442695
      %v3369 = vpow.pop %v3368
      %v3370 = vmul.f32 %v3293, 1.442695
      %v3371 = vpow.pop %v3370
      %v3372 = vmul.f32 %v3294, 1.442695
      %v3373 = vpow.pop %v3372
      %v3374 = vmul.f32 %v3295, 1.442695
      %v3375 = vpow.pop %v3374
      %v3376 = vmul.f32 %v3296, 1.442695
      %v3377 = vpow.pop %v3376
      %v3378 = vmul.f32 %v3297, 1.442695
      %v3379 = vpow.pop %v3378
      %v3380 = vmul.f32 %v3298, 1.442695
      %v3381 = vpow.pop %v3380
      %v3382 = vmul.f32 %v3299, 1.442695
      %v3383 = vpow.pop %v3382
      %v3384 = vmul.f32 %v3300, 1.442695
      %v3385 = vpow.pop %v3384
      %v3386 = vmul.f32 %v3301, 1.442695
      %v3387 = vpow.pop %v3386
      %v3388 = vmul.f32 %v3302, 1.442695
      %v3389 = vpow.pop %v3388
      %v3390 = vmul.f32 %v3303, 1.442695
      %v3391 = vpow.pop %v3390
      %v3392 = vmul.f32 %v3304, 1.442695
      %v3393 = vpow.pop %v3392
      %v3394 = vmul.f32 %v3305, 1.442695
      %v3395 = vpow.pop %v3394
      %v3396 = vmul.f32 %v3306, 1.442695
      %v3397 = vpow.pop %v3396
      %v3398 = vmul.f32 %v3307, 1.442695
      %v3399 = vpow.pop %v3398
      %v3400 = vmul.f32 %v3308, 1.442695
      %v3401 = vpow.pop %v3400
      %v3402 = vmul.f32 %v3309, 1.442695
      %v3403 = vpow.pop %v3402
      %v3404 = vmul.f32 %v3310, 1.442695
      %v3405 = vpow.pop %v3404
      %v3406 = vmul.f32 %v3311, 1.442695
      %v3407 = vpow.pop %v3406
      %v3408 = vmul.f32 %v3312, 1.442695
      %v3409 = vpow.pop %v3408
      %v3410 = vmul.f32 %v3313, 1.442695
      %v3411 = vpow.pop %v3410
      %v3412 = vmul.f32 %v3314, 1.442695
      %v3413 = vpow.pop %v3412
      %v3414 = vmul.f32 %v3315, 1.442695
      %v3415 = vpow.pop %v3414
      %v3416 = vmul.f32 %v3316, 1.442695
      %v3417 = vpow.pop %v3416
      %v3418 = vmul.f32 %v3317, 1.442695
      %v3419 = vpow.pop %v3418
      %v3420 = vmul.f32 %v3318, 1.442695
      %v3421 = vpow.pop %v3420
      %v3422 = vmul.f32 %v3319, 1.442695
      %v3423 = vpow.pop %v3422
      %v3424 = vmul.f32 %v3320, 1.442695
      %v3425 = vpow.pop %v3424
      %v3426 = vmul.f32 %v3321, 1.442695
      %v3427 = vpow.pop %v3426
      %v3428 = vmul.f32 %v3322, 1.442695
      %v3429 = vpow.pop %v3428
      %v3430 = vmul.f32 %v3323, 1.442695
      %v3431 = vpow.pop %v3430
      %v3432 = vmul.f32 %v3324, 1.442695
      %v3433 = vpow.pop %v3432
      %v3434 = vmul.f32 %v3325, 1.442695
      %v3435 = vpow.pop %v3434
      %v3436 = vmul.f32 %v3326, 1.442695
      %v3437 = vpow.pop %v3436
      %v3438 = vmul.f32 %v3327, 1.442695
      %v3439 = vpow.pop %v3438
      %v3440 = vmul.f32 %v3328, 1.442695
      %v3441 = vpow.pop %v3440
      %v3442 = vmul.f32 %v3329, 1.442695
      %v3443 = vpow.pop %v3442
      %v3444 = vmul.f32 %v3330, 1.442695
      %v3445 = vpow.pop %v3444
      %v3446 = vmul.f32 %v3331, 1.442695
      %v3447 = vpow.pop %v3446
      %v3448 = vmul.f32 %v3332, 1.442695
      %v3449 = vpow.pop %v3448
      %v3450 = vmul.f32 %v3333, 1.442695
      %v3451 = vpow.pop %v3450
      %v3452 = vmul.f32 %v3334, 1.442695
      %v3453 = vpow.pop %v3452
      %v3454 = vmul.f32 %v3335, 1.442695
      %v3455 = vpow.pop %v3454
      %v3456 = vmul.f32 %v3336, 1.442695
      %v3457 = vpow.pop %v3456
      %v3458 = vmul.f32 %v3337, 1.442695
      %v3459 = vpow.pop %v3458
      %v3460 = vmul.f32 %v3338, 1.442695
      %v3461 = vpow.pop %v3460
      %v3462 = vmul.f32 %v3339, 1.442695
      %v3463 = vpow.pop %v3462
      %v3464 = vmul.f32 %v3340, 1.442695
      %v3465 = vpow.pop %v3464
      %v3466 = vmul.f32 %v3341, 1.442695
      %v3467 = vpow.pop %v3466
      %v3468 = vmul.f32 %v3342, 1.442695
      %v3469 = vpow.pop %v3468
      %v3470 = vmul.f32 %v3343, 1.442695
      %v3471 = vpow.pop %v3470
      %v3472 = vmul.f32 %v2680, %v3345
      %v3473 = vmul.f32 %v2681, %v3347
      %v3474 = vmul.f32 %v2682, %v3349
      %v3475 = vmul.f32 %v2683, %v3351
      %v3476 = vmul.f32 %v2684, %v3353
      %v3477 = vmul.f32 %v2685, %v3355
      %v3478 = vmul.f32 %v2686, %v3357
      %v3479 = vmul.f32 %v2687, %v3359
      %v3480 = vmul.f32 %v2688, %v3361
      %v3481 = vmul.f32 %v2689, %v3363
      %v3482 = vmul.f32 %v2690, %v3365
      %v3483 = vmul.f32 %v2691, %v3367
      %v3484 = vmul.f32 %v2692, %v3369
      %v3485 = vmul.f32 %v2693, %v3371
      %v3486 = vmul.f32 %v2694, %v3373
      %v3487 = vmul.f32 %v2695, %v3375
      %v3488 = vmul.f32 %v2696, %v3377
      %v3489 = vmul.f32 %v2697, %v3379
      %v3490 = vmul.f32 %v2698, %v3381
      %v3491 = vmul.f32 %v2699, %v3383
      %v3492 = vmul.f32 %v2700, %v3385
      %v3493 = vmul.f32 %v2701, %v3387
      %v3494 = vmul.f32 %v2702, %v3389
      %v3495 = vmul.f32 %v2703, %v3391
      %v3496 = vmul.f32 %v2704, %v3393
      %v3497 = vmul.f32 %v2705, %v3395
      %v3498 = vmul.f32 %v2706, %v3397
      %v3499 = vmul.f32 %v2707, %v3399
      %v3500 = vmul.f32 %v2708, %v3401
      %v3501 = vmul.f32 %v2709, %v3403
      %v3502 = vmul.f32 %v2710, %v3405
      %v3503 = vmul.f32 %v2711, %v3407
      %v3504 = vmul.f32 %v2712, %v3409
      %v3505 = vmul.f32 %v2713, %v3411
      %v3506 = vmul.f32 %v2714, %v3413
      %v3507 = vmul.f32 %v2715, %v3415
      %v3508 = vmul.f32 %v2716, %v3417
      %v3509 = vmul.f32 %v2717, %v3419
      %v3510 = vmul.f32 %v2718, %v3421
      %v3511 = vmul.f32 %v2719, %v3423
      %v3512 = vmul.f32 %v2720, %v3425
      %v3513 = vmul.f32 %v2721, %v3427
      %v3514 = vmul.f32 %v2722, %v3429
      %v3515 = vmul.f32 %v2723, %v3431
      %v3516 = vmul.f32 %v2724, %v3433
      %v3517 = vmul.f32 %v2725, %v3435
      %v3518 = vmul.f32 %v2726, %v3437
      %v3519 = vmul.f32 %v2727, %v3439
      %v3520 = vmul.f32 %v2728, %v3441
      %v3521 = vmul.f32 %v2729, %v3443
      %v3522 = vmul.f32 %v2730, %v3445
      %v3523 = vmul.f32 %v2731, %v3447
      %v3524 = vmul.f32 %v2732, %v3449
      %v3525 = vmul.f32 %v2733, %v3451
      %v3526 = vmul.f32 %v2734, %v3453
      %v3527 = vmul.f32 %v2735, %v3455
      %v3528 = vmul.f32 %v2736, %v3457
      %v3529 = vmul.f32 %v2737, %v3459
      %v3530 = vmul.f32 %v2738, %v3461
      %v3531 = vmul.f32 %v2739, %v3463
      %v3532 = vmul.f32 %v2740, %v3465
      %v3533 = vmul.f32 %v2741, %v3467
      %v3534 = vmul.f32 %v2742, %v3469
      %v3535 = vmul.f32 %v2743, %v3471
      %3536 = vadd.xlane.f32.xlu0 %v3472
      %v3537 = vpop.xlane.xlu0 %3536
      %3538 = vadd.xlane.f32.xlu0 %v3473
      %v3539 = vpop.xlane.xlu0 %3538
      %3540 = vadd.xlane.f32.xlu0 %v3474
      %v3541 = vpop.xlane.xlu0 %3540
      %3542 = vadd.xlane.f32.xlu0 %v3475
      %v3543 = vpop.xlane.xlu0 %3542
      %3544 = vadd.xlane.f32.xlu0 %v3476
      %v3545 = vpop.xlane.xlu0 %3544
      %3546 = vadd.xlane.f32.xlu0 %v3477
      %v3547 = vpop.xlane.xlu0 %3546
      %3548 = vadd.xlane.f32.xlu0 %v3478
      %v3549 = vpop.xlane.xlu0 %3548
      %3550 = vadd.xlane.f32.xlu0 %v3479
      %v3551 = vpop.xlane.xlu0 %3550
      %3552 = vadd.xlane.f32.xlu0 %v3480
      %v3553 = vpop.xlane.xlu0 %3552
      %3554 = vadd.xlane.f32.xlu0 %v3481
      %v3555 = vpop.xlane.xlu0 %3554
      %3556 = vadd.xlane.f32.xlu0 %v3482
      %v3557 = vpop.xlane.xlu0 %3556
      %3558 = vadd.xlane.f32.xlu0 %v3483
      %v3559 = vpop.xlane.xlu0 %3558
      %3560 = vadd.xlane.f32.xlu0 %v3484
      %v3561 = vpop.xlane.xlu0 %3560
      %3562 = vadd.xlane.f32.xlu0 %v3485
      %v3563 = vpop.xlane.xlu0 %3562
      %3564 = vadd.xlane.f32.xlu0 %v3486
      %v3565 = vpop.xlane.xlu0 %3564
      %3566 = vadd.xlane.f32.xlu0 %v3487
      %v3567 = vpop.xlane.xlu0 %3566
      %3568 = vadd.xlane.f32.xlu0 %v3488
      %v3569 = vpop.xlane.xlu0 %3568
      %3570 = vadd.xlane.f32.xlu0 %v3489
      %v3571 = vpop.xlane.xlu0 %3570
      %3572 = vadd.xlane.f32.xlu0 %v3490
      %v3573 = vpop.xlane.xlu0 %3572
      %3574 = vadd.xlane.f32.xlu0 %v3491
      %v3575 = vpop.xlane.xlu0 %3574
      %3576 = vadd.xlane.f32.xlu0 %v3492
      %v3577 = vpop.xlane.xlu0 %3576
      %3578 = vadd.xlane.f32.xlu0 %v3493
      %v3579 = vpop.xlane.xlu0 %3578
      %3580 = vadd.xlane.f32.xlu0 %v3494
      %v3581 = vpop.xlane.xlu0 %3580
      %3582 = vadd.xlane.f32.xlu0 %v3495
      %v3583 = vpop.xlane.xlu0 %3582
      %3584 = vadd.xlane.f32.xlu0 %v3496
      %v3585 = vpop.xlane.xlu0 %3584
      %3586 = vadd.xlane.f32.xlu0 %v3497
      %v3587 = vpop.xlane.xlu0 %3586
      %3588 = vadd.xlane.f32.xlu0 %v3498
      %v3589 = vpop.xlane.xlu0 %3588
      %3590 = vadd.xlane.f32.xlu0 %v3499
      %v3591 = vpop.xlane.xlu0 %3590
      %3592 = vadd.xlane.f32.xlu0 %v3500
      %v3593 = vpop.xlane.xlu0 %3592
      %3594 = vadd.xlane.f32.xlu0 %v3501
      %v3595 = vpop.xlane.xlu0 %3594
      %3596 = vadd.xlane.f32.xlu0 %v3502
      %v3597 = vpop.xlane.xlu0 %3596
      %3598 = vadd.xlane.f32.xlu0 %v3503
      %v3599 = vpop.xlane.xlu0 %3598
      %3600 = vadd.xlane.f32.xlu0 %v3504
      %v3601 = vpop.xlane.xlu0 %3600
      %3602 = vadd.xlane.f32.xlu0 %v3505
      %v3603 = vpop.xlane.xlu0 %3602
      %3604 = vadd.xlane.f32.xlu0 %v3506
      %v3605 = vpop.xlane.xlu0 %3604
      %3606 = vadd.xlane.f32.xlu0 %v3507
      %v3607 = vpop.xlane.xlu0 %3606
      %3608 = vadd.xlane.f32.xlu0 %v3508
      %v3609 = vpop.xlane.xlu0 %3608
      %3610 = vadd.xlane.f32.xlu0 %v3509
      %v3611 = vpop.xlane.xlu0 %3610
      %3612 = vadd.xlane.f32.xlu0 %v3510
      %v3613 = vpop.xlane.xlu0 %3612
      %3614 = vadd.xlane.f32.xlu0 %v3511
      %v3615 = vpop.xlane.xlu0 %3614
      %3616 = vadd.xlane.f32.xlu0 %v3512
      %v3617 = vpop.xlane.xlu0 %3616
      %3618 = vadd.xlane.f32.xlu0 %v3513
      %v3619 = vpop.xlane.xlu0 %3618
      %3620 = vadd.xlane.f32.xlu0 %v3514
      %v3621 = vpop.xlane.xlu0 %3620
      %3622 = vadd.xlane.f32.xlu0 %v3515
      %v3623 = vpop.xlane.xlu0 %3622
      %3624 = vadd.xlane.f32.xlu0 %v3516
      %v3625 = vpop.xlane.xlu0 %3624
      %3626 = vadd.xlane.f32.xlu0 %v3517
      %v3627 = vpop.xlane.xlu0 %3626
      %3628 = vadd.xlane.f32.xlu0 %v3518
      %v3629 = vpop.xlane.xlu0 %3628
      %3630 = vadd.xlane.f32.xlu0 %v3519
      %v3631 = vpop.xlane.xlu0 %3630
      %3632 = vadd.xlane.f32.xlu0 %v3520
      %v3633 = vpop.xlane.xlu0 %3632
      %3634 = vadd.xlane.f32.xlu0 %v3521
      %v3635 = vpop.xlane.xlu0 %3634
      %3636 = vadd.xlane.f32.xlu0 %v3522
      %v3637 = vpop.xlane.xlu0 %3636
      %3638 = vadd.xlane.f32.xlu0 %v3523
      %v3639 = vpop.xlane.xlu0 %3638
      %3640 = vadd.xlane.f32.xlu0 %v3524
      %v3641 = vpop.xlane.xlu0 %3640
      %3642 = vadd.xlane.f32.xlu0 %v3525
      %v3643 = vpop.xlane.xlu0 %3642
      %3644 = vadd.xlane.f32.xlu0 %v3526
      %v3645 = vpop.xlane.xlu0 %3644
      %3646 = vadd.xlane.f32.xlu0 %v3527
      %v3647 = vpop.xlane.xlu0 %3646
      %3648 = vadd.xlane.f32.xlu0 %v3528
      %v3649 = vpop.xlane.xlu0 %3648
      %3650 = vadd.xlane.f32.xlu0 %v3529
      %v3651 = vpop.xlane.xlu0 %3650
      %3652 = vadd.xlane.f32.xlu0 %v3530
      %v3653 = vpop.xlane.xlu0 %3652
      %3654 = vadd.xlane.f32.xlu0 %v3531
      %v3655 = vpop.xlane.xlu0 %3654
      %3656 = vadd.xlane.f32.xlu0 %v3532
      %v3657 = vpop.xlane.xlu0 %3656
      %3658 = vadd.xlane.f32.xlu0 %v3533
      %v3659 = vpop.xlane.xlu0 %3658
      %3660 = vadd.xlane.f32.xlu0 %v3534
      %v3661 = vpop.xlane.xlu0 %3660
      %3662 = vadd.xlane.f32.xlu0 %v3535
      %v3663 = vpop.xlane.xlu0 %3662
      %3664 = vadd.xlane.f32.xlu0 %v3345
      %v3665 = vpop.xlane.xlu0 %3664
      %3666 = vadd.xlane.f32.xlu0 %v3347
      %v3667 = vpop.xlane.xlu0 %3666
      %3668 = vadd.xlane.f32.xlu0 %v3349
      %v3669 = vpop.xlane.xlu0 %3668
      %3670 = vadd.xlane.f32.xlu0 %v3351
      %v3671 = vpop.xlane.xlu0 %3670
      %3672 = vadd.xlane.f32.xlu0 %v3353
      %v3673 = vpop.xlane.xlu0 %3672
      %3674 = vadd.xlane.f32.xlu0 %v3355
      %v3675 = vpop.xlane.xlu0 %3674
      %3676 = vadd.xlane.f32.xlu0 %v3357
      %v3677 = vpop.xlane.xlu0 %3676
      %3678 = vadd.xlane.f32.xlu0 %v3359
      %v3679 = vpop.xlane.xlu0 %3678
      %3680 = vadd.xlane.f32.xlu0 %v3361
      %v3681 = vpop.xlane.xlu0 %3680
      %3682 = vadd.xlane.f32.xlu0 %v3363
      %v3683 = vpop.xlane.xlu0 %3682
      %3684 = vadd.xlane.f32.xlu0 %v3365
      %v3685 = vpop.xlane.xlu0 %3684
      %3686 = vadd.xlane.f32.xlu0 %v3367
      %v3687 = vpop.xlane.xlu0 %3686
      %3688 = vadd.xlane.f32.xlu0 %v3369
      %v3689 = vpop.xlane.xlu0 %3688
      %3690 = vadd.xlane.f32.xlu0 %v3371
      %v3691 = vpop.xlane.xlu0 %3690
      %3692 = vadd.xlane.f32.xlu0 %v3373
      %v3693 = vpop.xlane.xlu0 %3692
      %3694 = vadd.xlane.f32.xlu0 %v3375
      %v3695 = vpop.xlane.xlu0 %3694
      %3696 = vadd.xlane.f32.xlu0 %v3377
      %v3697 = vpop.xlane.xlu0 %3696
      %3698 = vadd.xlane.f32.xlu0 %v3379
      %v3699 = vpop.xlane.xlu0 %3698
      %3700 = vadd.xlane.f32.xlu0 %v3381
      %v3701 = vpop.xlane.xlu0 %3700
      %3702 = vadd.xlane.f32.xlu0 %v3383
      %v3703 = vpop.xlane.xlu0 %3702
      %3704 = vadd.xlane.f32.xlu0 %v3385
      %v3705 = vpop.xlane.xlu0 %3704
      %3706 = vadd.xlane.f32.xlu0 %v3387
      %v3707 = vpop.xlane.xlu0 %3706
      %3708 = vadd.xlane.f32.xlu0 %v3389
      %v3709 = vpop.xlane.xlu0 %3708
      %3710 = vadd.xlane.f32.xlu0 %v3391
      %v3711 = vpop.xlane.xlu0 %3710
      %3712 = vadd.xlane.f32.xlu0 %v3393
      %v3713 = vpop.xlane.xlu0 %3712
      %3714 = vadd.xlane.f32.xlu0 %v3395
      %v3715 = vpop.xlane.xlu0 %3714
      %3716 = vadd.xlane.f32.xlu0 %v3397
      %v3717 = vpop.xlane.xlu0 %3716
      %3718 = vadd.xlane.f32.xlu0 %v3399
      %v3719 = vpop.xlane.xlu0 %3718
      %3720 = vadd.xlane.f32.xlu0 %v3401
      %v3721 = vpop.xlane.xlu0 %3720
      %3722 = vadd.xlane.f32.xlu0 %v3403
      %v3723 = vpop.xlane.xlu0 %3722
      %3724 = vadd.xlane.f32.xlu0 %v3405
      %v3725 = vpop.xlane.xlu0 %3724
      %3726 = vadd.xlane.f32.xlu0 %v3407
      %v3727 = vpop.xlane.xlu0 %3726
      %3728 = vadd.xlane.f32.xlu0 %v3409
      %v3729 = vpop.xlane.xlu0 %3728
      %3730 = vadd.xlane.f32.xlu0 %v3411
      %v3731 = vpop.xlane.xlu0 %3730
      %3732 = vadd.xlane.f32.xlu0 %v3413
      %v3733 = vpop.xlane.xlu0 %3732
      %3734 = vadd.xlane.f32.xlu0 %v3415
      %v3735 = vpop.xlane.xlu0 %3734
      %3736 = vadd.xlane.f32.xlu0 %v3417
      %v3737 = vpop.xlane.xlu0 %3736
      %3738 = vadd.xlane.f32.xlu0 %v3419
      %v3739 = vpop.xlane.xlu0 %3738
      %3740 = vadd.xlane.f32.xlu0 %v3421
      %v3741 = vpop.xlane.xlu0 %3740
      %3742 = vadd.xlane.f32.xlu0 %v3423
      %v3743 = vpop.xlane.xlu0 %3742
      %3744 = vadd.xlane.f32.xlu0 %v3425
      %v3745 = vpop.xlane.xlu0 %3744
      %3746 = vadd.xlane.f32.xlu0 %v3427
      %v3747 = vpop.xlane.xlu0 %3746
      %3748 = vadd.xlane.f32.xlu0 %v3429
      %v3749 = vpop.xlane.xlu0 %3748
      %3750 = vadd.xlane.f32.xlu0 %v3431
      %v3751 = vpop.xlane.xlu0 %3750
      %3752 = vadd.xlane.f32.xlu0 %v3433
      %v3753 = vpop.xlane.xlu0 %3752
      %3754 = vadd.xlane.f32.xlu0 %v3435
      %v3755 = vpop.xlane.xlu0 %3754
      %3756 = vadd.xlane.f32.xlu0 %v3437
      %v3757 = vpop.xlane.xlu0 %3756
      %3758 = vadd.xlane.f32.xlu0 %v3439
      %v3759 = vpop.xlane.xlu0 %3758
      %3760 = vadd.xlane.f32.xlu0 %v3441
      %v3761 = vpop.xlane.xlu0 %3760
      %3762 = vadd.xlane.f32.xlu0 %v3443
      %v3763 = vpop.xlane.xlu0 %3762
      %3764 = vadd.xlane.f32.xlu0 %v3445
      %v3765 = vpop.xlane.xlu0 %3764
      %3766 = vadd.xlane.f32.xlu0 %v3447
      %v3767 = vpop.xlane.xlu0 %3766
      %3768 = vadd.xlane.f32.xlu0 %v3449
      %v3769 = vpop.xlane.xlu0 %3768
      %3770 = vadd.xlane.f32.xlu0 %v3451
      %v3771 = vpop.xlane.xlu0 %3770
      %3772 = vadd.xlane.f32.xlu0 %v3453
      %v3773 = vpop.xlane.xlu0 %3772
      %3774 = vadd.xlane.f32.xlu0 %v3455
      %v3775 = vpop.xlane.xlu0 %3774
      %3776 = vadd.xlane.f32.xlu0 %v3457
      %v3777 = vpop.xlane.xlu0 %3776
      %3778 = vadd.xlane.f32.xlu0 %v3459
      %v3779 = vpop.xlane.xlu0 %3778
      %3780 = vadd.xlane.f32.xlu0 %v3461
      %v3781 = vpop.xlane.xlu0 %3780
      %3782 = vadd.xlane.f32.xlu0 %v3463
      %v3783 = vpop.xlane.xlu0 %3782
      %3784 = vadd.xlane.f32.xlu0 %v3465
      %v3785 = vpop.xlane.xlu0 %3784
      %3786 = vadd.xlane.f32.xlu0 %v3467
      %v3787 = vpop.xlane.xlu0 %3786
      %3788 = vadd.xlane.f32.xlu0 %v3469
      %v3789 = vpop.xlane.xlu0 %3788
      %3790 = vadd.xlane.f32.xlu0 %v3471
      %v3791 = vpop.xlane.xlu0 %3790
      %v3792 = vrcp.pop %v3665
      %v3793 = vrcp.pop %v3667
      %v3794 = vrcp.pop %v3669
      %v3795 = vrcp.pop %v3671
      %v3796 = vrcp.pop %v3673
      %v3797 = vrcp.pop %v3675
      %v3798 = vrcp.pop %v3677
      %v3799 = vrcp.pop %v3679
      %v3800 = vrcp.pop %v3681
      %v3801 = vrcp.pop %v3683
      %v3802 = vrcp.pop %v3685
      %v3803 = vrcp.pop %v3687
      %v3804 = vrcp.pop %v3689
      %v3805 = vrcp.pop %v3691
      %v3806 = vrcp.pop %v3693
      %v3807 = vrcp.pop %v3695
      %v3808 = vrcp.pop %v3697
      %v3809 = vrcp.pop %v3699
      %v3810 = vrcp.pop %v3701
      %v3811 = vrcp.pop %v3703
      %v3812 = vrcp.pop %v3705
      %v3813 = vrcp.pop %v3707
      %v3814 = vrcp.pop %v3709
      %v3815 = vrcp.pop %v3711
      %v3816 = vrcp.pop %v3713
      %v3817 = vrcp.pop %v3715
      %v3818 = vrcp.pop %v3717
      %v3819 = vrcp.pop %v3719
      %v3820 = vrcp.pop %v3721
      %v3821 = vrcp.pop %v3723
      %v3822 = vrcp.pop %v3725
      %v3823 = vrcp.pop %v3727
      %v3824 = vrcp.pop %v3729
      %v3825 = vrcp.pop %v3731
      %v3826 = vrcp.pop %v3733
      %v3827 = vrcp.pop %v3735
      %v3828 = vrcp.pop %v3737
      %v3829 = vrcp.pop %v3739
      %v3830 = vrcp.pop %v3741
      %v3831 = vrcp.pop %v3743
      %v3832 = vrcp.pop %v3745
      %v3833 = vrcp.pop %v3747
      %v3834 = vrcp.pop %v3749
      %v3835 = vrcp.pop %v3751
      %v3836 = vrcp.pop %v3753
      %v3837 = vrcp.pop %v3755
      %v3838 = vrcp.pop %v3757
      %v3839 = vrcp.pop %v3759
      %v3840 = vrcp.pop %v3761
      %v3841 = vrcp.pop %v3763
      %v3842 = vrcp.pop %v3765
      %v3843 = vrcp.pop %v3767
      %v3844 = vrcp.pop %v3769
      %v3845 = vrcp.pop %v3771
      %v3846 = vrcp.pop %v3773
      %v3847 = vrcp.pop %v3775
      %v3848 = vrcp.pop %v3777
      %v3849 = vrcp.pop %v3779
      %v3850 = vrcp.pop %v3781
      %v3851 = vrcp.pop %v3783
      %v3852 = vrcp.pop %v3785
      %v3853 = vrcp.pop %v3787
      %v3854 = vrcp.pop %v3789
      %v3855 = vrcp.pop %v3791
      %v3856 = vmul.f32 %v3537, %v3792
      %v3857 = vmul.f32 %v3539, %v3793
      %v3858 = vmul.f32 %v3541, %v3794
      %v3859 = vmul.f32 %v3543, %v3795
      %v3860 = vmul.f32 %v3545, %v3796
      %v3861 = vmul.f32 %v3547, %v3797
      %v3862 = vmul.f32 %v3549, %v3798
      %v3863 = vmul.f32 %v3551, %v3799
      %v3864 = vmul.f32 %v3553, %v3800
      %v3865 = vmul.f32 %v3555, %v3801
      %v3866 = vmul.f32 %v3557, %v3802
      %v3867 = vmul.f32 %v3559, %v3803
      %v3868 = vmul.f32 %v3561, %v3804
      %v3869 = vmul.f32 %v3563, %v3805
      %v3870 = vmul.f32 %v3565, %v3806
      %v3871 = vmul.f32 %v3567, %v3807
      %v3872 = vmul.f32 %v3569, %v3808
      %v3873 = vmul.f32 %v3571, %v3809
      %v3874 = vmul.f32 %v3573, %v3810
      %v3875 = vmul.f32 %v3575, %v3811
      %v3876 = vmul.f32 %v3577, %v3812
      %v3877 = vmul.f32 %v3579, %v3813
      %v3878 = vmul.f32 %v3581, %v3814
      %v3879 = vmul.f32 %v3583, %v3815
      %v3880 = vmul.f32 %v3585, %v3816
      %v3881 = vmul.f32 %v3587, %v3817
      %v3882 = vmul.f32 %v3589, %v3818
      %v3883 = vmul.f32 %v3591, %v3819
      %v3884 = vmul.f32 %v3593, %v3820
      %v3885 = vmul.f32 %v3595, %v3821
      %v3886 = vmul.f32 %v3597, %v3822
      %v3887 = vmul.f32 %v3599, %v3823
      %v3888 = vmul.f32 %v3601, %v3824
      %v3889 = vmul.f32 %v3603, %v3825
      %v3890 = vmul.f32 %v3605, %v3826
      %v3891 = vmul.f32 %v3607, %v3827
      %v3892 = vmul.f32 %v3609, %v3828
      %v3893 = vmul.f32 %v3611, %v3829
      %v3894 = vmul.f32 %v3613, %v3830
      %v3895 = vmul.f32 %v3615, %v3831
      %v3896 = vmul.f32 %v3617, %v3832
      %v3897 = vmul.f32 %v3619, %v3833
      %v3898 = vmul.f32 %v3621, %v3834
      %v3899 = vmul.f32 %v3623, %v3835
      %v3900 = vmul.f32 %v3625, %v3836
      %v3901 = vmul.f32 %v3627, %v3837
      %v3902 = vmul.f32 %v3629, %v3838
      %v3903 = vmul.f32 %v3631, %v3839
      %v3904 = vmul.f32 %v3633, %v3840
      %v3905 = vmul.f32 %v3635, %v3841
      %v3906 = vmul.f32 %v3637, %v3842
      %v3907 = vmul.f32 %v3639, %v3843
      %v3908 = vmul.f32 %v3641, %v3844
      %v3909 = vmul.f32 %v3643, %v3845
      %v3910 = vmul.f32 %v3645, %v3846
      %v3911 = vmul.f32 %v3647, %v3847
      %v3912 = vmul.f32 %v3649, %v3848
      %v3913 = vmul.f32 %v3651, %v3849
      %v3914 = vmul.f32 %v3653, %v3850
      %v3915 = vmul.f32 %v3655, %v3851
      %v3916 = vmul.f32 %v3657, %v3852
      %v3917 = vmul.f32 %v3659, %v3853
      %v3918 = vmul.f32 %v3661, %v3854
      %v3919 = vmul.f32 %v3663, %v3855
      %v3920 = vld [vmem:[%s10] sm:$0x1]
      %v3922 = vlaneseq
      %v3923 = vshrl.u32 %v3922, 7
      %v3924 = vsub.s32 0, %v3923
      %v3925 = vrot.slane %v3920, %v3924
      %v3927 = vmul.f32 %v3856, %v3925
      %v3928 = vmul.f32 %v3857, %v3925
      %v3929 = vmul.f32 %v3858, %v3925
      %v3930 = vmul.f32 %v3859, %v3925
      %v3931 = vmul.f32 %v3860, %v3925
      %v3932 = vmul.f32 %v3861, %v3925
      %v3933 = vmul.f32 %v3862, %v3925
      %v3934 = vmul.f32 %v3863, %v3925
      %v3935 = vmul.f32 %v3864, %v3925
      %v3936 = vmul.f32 %v3865, %v3925
      %v3937 = vmul.f32 %v3866, %v3925
      %v3938 = vmul.f32 %v3867, %v3925
      %v3939 = vmul.f32 %v3868, %v3925
      %v3940 = vmul.f32 %v3869, %v3925
      %v3941 = vmul.f32 %v3870, %v3925
      %v3942 = vmul.f32 %v3871, %v3925
      %v3943 = vmul.f32 %v3872, %v3925
      %v3944 = vmul.f32 %v3873, %v3925
      %v3945 = vmul.f32 %v3874, %v3925
      %v3946 = vmul.f32 %v3875, %v3925
      %v3947 = vmul.f32 %v3876, %v3925
      %v3948 = vmul.f32 %v3877, %v3925
      %v3949 = vmul.f32 %v3878, %v3925
      %v3950 = vmul.f32 %v3879, %v3925
      %v3951 = vmul.f32 %v3880, %v3925
      %v3952 = vmul.f32 %v3881, %v3925
      %v3953 = vmul.f32 %v3882, %v3925
      %v3954 = vmul.f32 %v3883, %v3925
      %v3955 = vmul.f32 %v3884, %v3925
      %v3956 = vmul.f32 %v3885, %v3925
      %v3957 = vmul.f32 %v3886, %v3925
      %v3958 = vmul.f32 %v3887, %v3925
      %v3959 = vmul.f32 %v3888, %v3925
      %v3960 = vmul.f32 %v3889, %v3925
      %v3961 = vmul.f32 %v3890, %v3925
      %v3962 = vmul.f32 %v3891, %v3925
      %v3963 = vmul.f32 %v3892, %v3925
      %v3964 = vmul.f32 %v3893, %v3925
      %v3965 = vmul.f32 %v3894, %v3925
      %v3966 = vmul.f32 %v3895, %v3925
      %v3967 = vmul.f32 %v3896, %v3925
      %v3968 = vmul.f32 %v3897, %v3925
      %v3969 = vmul.f32 %v3898, %v3925
      %v3970 = vmul.f32 %v3899, %v3925
      %v3971 = vmul.f32 %v3900, %v3925
      %v3972 = vmul.f32 %v3901, %v3925
      %v3973 = vmul.f32 %v3902, %v3925
      %v3974 = vmul.f32 %v3903, %v3925
      %v3975 = vmul.f32 %v3904, %v3925
      %v3976 = vmul.f32 %v3905, %v3925
      %v3977 = vmul.f32 %v3906, %v3925
      %v3978 = vmul.f32 %v3907, %v3925
      %v3979 = vmul.f32 %v3908, %v3925
      %v3980 = vmul.f32 %v3909, %v3925
      %v3981 = vmul.f32 %v3910, %v3925
      %v3982 = vmul.f32 %v3911, %v3925
      %v3983 = vmul.f32 %v3912, %v3925
      %v3984 = vmul.f32 %v3913, %v3925
      %v3985 = vmul.f32 %v3914, %v3925
      %v3986 = vmul.f32 %v3915, %v3925
      %v3987 = vmul.f32 %v3916, %v3925
      %v3988 = vmul.f32 %v3917, %v3925
      %v3989 = vmul.f32 %v3918, %v3925
      %v3990 = vmul.f32 %v3919, %v3925
      %v3991 = vld [vmem:[%s11] sm:$0x1]
      %v3993 = vlaneseq
      %v3994 = vshrl.u32 %v3993, 7
      %v3995 = vsub.s32 0, %v3994
      %v3996 = vrot.slane %v3991, %v3995
      %v3998 = vadd.f32 %v3927, %v3996
      %v3999 = vadd.f32 %v3928, %v3996
      %v4000 = vadd.f32 %v3929, %v3996
      %v4001 = vadd.f32 %v3930, %v3996
      %v4002 = vadd.f32 %v3931, %v3996
      %v4003 = vadd.f32 %v3932, %v3996
      %v4004 = vadd.f32 %v3933, %v3996
      %v4005 = vadd.f32 %v3934, %v3996
      %v4006 = vadd.f32 %v3935, %v3996
      %v4007 = vadd.f32 %v3936, %v3996
      %v4008 = vadd.f32 %v3937, %v3996
      %v4009 = vadd.f32 %v3938, %v3996
      %v4010 = vadd.f32 %v3939, %v3996
      %v4011 = vadd.f32 %v3940, %v3996
      %v4012 = vadd.f32 %v3941, %v3996
      %v4013 = vadd.f32 %v3942, %v3996
      %v4014 = vadd.f32 %v3943, %v3996
      %v4015 = vadd.f32 %v3944, %v3996
      %v4016 = vadd.f32 %v3945, %v3996
      %v4017 = vadd.f32 %v3946, %v3996
      %v4018 = vadd.f32 %v3947, %v3996
      %v4019 = vadd.f32 %v3948, %v3996
      %v4020 = vadd.f32 %v3949, %v3996
      %v4021 = vadd.f32 %v3950, %v3996
      %v4022 = vadd.f32 %v3951, %v3996
      %v4023 = vadd.f32 %v3952, %v3996
      %v4024 = vadd.f32 %v3953, %v3996
      %v4025 = vadd.f32 %v3954, %v3996
      %v4026 = vadd.f32 %v3955, %v3996
      %v4027 = vadd.f32 %v3956, %v3996
      %v4028 = vadd.f32 %v3957, %v3996
      %v4029 = vadd.f32 %v3958, %v3996
      %v4030 = vadd.f32 %v3959, %v3996
      %v4031 = vadd.f32 %v3960, %v3996
      %v4032 = vadd.f32 %v3961, %v3996
      %v4033 = vadd.f32 %v3962, %v3996
      %v4034 = vadd.f32 %v3963, %v3996
      %v4035 = vadd.f32 %v3964, %v3996
      %v4036 = vadd.f32 %v3965, %v3996
      %v4037 = vadd.f32 %v3966, %v3996
      %v4038 = vadd.f32 %v3967, %v3996
      %v4039 = vadd.f32 %v3968, %v3996
      %v4040 = vadd.f32 %v3969, %v3996
      %v4041 = vadd.f32 %v3970, %v3996
      %v4042 = vadd.f32 %v3971, %v3996
      %v4043 = vadd.f32 %v3972, %v3996
      %v4044 = vadd.f32 %v3973, %v3996
      %v4045 = vadd.f32 %v3974, %v3996
      %v4046 = vadd.f32 %v3975, %v3996
      %v4047 = vadd.f32 %v3976, %v3996
      %v4048 = vadd.f32 %v3977, %v3996
      %v4049 = vadd.f32 %v3978, %v3996
      %v4050 = vadd.f32 %v3979, %v3996
      %v4051 = vadd.f32 %v3980, %v3996
      %v4052 = vadd.f32 %v3981, %v3996
      %v4053 = vadd.f32 %v3982, %v3996
      %v4054 = vadd.f32 %v3983, %v3996
      %v4055 = vadd.f32 %v3984, %v3996
      %v4056 = vadd.f32 %v3985, %v3996
      %v4057 = vadd.f32 %v3986, %v3996
      %v4058 = vadd.f32 %v3987, %v3996
      %v4059 = vadd.f32 %v3988, %v3996
      %v4060 = vadd.f32 %v3989, %v3996
      %v4061 = vadd.f32 %v3990, %v3996
      %4062 = vst [vmem:[%s415] sm:$0xff] %v3998
      %4063 = vst [vmem:[%s415 + $0x8] sm:$0xff] %v3999
      %4064 = vst [vmem:[%s415 + $0x10] sm:$0xff] %v4000
      %4065 = vst [vmem:[%s415 + $0x18] sm:$0xff] %v4001
      %4066 = vst [vmem:[%s415 + $0x20] sm:$0xff] %v4002
      %4067 = vst [vmem:[%s415 + $0x28] sm:$0xff] %v4003
      %4068 = vst [vmem:[%s415 + $0x30] sm:$0xff] %v4004
      %4069 = vst [vmem:[%s415 + $0x38] sm:$0xff] %v4005
      %4070 = vst [vmem:[%s415 + $0x40] sm:$0xff] %v4006
      %4071 = vst [vmem:[%s415 + $0x48] sm:$0xff] %v4007
      %4072 = vst [vmem:[%s415 + $0x50] sm:$0xff] %v4008
      %4073 = vst [vmem:[%s415 + $0x58] sm:$0xff] %v4009
      %4074 = vst [vmem:[%s415 + $0x60] sm:$0xff] %v4010
      %4075 = vst [vmem:[%s415 + $0x68] sm:$0xff] %v4011
      %4076 = vst [vmem:[%s415 + $0x70] sm:$0xff] %v4012
      %4077 = vst [vmem:[%s415 + $0x78] sm:$0xff] %v4013
      %4078 = vst [vmem:[%s415 + $0x80] sm:$0xff] %v4014
      %4079 = vst [vmem:[%s415 + $0x88] sm:$0xff] %v4015
      %4080 = vst [vmem:[%s415 + $0x90] sm:$0xff] %v4016
      %4081 = vst [vmem:[%s415 + $0x98] sm:$0xff] %v4017
      %4082 = vst [vmem:[%s415 + $0xa0] sm:$0xff] %v4018
      %4083 = vst [vmem:[%s415 + $0xa8] sm:$0xff] %v4019
      %4084 = vst [vmem:[%s415 + $0xb0] sm:$0xff] %v4020
      %4085 = vst [vmem:[%s415 + $0xb8] sm:$0xff] %v4021
      %4086 = vst [vmem:[%s415 + $0xc0] sm:$0xff] %v4022
      %4087 = vst [vmem:[%s415 + $0xc8] sm:$0xff] %v4023
      %4088 = vst [vmem:[%s415 + $0xd0] sm:$0xff] %v4024
      %4089 = vst [vmem:[%s415 + $0xd8] sm:$0xff] %v4025
      %4090 = vst [vmem:[%s415 + $0xe0] sm:$0xff] %v4026
      %4091 = vst [vmem:[%s415 + $0xe8] sm:$0xff] %v4027
      %4092 = vst [vmem:[%s415 + $0xf0] sm:$0xff] %v4028
      %4093 = vst [vmem:[%s415 + $0xf8] sm:$0xff] %v4029
      %4094 = vst [vmem:[%s415 + $0x100] sm:$0xff] %v4030
      %4095 = vst [vmem:[%s415 + $0x108] sm:$0xff] %v4031
      %4096 = vst [vmem:[%s415 + $0x110] sm:$0xff] %v4032
      %4097 = vst [vmem:[%s415 + $0x118] sm:$0xff] %v4033
      %4098 = vst [vmem:[%s415 + $0x120] sm:$0xff] %v4034
      %4099 = vst [vmem:[%s415 + $0x128] sm:$0xff] %v4035
      %4100 = vst [vmem:[%s415 + $0x130] sm:$0xff] %v4036
      %4101 = vst [vmem:[%s415 + $0x138] sm:$0xff] %v4037
      %4102 = vst [vmem:[%s415 + $0x140] sm:$0xff] %v4038
      %4103 = vst [vmem:[%s415 + $0x148] sm:$0xff] %v4039
      %4104 = vst [vmem:[%s415 + $0x150] sm:$0xff] %v4040
      %4105 = vst [vmem:[%s415 + $0x158] sm:$0xff] %v4041
      %4106 = vst [vmem:[%s415 + $0x160] sm:$0xff] %v4042
      %4107 = vst [vmem:[%s415 + $0x168] sm:$0xff] %v4043
      %4108 = vst [vmem:[%s415 + $0x170] sm:$0xff] %v4044
      %4109 = vst [vmem:[%s415 + $0x178] sm:$0xff] %v4045
      %4110 = vst [vmem:[%s415 + $0x180] sm:$0xff] %v4046
      %4111 = vst [vmem:[%s415 + $0x188] sm:$0xff] %v4047
      %4112 = vst [vmem:[%s415 + $0x190] sm:$0xff] %v4048
      %4113 = vst [vmem:[%s415 + $0x198] sm:$0xff] %v4049
      %4114 = vst [vmem:[%s415 + $0x1a0] sm:$0xff] %v4050
      %4115 = vst [vmem:[%s415 + $0x1a8] sm:$0xff] %v4051
      %4116 = vst [vmem:[%s415 + $0x1b0] sm:$0xff] %v4052
      %4117 = vst [vmem:[%s415 + $0x1b8] sm:$0xff] %v4053
      %4118 = vst [vmem:[%s415 + $0x1c0] sm:$0xff] %v4054
      %4119 = vst [vmem:[%s415 + $0x1c8] sm:$0xff] %v4055
      %4120 = vst [vmem:[%s415 + $0x1d0] sm:$0xff] %v4056
      %4121 = vst [vmem:[%s415 + $0x1d8] sm:$0xff] %v4057
      %4122 = vst [vmem:[%s415 + $0x1e0] sm:$0xff] %v4058
      %4123 = vst [vmem:[%s415 + $0x1e8] sm:$0xff] %v4059
      %4124 = vst [vmem:[%s415 + $0x1f0] sm:$0xff] %v4060
      %4125 = vst [vmem:[%s415 + $0x1f8] sm:$0xff] %v4061
      %s4126 = smul.u32 64, %s23
      %p4127 = scmp.lt.s32.totalorder %s4126, 127
      %s4128 = scalar_select %p4127, %s4126, 127
      %s4129 = smul.addr %s4128, 8
      %s4130 = scalar_lea.vmem %s12, %s4129
      // Predicated region
      $region69: #{attsets_forward.1} parent=67 // pred_check
        %p4131 = pneg %p298
      $region70: #{attsets_forward.1} parent=67 // pred_check_branch
        %4133 = sbr.rel (%p4131) target = $region72
      $region71: #{attsets_forward.1} parent=67 // pred_region
        %s4134 = smul.u32 64, %s23
      $region72: #{attsets_forward.1} parent=67 // pred_fallthru
        _
    $region68: #{attsets_forward.1} parent=5 // pred_fallthru
      _
    %p4135 = scmp.le.s32.totalorder 2, %s18
    // Predicated region
    $region73: #{attsets_forward.1} parent=5 // pred_check
      %p4136 = pneg %p4135
    $region74: #{attsets_forward.1} parent=5 // pred_check_branch
      %4138 = sbr.rel (%p4136) target = $region76
    $region75: #{attsets_forward.1} parent=5 // pred_region
      %s4139 = ssub.s32 %s18, 2
      // Predicated region
      $region77: #{attsets_forward.1} parent=75 // pred_check
        %p4140 = pneg %p304
      $region78: #{attsets_forward.1} parent=75 // pred_check_branch
        %4142 = sbr.rel (%p4140) target = $region80
      $region79: #{attsets_forward.1} parent=75 // pred_region
        %s4143 = smul.u32 64, %s24
        %p4144 = scmp.lt.s32.totalorder %s4143, 127
        %s4145 = scalar_select %p4144, %s4143, 127
        %s4146 = smul.addr %s4145, 8
        %s4147 = scalar_lea.vmem %s12, %s4146
      $region80: #{attsets_forward.1} parent=75 // pred_fallthru
        _
    $region76: #{attsets_forward.1} parent=5 // pred_fallthru
      _
  $region6: #{attsets_forward.1} parent=0 // loop_footer
    %s22 = sadd.s32 1, %s18
  $region7: #{attsets_forward.1} parent=0 // loop_footer_branch
    %17 = sbr.rel target = $region3
  $region8: #{attsets_forward.1} parent=0 // loop_exit
    _

</llo_original>
